<compile_context>
chip_gen: v7x
topology: tpu7x:2x2x1
jax: 0.10.0
libtpu: 0.0.40
codegen_flags: <defaults>
</compile_context>

<pallas_src>
import jax
import jax.numpy as jnp
from jax import lax
from jax.experimental import pallas as pl
from jax.experimental.pallas import tpu as pltpu

_EPS = 1e-5                      # PyTorch BatchNorm2d default eps
_MXU_DTYPE = jnp.bfloat16        # MXU operand dtype (accumulation stays f32)
_TOL = 2e-2 if _MXU_DTYPE == jnp.bfloat16 else 1e-3


# ---------------------------------------------------------------------------
# Fused per-layer Pallas kernel: BN(scale/shift) -> ReLU -> 3x3 conv -> +bias,
# result added into the (zero) target channel slice of the concat buffer.
# ---------------------------------------------------------------------------
def _dense_layer_kernel(x_ref, scale_ref, shift_ref, w_ref, b_ref, o_ref, pad_ref):
    # x_ref / o_ref : (H, W, Cb)  f32   (batch dim squeezed by BlockSpec)
    # scale/shift/b : (1, Cb)     f32   (zero outside the valid channel range)
    # w_ref         : (9, Cb, Cb) MXU dtype, tap t = ky*3 + kx; output columns
    #                 already placed at this layer's channel offset.
    # pad_ref       : (H+2, W+2, Cb) f32 VMEM scratch (zero spatial halo)
    H, W, Cb = x_ref.shape
    x = x_ref[...]

    # Fused BatchNorm (pre-folded batch statistics) + ReLU, f32 on the VPU.
    a = jnp.maximum(x * scale_ref[...] + shift_ref[...], 0.0)

    # Build the zero-padded activation in VMEM (halo of 1 on each spatial side).
    pad_ref[...] = jnp.zeros_like(pad_ref)
    pad_ref[1:H + 1, 1:W + 1, :] = a

    # 3x3 conv as 9 accumulated MXU dots (bf16 operands, f32 accumulation).
    acc = jnp.zeros((H * W, Cb), jnp.float32)
    for ky in range(3):
        for kx in range(3):
            tap = pad_ref[ky:ky + H, kx:kx + W, :].reshape(H * W, Cb)
            acc = acc + jnp.dot(tap.astype(w_ref.dtype), w_ref[ky * 3 + kx],
                                preferred_element_type=jnp.float32)

    # Dense connectivity: old channels pass through unchanged; the new Y lands
    # in its (previously zero) channel slice via the weight/bias placement.
    o_ref[...] = x + acc.reshape(H, W, Cb) + b_ref[...]


def _dense_layer(buf, scale, shift, w9, bias):
    N, H, W, Cb = buf.shape
    return pl.pallas_call(
        _dense_layer_kernel,
        out_shape=jax.ShapeDtypeStruct(buf.shape, buf.dtype),
        grid=(N,),
        in_specs=[
            pl.BlockSpec((None, H, W, Cb), lambda n: (n, 0, 0, 0)),
            pl.BlockSpec((1, Cb), lambda n: (0, 0)),
            pl.BlockSpec((1, Cb), lambda n: (0, 0)),
            pl.BlockSpec((9, Cb, Cb), lambda n: (0, 0, 0)),
            pl.BlockSpec((1, Cb), lambda n: (0, 0)),
        ],
        out_specs=pl.BlockSpec((None, H, W, Cb), lambda n: (n, 0, 0, 0)),
        scratch_shapes=[pltpu.VMEM((H + 2, W + 2, Cb), jnp.float32)],
        input_output_aliases={0: 0},   # update the concat buffer in place
        compiler_params=pltpu.CompilerParams(
            dimension_semantics=("parallel",),
            vmem_limit_bytes=32 * 1024 * 1024,
        ),
    )(buf, scale, shift, w9, bias)


# ---------------------------------------------------------------------------
# DenseBlock forward (NCHW at the boundary, padded NHWC concat buffer inside)
# ---------------------------------------------------------------------------
@jax.jit
def dense_block_forward(x_nchw, params):
    N, C0, H, W = x_nchw.shape
    c_total = C0 + sum(int(p[2].shape[0]) for p in params)
    cb = ((c_total + 127) // 128) * 128          # lane-dense channel width

    x_nhwc = jnp.transpose(x_nchw, (0, 2, 3, 1)).astype(jnp.float32)
    buf = jnp.pad(x_nhwc, ((0, 0), (0, 0), (0, 0), (0, cb - C0)))

    cur = C0
    for gamma, beta, w, b in params:
        in_c = cur
        cout = int(w.shape[0])

        # Per-channel batch statistics (tiny; plain XLA per the perf review),
        # folded into scale/shift so the kernel does a single mul-add.
        xb = buf[..., :in_c]
        mean = jnp.mean(xb, axis=(0, 1, 2))
        var = jnp.var(xb, axis=(0, 1, 2))        # biased var = BN training mode
        sc = gamma * lax.rsqrt(var + _EPS)
        sh = beta - mean * sc
        scale = jnp.zeros((1, cb), jnp.float32).at[0, :in_c].set(sc)
        shift = jnp.zeros((1, cb), jnp.float32).at[0, :in_c].set(sh)

        # PyTorch weight (Cout, Cin, 3, 3) -> 9 taps of (Cb, Cb); rows >= in_c
        # are zero, output columns placed at [in_c, in_c+cout) so the matmul
        # result lands directly in the concat buffer's target channel slice.
        wt = jnp.transpose(w, (2, 3, 1, 0)).reshape(9, in_c, cout)
        w9 = (jnp.zeros((9, cb, cb), jnp.float32)
              .at[:, :in_c, in_c:in_c + cout].set(wt)
              .astype(_MXU_DTYPE))
        bias = jnp.zeros((1, cb), jnp.float32).at[0, in_c:in_c + cout].set(b)

        buf = _dense_layer(buf, scale, shift, w9, bias)
        cur += cout

    return jnp.transpose(buf[..., :c_total], (0, 3, 1, 2))


# ---------------------------------------------------------------------------
# Deterministic parameter init (shapes follow DenseBlock.__init__)
# ---------------------------------------------------------------------------
def init_dense_block(key, num_convs, in_channels, growth):
    params = []
    for i in range(num_convs):
        in_c = in_channels + i * growth
        key, kw, kb = jax.random.split(key, 3)
        gamma = jnp.ones((in_c,), jnp.float32)    # BatchNorm2d default init
        beta = jnp.zeros((in_c,), jnp.float32)
        bound = (1.0 / (in_c * 9)) ** 0.5         # Conv2d-style uniform init
        w = jax.random.uniform(kw, (growth, in_c, 3, 3), jnp.float32, -bound, bound)
        b = jax.random.uniform(kb, (growth,), jnp.float32, -bound, bound)
        params.append((gamma, beta, w, b))
    return params


# Pure-JAX reference (same math, NCHW, full f32) for a correctness check.
def _reference(x_nchw, params):
    x = x_nchw
    for gamma, beta, w, b in params:
        mean = jnp.mean(x, axis=(0, 2, 3), keepdims=True)
        var = jnp.mean((x - mean) ** 2, axis=(0, 2, 3), keepdims=True)
        a = (x - mean) * lax.rsqrt(var + _EPS)
        a = a * gamma.reshape(1, -1, 1, 1) + beta.reshape(1, -1, 1, 1)
        a = jnp.maximum(a, 0.0)
        y = lax.conv_general_dilated(
            a, w, window_strides=(1, 1), padding=((1, 1), (1, 1)),
            dimension_numbers=("NCHW", "OIHW", "NCHW"))
        y = y + b.reshape(1, -1, 1, 1)
        x = jnp.concatenate([x, y], axis=1)
    return x


if __name__ == "__main__":
    key = jax.random.PRNGKey(0)
    kx, kp = jax.random.split(key)

    # Small shapes consistent with the module: batch=2, in_channels=4, 16x16,
    # DenseBlock(num_convs=2, in_channels=4, out_channels=8) -> 4 + 2*8 = 20 ch.
    N, C, H, W = 2, 4, 16, 16
    num_convs, growth = 2, 8

    x = jax.random.uniform(kx, (N, C, H, W), dtype=jnp.float32)
    params = init_dense_block(kp, num_convs, C, growth)

    out = jax.block_until_ready(dense_block_forward(x, params))
    assert out.shape == (N, C + num_convs * growth, H, W), out.shape

    ref = _reference(x, params)
    err = float(jnp.max(jnp.abs(out - ref)))
    # bf16 MXU operands (f32 accumulation) -> 2e-2 tolerance; set
    # _MXU_DTYPE = jnp.float32 above to recover <1e-3 agreement.
    assert jnp.allclose(out, ref, atol=_TOL, rtol=_TOL), f"max abs err {err}"

    print("KERNEL_OK")
</pallas_src>

<mosaic_0001>
module attributes {stable_mosaic.version = 11 : i64} {
  func.func @_dense_layer_kernel(%arg0: i32, %arg1: memref<1x16x16x128xf32, #tpu.memory_space<vmem>>, %arg2: memref<1x128xf32, #tpu.memory_space<vmem>>, %arg3: memref<1x128xf32, #tpu.memory_space<vmem>>, %arg4: memref<9x128x128xbf16, #tpu.memory_space<vmem>>, %arg5: memref<1x128xf32, #tpu.memory_space<vmem>>, %arg6: memref<1x16x16x128xf32, #tpu.memory_space<vmem>>, %arg7: memref<18x18x128xf32, #tpu.memory_space<vmem>>) attributes {dimension_semantics = [#tpu.dimension_semantics<parallel>], iteration_bounds = array<i64: 2>, scalar_prefetch = 0 : i64, scratch_operands = 1 : i64, tpu.core_type = #tpu.core_type<tc>, window_params = [{transform_indices = @transform_0, window_bounds = array<i64: 1, 16, 16, 128>}, {pipeline_mode = #tpu.pipeline_mode<synchronous>, transform_indices = @transform_1, window_bounds = array<i64: 1, 128>}, {pipeline_mode = #tpu.pipeline_mode<synchronous>, transform_indices = @transform_2, window_bounds = array<i64: 1, 128>}, {pipeline_mode = #tpu.pipeline_mode<synchronous>, transform_indices = @transform_3, window_bounds = array<i64: 9, 128, 128>}, {pipeline_mode = #tpu.pipeline_mode<synchronous>, transform_indices = @transform_4, window_bounds = array<i64: 1, 128>}, {transform_indices = @transform_5, window_bounds = array<i64: 1, 16, 16, 128>}]} {
    %c0 = arith.constant 0 : index
    %c0_0 = arith.constant 0 : index
    %c0_1 = arith.constant 0 : index
    %c0_2 = arith.constant 0 : index
    %0 = vector.load %arg1[%c0, %c0_0, %c0_1, %c0_2] : memref<1x16x16x128xf32, #tpu.memory_space<vmem>>, vector<1x16x16x128xf32>
    %1 = vector.shape_cast %0 : vector<1x16x16x128xf32> to vector<16x16x128xf32>
    %c0_3 = arith.constant 0 : index
    %c0_4 = arith.constant 0 : index
    %2 = vector.load %arg2[%c0_3, %c0_4] : memref<1x128xf32, #tpu.memory_space<vmem>>, vector<1x128xf32>
    %3 = vector.shape_cast %2 : vector<1x128xf32> to vector<1x1x128xf32>
    %4 = vector.broadcast %3 : vector<1x1x128xf32> to vector<16x16x128xf32>
    %5 = arith.mulf %1, %4 : vector<16x16x128xf32>
    %c0_5 = arith.constant 0 : index
    %c0_6 = arith.constant 0 : index
    %6 = vector.load %arg3[%c0_5, %c0_6] : memref<1x128xf32, #tpu.memory_space<vmem>>, vector<1x128xf32>
    %7 = vector.shape_cast %6 : vector<1x128xf32> to vector<1x1x128xf32>
    %8 = vector.broadcast %7 : vector<1x1x128xf32> to vector<16x16x128xf32>
    %9 = arith.addf %5, %8 : vector<16x16x128xf32>
    %cst = arith.constant 0.000000e+00 : f32
    %10 = vector.broadcast %cst : f32 to vector<16x16x128xf32>
    %11 = arith.maximumf %9, %10 : vector<16x16x128xf32>
    %cst_7 = arith.constant 0.000000e+00 : f32
    %12 = vector.broadcast %cst_7 : f32 to vector<18x18x128xf32>
    %c0_8 = arith.constant 0 : index
    %c0_9 = arith.constant 0 : index
    %c0_10 = arith.constant 0 : index
    %13 = vector.load %arg7[%c0_8, %c0_9, %c0_10] : memref<18x18x128xf32, #tpu.memory_space<vmem>>, vector<18x18x128xf32>
    tpu.vector_store %arg7[%c0_8, %c0_9, %c0_10], %12 {strides = array<i32>} : memref<18x18x128xf32, #tpu.memory_space<vmem>>, vector<18x18x128xf32>,
    %c1 = arith.constant 1 : index
    %c1_11 = arith.constant 1 : index
    %c0_12 = arith.constant 0 : index
    %14 = vector.load %arg7[%c1, %c1_11, %c0_12] : memref<18x18x128xf32, #tpu.memory_space<vmem>>, vector<16x16x128xf32>
    tpu.vector_store %arg7[%c1, %c1_11, %c0_12], %11 {strides = array<i32>} : memref<18x18x128xf32, #tpu.memory_space<vmem>>, vector<16x16x128xf32>,
    %cst_13 = arith.constant 0.000000e+00 : f32
    %15 = vector.broadcast %cst_13 : f32 to vector<256x128xf32>
    %c0_14 = arith.constant 0 : index
    %c0_15 = arith.constant 0 : index
    %c0_16 = arith.constant 0 : index
    %16 = vector.load %arg7[%c0_14, %c0_15, %c0_16] : memref<18x18x128xf32, #tpu.memory_space<vmem>>, vector<16x16x128xf32>
    %17 = vector.shape_cast %16 : vector<16x16x128xf32> to vector<256x128xf32>
    %18 = arith.truncf %17 : vector<256x128xf32> to vector<256x128xbf16>
    %c0_17 = arith.constant 0 : index
    %c0_18 = arith.constant 0 : index
    %c0_19 = arith.constant 0 : index
    %19 = vector.load %arg4[%c0_17, %c0_18, %c0_19] : memref<9x128x128xbf16, #tpu.memory_space<vmem>>, vector<1x128x128xbf16>
    %20 = vector.shape_cast %19 : vector<1x128x128xbf16> to vector<128x128xbf16>
    %cst_20 = arith.constant dense<0.000000e+00> : vector<256x128xf32>
    %21 = tpu.matmul %18, %20, %cst_20 {dimension_numbers = #tpu.dot_dimension_numbers<[1], [0], [0], [1], [0, 0, 1, 1], [], []>} : vector<256x128xbf16>, vector<128x128xbf16>, vector<256x128xf32> -> vector<256x128xf32>
    %22 = arith.addf %15, %21 : vector<256x128xf32>
    %c0_21 = arith.constant 0 : index
    %c1_22 = arith.constant 1 : index
    %c0_23 = arith.constant 0 : index
    %23 = vector.load %arg7[%c0_21, %c1_22, %c0_23] : memref<18x18x128xf32, #tpu.memory_space<vmem>>, vector<16x16x128xf32>
    %24 = vector.shape_cast %23 : vector<16x16x128xf32> to vector<256x128xf32>
    %25 = arith.truncf %24 : vector<256x128xf32> to vector<256x128xbf16>
    %c1_24 = arith.constant 1 : index
    %c0_25 = arith.constant 0 : index
    %c0_26 = arith.constant 0 : index
    %26 = vector.load %arg4[%c1_24, %c0_25, %c0_26] : memref<9x128x128xbf16, #tpu.memory_space<vmem>>, vector<1x128x128xbf16>
    %27 = vector.shape_cast %26 : vector<1x128x128xbf16> to vector<128x128xbf16>
    %cst_27 = arith.constant dense<0.000000e+00> : vector<256x128xf32>
    %28 = tpu.matmul %25, %27, %cst_27 {dimension_numbers = #tpu.dot_dimension_numbers<[1], [0], [0], [1], [0, 0, 1, 1], [], []>} : vector<256x128xbf16>, vector<128x128xbf16>, vector<256x128xf32> -> vector<256x128xf32>
    %29 = arith.addf %22, %28 : vector<256x128xf32>
    %c0_28 = arith.constant 0 : index
    %c2 = arith.constant 2 : index
    %c0_29 = arith.constant 0 : index
    %30 = vector.load %arg7[%c0_28, %c2, %c0_29] : memref<18x18x128xf32, #tpu.memory_space<vmem>>, vector<16x16x128xf32>
    %31 = vector.shape_cast %30 : vector<16x16x128xf32> to vector<256x128xf32>
    %32 = arith.truncf %31 : vector<256x128xf32> to vector<256x128xbf16>
    %c2_30 = arith.constant 2 : index
    %c0_31 = arith.constant 0 : index
    %c0_32 = arith.constant 0 : index
    %33 = vector.load %arg4[%c2_30, %c0_31, %c0_32] : memref<9x128x128xbf16, #tpu.memory_space<vmem>>, vector<1x128x128xbf16>
    %34 = vector.shape_cast %33 : vector<1x128x128xbf16> to vector<128x128xbf16>
    %cst_33 = arith.constant dense<0.000000e+00> : vector<256x128xf32>
    %35 = tpu.matmul %32, %34, %cst_33 {dimension_numbers = #tpu.dot_dimension_numbers<[1], [0], [0], [1], [0, 0, 1, 1], [], []>} : vector<256x128xbf16>, vector<128x128xbf16>, vector<256x128xf32> -> vector<256x128xf32>
    %36 = arith.addf %29, %35 : vector<256x128xf32>
    %c1_34 = arith.constant 1 : index
    %c0_35 = arith.constant 0 : index
    %c0_36 = arith.constant 0 : index
    %37 = vector.load %arg7[%c1_34, %c0_35, %c0_36] : memref<18x18x128xf32, #tpu.memory_space<vmem>>, vector<16x16x128xf32>
    %38 = vector.shape_cast %37 : vector<16x16x128xf32> to vector<256x128xf32>
    %39 = arith.truncf %38 : vector<256x128xf32> to vector<256x128xbf16>
    %c3 = arith.constant 3 : index
    %c0_37 = arith.constant 0 : index
    %c0_38 = arith.constant 0 : index
    %40 = vector.load %arg4[%c3, %c0_37, %c0_38] : memref<9x128x128xbf16, #tpu.memory_space<vmem>>, vector<1x128x128xbf16>
    %41 = vector.shape_cast %40 : vector<1x128x128xbf16> to vector<128x128xbf16>
    %cst_39 = arith.constant dense<0.000000e+00> : vector<256x128xf32>
    %42 = tpu.matmul %39, %41, %cst_39 {dimension_numbers = #tpu.dot_dimension_numbers<[1], [0], [0], [1], [0, 0, 1, 1], [], []>} : vector<256x128xbf16>, vector<128x128xbf16>, vector<256x128xf32> -> vector<256x128xf32>
    %43 = arith.addf %36, %42 : vector<256x128xf32>
    %c1_40 = arith.constant 1 : index
    %c1_41 = arith.constant 1 : index
    %c0_42 = arith.constant 0 : index
    %44 = vector.load %arg7[%c1_40, %c1_41, %c0_42] : memref<18x18x128xf32, #tpu.memory_space<vmem>>, vector<16x16x128xf32>
    %45 = vector.shape_cast %44 : vector<16x16x128xf32> to vector<256x128xf32>
    %46 = arith.truncf %45 : vector<256x128xf32> to vector<256x128xbf16>
    %c4 = arith.constant 4 : index
    %c0_43 = arith.constant 0 : index
    %c0_44 = arith.constant 0 : index
    %47 = vector.load %arg4[%c4, %c0_43, %c0_44] : memref<9x128x128xbf16, #tpu.memory_space<vmem>>, vector<1x128x128xbf16>
    %48 = vector.shape_cast %47 : vector<1x128x128xbf16> to vector<128x128xbf16>
    %cst_45 = arith.constant dense<0.000000e+00> : vector<256x128xf32>
    %49 = tpu.matmul %46, %48, %cst_45 {dimension_numbers = #tpu.dot_dimension_numbers<[1], [0], [0], [1], [0, 0, 1, 1], [], []>} : vector<256x128xbf16>, vector<128x128xbf16>, vector<256x128xf32> -> vector<256x128xf32>
    %50 = arith.addf %43, %49 : vector<256x128xf32>
    %c1_46 = arith.constant 1 : index
    %c2_47 = arith.constant 2 : index
    %c0_48 = arith.constant 0 : index
    %51 = vector.load %arg7[%c1_46, %c2_47, %c0_48] : memref<18x18x128xf32, #tpu.memory_space<vmem>>, vector<16x16x128xf32>
    %52 = vector.shape_cast %51 : vector<16x16x128xf32> to vector<256x128xf32>
    %53 = arith.truncf %52 : vector<256x128xf32> to vector<256x128xbf16>
    %c5 = arith.constant 5 : index
    %c0_49 = arith.constant 0 : index
    %c0_50 = arith.constant 0 : index
    %54 = vector.load %arg4[%c5, %c0_49, %c0_50] : memref<9x128x128xbf16, #tpu.memory_space<vmem>>, vector<1x128x128xbf16>
    %55 = vector.shape_cast %54 : vector<1x128x128xbf16> to vector<128x128xbf16>
    %cst_51 = arith.constant dense<0.000000e+00> : vector<256x128xf32>
    %56 = tpu.matmul %53, %55, %cst_51 {dimension_numbers = #tpu.dot_dimension_numbers<[1], [0], [0], [1], [0, 0, 1, 1], [], []>} : vector<256x128xbf16>, vector<128x128xbf16>, vector<256x128xf32> -> vector<256x128xf32>
    %57 = arith.addf %50, %56 : vector<256x128xf32>
    %c2_52 = arith.constant 2 : index
    %c0_53 = arith.constant 0 : index
    %c0_54 = arith.constant 0 : index
    %58 = vector.load %arg7[%c2_52, %c0_53, %c0_54] : memref<18x18x128xf32, #tpu.memory_space<vmem>>, vector<16x16x128xf32>
    %59 = vector.shape_cast %58 : vector<16x16x128xf32> to vector<256x128xf32>
    %60 = arith.truncf %59 : vector<256x128xf32> to vector<256x128xbf16>
    %c6 = arith.constant 6 : index
    %c0_55 = arith.constant 0 : index
    %c0_56 = arith.constant 0 : index
    %61 = vector.load %arg4[%c6, %c0_55, %c0_56] : memref<9x128x128xbf16, #tpu.memory_space<vmem>>, vector<1x128x128xbf16>
    %62 = vector.shape_cast %61 : vector<1x128x128xbf16> to vector<128x128xbf16>
    %cst_57 = arith.constant dense<0.000000e+00> : vector<256x128xf32>
    %63 = tpu.matmul %60, %62, %cst_57 {dimension_numbers = #tpu.dot_dimension_numbers<[1], [0], [0], [1], [0, 0, 1, 1], [], []>} : vector<256x128xbf16>, vector<128x128xbf16>, vector<256x128xf32> -> vector<256x128xf32>
    %64 = arith.addf %57, %63 : vector<256x128xf32>
    %c2_58 = arith.constant 2 : index
    %c1_59 = arith.constant 1 : index
    %c0_60 = arith.constant 0 : index
    %65 = vector.load %arg7[%c2_58, %c1_59, %c0_60] : memref<18x18x128xf32, #tpu.memory_space<vmem>>, vector<16x16x128xf32>
    %66 = vector.shape_cast %65 : vector<16x16x128xf32> to vector<256x128xf32>
    %67 = arith.truncf %66 : vector<256x128xf32> to vector<256x128xbf16>
    %c7 = arith.constant 7 : index
    %c0_61 = arith.constant 0 : index
    %c0_62 = arith.constant 0 : index
    %68 = vector.load %arg4[%c7, %c0_61, %c0_62] : memref<9x128x128xbf16, #tpu.memory_space<vmem>>, vector<1x128x128xbf16>
    %69 = vector.shape_cast %68 : vector<1x128x128xbf16> to vector<128x128xbf16>
    %cst_63 = arith.constant dense<0.000000e+00> : vector<256x128xf32>
    %70 = tpu.matmul %67, %69, %cst_63 {dimension_numbers = #tpu.dot_dimension_numbers<[1], [0], [0], [1], [0, 0, 1, 1], [], []>} : vector<256x128xbf16>, vector<128x128xbf16>, vector<256x128xf32> -> vector<256x128xf32>
    %71 = arith.addf %64, %70 : vector<256x128xf32>
    %c2_64 = arith.constant 2 : index
    %c2_65 = arith.constant 2 : index
    %c0_66 = arith.constant 0 : index
    %72 = vector.load %arg7[%c2_64, %c2_65, %c0_66] : memref<18x18x128xf32, #tpu.memory_space<vmem>>, vector<16x16x128xf32>
    %73 = vector.shape_cast %72 : vector<16x16x128xf32> to vector<256x128xf32>
    %74 = arith.truncf %73 : vector<256x128xf32> to vector<256x128xbf16>
    %c8 = arith.constant 8 : index
    %c0_67 = arith.constant 0 : index
    %c0_68 = arith.constant 0 : index
    %75 = vector.load %arg4[%c8, %c0_67, %c0_68] : memref<9x128x128xbf16, #tpu.memory_space<vmem>>, vector<1x128x128xbf16>
    %76 = vector.shape_cast %75 : vector<1x128x128xbf16> to vector<128x128xbf16>
    %cst_69 = arith.constant dense<0.000000e+00> : vector<256x128xf32>
    %77 = tpu.matmul %74, %76, %cst_69 {dimension_numbers = #tpu.dot_dimension_numbers<[1], [0], [0], [1], [0, 0, 1, 1], [], []>} : vector<256x128xbf16>, vector<128x128xbf16>, vector<256x128xf32> -> vector<256x128xf32>
    %78 = arith.addf %71, %77 : vector<256x128xf32>
    %79 = vector.shape_cast %78 : vector<256x128xf32> to vector<16x16x128xf32>
    %80 = arith.addf %1, %79 : vector<16x16x128xf32>
    %c0_70 = arith.constant 0 : index
    %c0_71 = arith.constant 0 : index
    %81 = vector.load %arg5[%c0_70, %c0_71] : memref<1x128xf32, #tpu.memory_space<vmem>>, vector<1x128xf32>
    %82 = vector.shape_cast %81 : vector<1x128xf32> to vector<1x1x128xf32>
    %83 = vector.broadcast %82 : vector<1x1x128xf32> to vector<16x16x128xf32>
    %84 = arith.addf %80, %83 : vector<16x16x128xf32>
    %c0_72 = arith.constant 0 : index
    %c0_73 = arith.constant 0 : index
    %c0_74 = arith.constant 0 : index
    %c0_75 = arith.constant 0 : index
    %85 = vector.load %arg6[%c0_72, %c0_73, %c0_74, %c0_75] : memref<1x16x16x128xf32, #tpu.memory_space<vmem>>, vector<1x16x16x128xf32>
    %86 = vector.shape_cast %85 : vector<1x16x16x128xf32> to vector<16x16x128xf32>
    %87 = vector.shape_cast %84 : vector<16x16x128xf32> to vector<1x16x16x128xf32>
    tpu.vector_store %arg6[%c0_72, %c0_73, %c0_74, %c0_75], %87 {strides = array<i32>} : memref<1x16x16x128xf32, #tpu.memory_space<vmem>>, vector<1x16x16x128xf32>,
    return
  }
  func.func @transform_0(%arg0: i32) -> (i32, i32, i32, i32) {
    %c0_i32 = arith.constant 0 : i32
    %c0_i32_0 = arith.constant 0 : i32
    %c0_i32_1 = arith.constant 0 : i32
    %c0_i32_2 = arith.constant 0 : i32
    return %arg0, %c0_i32, %c0_i32_0, %c0_i32_1 : i32, i32, i32, i32
  }
  func.func @transform_1(%arg0: i32) -> (i32, i32) {
    %c0_i32 = arith.constant 0 : i32
    %c0_i32_0 = arith.constant 0 : i32
    %c0_i32_1 = arith.constant 0 : i32
    return %c0_i32, %c0_i32_0 : i32, i32
  }
  func.func @transform_2(%arg0: i32) -> (i32, i32) {
    %c0_i32 = arith.constant 0 : i32
    %c0_i32_0 = arith.constant 0 : i32
    %c0_i32_1 = arith.constant 0 : i32
    return %c0_i32, %c0_i32_0 : i32, i32
  }
  func.func @transform_3(%arg0: i32) -> (i32, i32, i32) {
    %c0_i32 = arith.constant 0 : i32
    %c0_i32_0 = arith.constant 0 : i32
    %c0_i32_1 = arith.constant 0 : i32
    %c0_i32_2 = arith.constant 0 : i32
    return %c0_i32, %c0_i32_0, %c0_i32_1 : i32, i32, i32
  }
  func.func @transform_4(%arg0: i32) -> (i32, i32) {
    %c0_i32 = arith.constant 0 : i32
    %c0_i32_0 = arith.constant 0 : i32
    %c0_i32_1 = arith.constant 0 : i32
    return %c0_i32, %c0_i32_0 : i32, i32
  }
  func.func @transform_5(%arg0: i32) -> (i32, i32, i32, i32) {
    %c0_i32 = arith.constant 0 : i32
    %c0_i32_0 = arith.constant 0 : i32
    %c0_i32_1 = arith.constant 0 : i32
    %c0_i32_2 = arith.constant 0 : i32
    return %arg0, %c0_i32, %c0_i32_0, %c0_i32_1 : i32, i32, i32, i32
  }
}

</mosaic_0001>

<llo_original>
// kernel: dense_block_forward.2
$region0: #{dense_block_forward.2}
  #allocation0 [shape = 'u32[]', space=smem, size = 0x4, offset = 0x4, fixed_abs, tag = 'smem constant byte address 0x4 - core index']
  #allocation1 [shape = 'u32[144,128]{1,0:T(1,128)}', space=vmem, size = 0x12000, scoped, tag = 'internal scratch']
  #allocation2 [shape = 'f32[18,18,128]{2,1,0:T(8,128)}', space=vmem, size = 0x36000, scoped, tag = 'scratch operand']
  %s0 = inlined_call_operand.vmem [shape: f32[2,16,16,128], index: 0, kind: input, shape index: {}, may-alias: {0,5}]
  %s1 = inlined_call_operand.vmem [shape: f32[1,128], index: 1, kind: input, shape index: {}]
  %s2 = inlined_call_operand.vmem [shape: f32[1,128], index: 2, kind: input, shape index: {}]
  %s3 = inlined_call_operand.vmem [shape: bf16[9,128,128], index: 3, kind: input, shape index: {}]
  %s4 = inlined_call_operand.vmem [shape: f32[1,128], index: 4, kind: input, shape index: {}]
  %s5 = inlined_call_operand.vmem [shape: f32[2,16,16,128], index: 5, kind: output, shape index: {}, may-alias: {0,5}]
  %s6 = sld [smem:[#allocation0]]
  $region53: #{dense_block_forward.2} parent=0
    _
  %s8 = ssub.s32 1, %s6
  %s9 = scalar_select 0, %s8, %s6
  loop: start=0, step=1, limit=4
  $region2: #{dense_block_forward.2} parent=0 // loop_pre_header
    _
  $region3: #{dense_block_forward.2} parent=0 // loop_header
    %s11 = sphi 0, %s15
    %p12 = scmp.ge.s32.totalorder %s11, 4
    %s21 = sphi 0, %s23
    %s24 = sphi 0, %s21
    %s25 = sphi 0, %s24
    %s41 = sphi 0, %s25
    %s45 = sphi 0, %s45
    %s47 = sphi 0, %s45
    %s48 = sphi 0, %s47
    %s62 = sphi 0, %s48
    %s66 = sphi 0, %s66
    %s68 = sphi 0, %s66
    %s69 = sphi 0, %s68
    %s83 = sphi 0, %s69
    %s87 = sphi 0, %s87
    %s89 = sphi 0, %s87
    %s90 = sphi 0, %s89
    %s104 = sphi 0, %s90
    %s108 = sphi 0, %s108
    %s110 = sphi 0, %s108
    %s111 = sphi 0, %s110
    %s125 = sphi 0, %s111
    %s131 = sphi 0, %s133
    %s134 = sphi 0, %s131
    %s135 = sphi 0, %s134
    %s151 = sphi 0, %s135
  $region4: #{dense_block_forward.2} parent=0 // loop_header_branch
    %14 = sbr.rel (%p12) target = $region8
  $region5: #{dense_block_forward.2} parent=0 // loop_body
    %s16 = ssub.s32 %s11, 1
    %s17 = ssub.s32 %s11, 2
    %s18 = sadd.s32 %s11, 1
    %s19 = ssub.s32 %s11, %s18
    %p20 = scmp.eq.s32.totalorder %s19, 0
    %s22 = sadd.s32 %s21, 1
    %s23 = scalar_select %p20, %s21, %s22
    %p26 = pneg %p20
    %p27 = scmp.eq.s32.totalorder %s11, 1
    %p28 = por %p26, %p27
    %p29 = scmp.ne.s32.totalorder %s21, %s24
    %p30 = scmp.eq.s32.totalorder %s11, 0
    %p31 = por %p29, %p30
    %p32 = scmp.ne.s32.totalorder %s21, %s24
    %p33 = scmp.eq.s32.totalorder %s16, 1
    %p34 = por %p32, %p33
    %p35 = scmp.ne.s32.totalorder %s24, %s25
    %p36 = scmp.eq.s32.totalorder %s16, 0
    %p37 = por %p35, %p36
    %p38 = scmp.ne.s32.totalorder %s24, %s25
    %p39 = scmp.eq.s32.totalorder %s17, 1
    %p40 = por %p38, %p39
    %p42 = scmp.ne.s32.totalorder %s25, %s41
    %p43 = scmp.eq.s32.totalorder %s17, 0
    %p44 = por %p42, %p43
    %s46 = sadd.s32 %s45, 1
    %p49 = scmp.eq.s32.totalorder %s11, 1
    %p50 = scmp.ne.s32.totalorder %s45, %s47
    %p51 = scmp.eq.s32.totalorder %s11, 0
    %p52 = por %p50, %p51
    %p53 = scmp.ne.s32.totalorder %s45, %s47
    %p54 = scmp.eq.s32.totalorder %s16, 1
    %p55 = por %p53, %p54
    %p56 = scmp.ne.s32.totalorder %s47, %s48
    %p57 = scmp.eq.s32.totalorder %s16, 0
    %p58 = por %p56, %p57
    %p59 = scmp.ne.s32.totalorder %s47, %s48
    %p60 = scmp.eq.s32.totalorder %s17, 1
    %p61 = por %p59, %p60
    %p63 = scmp.ne.s32.totalorder %s48, %s62
    %p64 = scmp.eq.s32.totalorder %s17, 0
    %p65 = por %p63, %p64
    %s67 = sadd.s32 %s66, 1
    %p70 = scmp.eq.s32.totalorder %s11, 1
    %p71 = scmp.ne.s32.totalorder %s66, %s68
    %p72 = scmp.eq.s32.totalorder %s11, 0
    %p73 = por %p71, %p72
    %p74 = scmp.ne.s32.totalorder %s66, %s68
    %p75 = scmp.eq.s32.totalorder %s16, 1
    %p76 = por %p74, %p75
    %p77 = scmp.ne.s32.totalorder %s68, %s69
    %p78 = scmp.eq.s32.totalorder %s16, 0
    %p79 = por %p77, %p78
    %p80 = scmp.ne.s32.totalorder %s68, %s69
    %p81 = scmp.eq.s32.totalorder %s17, 1
    %p82 = por %p80, %p81
    %p84 = scmp.ne.s32.totalorder %s69, %s83
    %p85 = scmp.eq.s32.totalorder %s17, 0
    %p86 = por %p84, %p85
    %s88 = sadd.s32 %s87, 1
    %p91 = scmp.eq.s32.totalorder %s11, 1
    %p92 = scmp.ne.s32.totalorder %s87, %s89
    %p93 = scmp.eq.s32.totalorder %s11, 0
    %p94 = por %p92, %p93
    %p95 = scmp.ne.s32.totalorder %s87, %s89
    %p96 = scmp.eq.s32.totalorder %s16, 1
    %p97 = por %p95, %p96
    %p98 = scmp.ne.s32.totalorder %s89, %s90
    %p99 = scmp.eq.s32.totalorder %s16, 0
    %p100 = por %p98, %p99
    %p101 = scmp.ne.s32.totalorder %s89, %s90
    %p102 = scmp.eq.s32.totalorder %s17, 1
    %p103 = por %p101, %p102
    %p105 = scmp.ne.s32.totalorder %s90, %s104
    %p106 = scmp.eq.s32.totalorder %s17, 0
    %p107 = por %p105, %p106
    %s109 = sadd.s32 %s108, 1
    %p112 = scmp.eq.s32.totalorder %s11, 1
    %p113 = scmp.ne.s32.totalorder %s108, %s110
    %p114 = scmp.eq.s32.totalorder %s11, 0
    %p115 = por %p113, %p114
    %p116 = scmp.ne.s32.totalorder %s108, %s110
    %p117 = scmp.eq.s32.totalorder %s16, 1
    %p118 = por %p116, %p117
    %p119 = scmp.ne.s32.totalorder %s110, %s111
    %p120 = scmp.eq.s32.totalorder %s16, 0
    %p121 = por %p119, %p120
    %p122 = scmp.ne.s32.totalorder %s110, %s111
    %p123 = scmp.eq.s32.totalorder %s17, 1
    %p124 = por %p122, %p123
    %p126 = scmp.ne.s32.totalorder %s111, %s125
    %p127 = scmp.eq.s32.totalorder %s17, 0
    %p128 = por %p126, %p127
    %s129 = ssub.s32 %s11, %s18
    %p130 = scmp.eq.s32.totalorder %s129, 0
    %s132 = sadd.s32 %s131, 1
    %s133 = scalar_select %p130, %s131, %s132
    %p136 = pneg %p130
    %p137 = scmp.eq.s32.totalorder %s11, 1
    %p138 = por %p136, %p137
    %p139 = scmp.ne.s32.totalorder %s131, %s134
    %p140 = scmp.eq.s32.totalorder %s11, 0
    %p141 = por %p139, %p140
    %p142 = scmp.ne.s32.totalorder %s131, %s134
    %p143 = scmp.eq.s32.totalorder %s16, 1
    %p144 = por %p142, %p143
    %p145 = scmp.ne.s32.totalorder %s134, %s135
    %p146 = scmp.eq.s32.totalorder %s16, 0
    %p147 = por %p145, %p146
    %p148 = scmp.ne.s32.totalorder %s134, %s135
    %p149 = scmp.eq.s32.totalorder %s17, 1
    %p150 = por %p148, %p149
    %p152 = scmp.ne.s32.totalorder %s135, %s151
    %p153 = scmp.eq.s32.totalorder %s17, 0
    %p154 = por %p152, %p153
    %p155 = scmp.le.s32.totalorder 1, %s11
    %p156 = scmp.lt.s32.totalorder %s11, 3
    %p157 = pnand %p155, %p156
    %p158 = pneg %p157
    // Predicated region
    $region9: #{dense_block_forward.2} parent=5 // pred_check
      _
    $region10: #{dense_block_forward.2} parent=5 // pred_check_branch
      %160 = sbr.rel (%p157) target = $region12
    $region11: #{dense_block_forward.2} parent=5 // pred_region
      %s161 = ssub.s32 %s11, 1
      // Predicated region
      $region13: #{dense_block_forward.2} parent=11 // pred_check
        %p162 = pneg %p58
      $region14: #{dense_block_forward.2} parent=11 // pred_check_branch
        %164 = sbr.rel (%p162) target = $region16
      $region15: #{dense_block_forward.2} parent=11 // pred_region
        _
      $region16: #{dense_block_forward.2} parent=11 // pred_fallthru
        _
      // Predicated region
      $region17: #{dense_block_forward.2} parent=11 // pred_check
        %p165 = pneg %p79
      $region18: #{dense_block_forward.2} parent=11 // pred_check_branch
        %167 = sbr.rel (%p165) target = $region20
      $region19: #{dense_block_forward.2} parent=11 // pred_region
        _
      $region20: #{dense_block_forward.2} parent=11 // pred_fallthru
        _
      // Predicated region
      $region21: #{dense_block_forward.2} parent=11 // pred_check
        %p168 = pneg %p100
      $region22: #{dense_block_forward.2} parent=11 // pred_check_branch
        %170 = sbr.rel (%p168) target = $region24
      $region23: #{dense_block_forward.2} parent=11 // pred_region
        _
      $region24: #{dense_block_forward.2} parent=11 // pred_fallthru
        _
      // Predicated region
      $region25: #{dense_block_forward.2} parent=11 // pred_check
        %p171 = pneg %p121
      $region26: #{dense_block_forward.2} parent=11 // pred_check_branch
        %173 = sbr.rel (%p171) target = $region28
      $region27: #{dense_block_forward.2} parent=11 // pred_region
        _
      $region28: #{dense_block_forward.2} parent=11 // pred_fallthru
        _
    $region12: #{dense_block_forward.2} parent=5 // pred_fallthru
      _
    %p174 = scmp.lt.s32.totalorder %s11, 2
    // Predicated region
    $region29: #{dense_block_forward.2} parent=5 // pred_check
      %p175 = pneg %p174
    $region30: #{dense_block_forward.2} parent=5 // pred_check_branch
      %177 = sbr.rel (%p175) target = $region32
    $region31: #{dense_block_forward.2} parent=5 // pred_region
      // Predicated region
      $region33: #{dense_block_forward.2} parent=31 // pred_check
        %p178 = pneg %p31
      $region34: #{dense_block_forward.2} parent=31 // pred_check_branch
        %180 = sbr.rel (%p178) target = $region36
      $region35: #{dense_block_forward.2} parent=31 // pred_region
        %p181 = scmp.lt.s32.totalorder %s11, 1
        %s182 = scalar_select %p181, %s11, 1
        %s183 = smul.addr %s182, 32
        %s184 = smul.addr %s183, 8
        %s185 = scalar_lea.vmem %s0, %s184
      $region36: #{dense_block_forward.2} parent=31 // pred_fallthru
        _
    $region32: #{dense_block_forward.2} parent=5 // pred_fallthru
      _
    %p186 = scmp.le.s32.totalorder 1, %s11
    %p187 = scmp.lt.s32.totalorder %s11, 3
    %p188 = pnand %p186, %p187
    %p189 = pneg %p188
    // Predicated region
    $region37: #{dense_block_forward.2} parent=5 // pred_check
      _
    $region38: #{dense_block_forward.2} parent=5 // pred_check_branch
      %191 = sbr.rel (%p188) target = $region40
    $region39: #{dense_block_forward.2} parent=5 // pred_region
      %s192 = ssub.s32 %s11, 1
      %p193 = scmp.lt.s32.totalorder %s16, 1
      %s194 = scalar_select %p193, %s16, 1
      %s195 = smul.addr %s194, 32
      %s196 = smul.addr %s195, 8
      %s197 = scalar_lea.vmem %s0, %s196
      %p198 = pneg %p37
      %p199 = pneg %p34
      %p200 = pneg %p58
      %p201 = pneg %p55
      %p202 = pneg %p79
      %p203 = pneg %p76
      %p204 = pneg %p100
      %p205 = pneg %p97
      %p206 = pneg %p121
      %p207 = pneg %p118
      %p208 = pneg %p147
      %p209 = pneg %p144
      %p210 = scmp.lt.s32.totalorder %s16, 1
      %s211 = scalar_select %p210, %s16, 1
      %s212 = smul.addr %s211, 32
      %s213 = smul.addr %s212, 8
      %s214 = scalar_lea.vmem %s5, %s213
      %p215 = scmp.lt.s32.totalorder %s16, 1
      %s216 = scalar_select %p215, %s16, 1
      %s217 = smul.addr %s216, 32
      %s218 = smul.addr %s217, 8
      %s219 = scalar_lea.vmem %s0, %s218
      %p220 = scmp.lt.s32.totalorder %s16, 1
      %s221 = scalar_select %p220, %s16, 1
      %s222 = smul.addr %s221, 32
      %s223 = smul.addr %s222, 8
      %s224 = scalar_lea.vmem %s5, %s223
      %v226 = vld [vmem:[%s219] sm:$0xff]
      %v227 = vld [vmem:[%s219 + $0x8] sm:$0xff]
      %v228 = vld [vmem:[%s219 + $0x10] sm:$0xff]
      %v229 = vld [vmem:[%s219 + $0x18] sm:$0xff]
      %v230 = vld [vmem:[%s219 + $0x20] sm:$0xff]
      %v231 = vld [vmem:[%s219 + $0x28] sm:$0xff]
      %v232 = vld [vmem:[%s219 + $0x30] sm:$0xff]
      %v233 = vld [vmem:[%s219 + $0x38] sm:$0xff]
      %v234 = vld [vmem:[%s219 + $0x40] sm:$0xff]
      %v235 = vld [vmem:[%s219 + $0x48] sm:$0xff]
      %v236 = vld [vmem:[%s219 + $0x50] sm:$0xff]
      %v237 = vld [vmem:[%s219 + $0x58] sm:$0xff]
      %v238 = vld [vmem:[%s219 + $0x60] sm:$0xff]
      %v239 = vld [vmem:[%s219 + $0x68] sm:$0xff]
      %v240 = vld [vmem:[%s219 + $0x70] sm:$0xff]
      %v241 = vld [vmem:[%s219 + $0x78] sm:$0xff]
      %v242 = vld [vmem:[%s219 + $0x80] sm:$0xff]
      %v243 = vld [vmem:[%s219 + $0x88] sm:$0xff]
      %v244 = vld [vmem:[%s219 + $0x90] sm:$0xff]
      %v245 = vld [vmem:[%s219 + $0x98] sm:$0xff]
      %v246 = vld [vmem:[%s219 + $0xa0] sm:$0xff]
      %v247 = vld [vmem:[%s219 + $0xa8] sm:$0xff]
      %v248 = vld [vmem:[%s219 + $0xb0] sm:$0xff]
      %v249 = vld [vmem:[%s219 + $0xb8] sm:$0xff]
      %v250 = vld [vmem:[%s219 + $0xc0] sm:$0xff]
      %v251 = vld [vmem:[%s219 + $0xc8] sm:$0xff]
      %v252 = vld [vmem:[%s219 + $0xd0] sm:$0xff]
      %v253 = vld [vmem:[%s219 + $0xd8] sm:$0xff]
      %v254 = vld [vmem:[%s219 + $0xe0] sm:$0xff]
      %v255 = vld [vmem:[%s219 + $0xe8] sm:$0xff]
      %v256 = vld [vmem:[%s219 + $0xf0] sm:$0xff]
      %v257 = vld [vmem:[%s219 + $0xf8] sm:$0xff]
      %v258 = vld [vmem:[%s1] sm:$0x1]
      %v260 = vlaneseq
      %v261 = vshrl.u32 %v260, 7
      %v262 = vsub.s32 0, %v261
      %v263 = vrot.slane %v258, %v262
      %v265 = vmul.f32 %v226, %v263
      %v266 = vmul.f32 %v227, %v263
      %v267 = vmul.f32 %v228, %v263
      %v268 = vmul.f32 %v229, %v263
      %v269 = vmul.f32 %v230, %v263
      %v270 = vmul.f32 %v231, %v263
      %v271 = vmul.f32 %v232, %v263
      %v272 = vmul.f32 %v233, %v263
      %v273 = vmul.f32 %v234, %v263
      %v274 = vmul.f32 %v235, %v263
      %v275 = vmul.f32 %v236, %v263
      %v276 = vmul.f32 %v237, %v263
      %v277 = vmul.f32 %v238, %v263
      %v278 = vmul.f32 %v239, %v263
      %v279 = vmul.f32 %v240, %v263
      %v280 = vmul.f32 %v241, %v263
      %v281 = vmul.f32 %v242, %v263
      %v282 = vmul.f32 %v243, %v263
      %v283 = vmul.f32 %v244, %v263
      %v284 = vmul.f32 %v245, %v263
      %v285 = vmul.f32 %v246, %v263
      %v286 = vmul.f32 %v247, %v263
      %v287 = vmul.f32 %v248, %v263
      %v288 = vmul.f32 %v249, %v263
      %v289 = vmul.f32 %v250, %v263
      %v290 = vmul.f32 %v251, %v263
      %v291 = vmul.f32 %v252, %v263
      %v292 = vmul.f32 %v253, %v263
      %v293 = vmul.f32 %v254, %v263
      %v294 = vmul.f32 %v255, %v263
      %v295 = vmul.f32 %v256, %v263
      %v296 = vmul.f32 %v257, %v263
      %v297 = vld [vmem:[%s2] sm:$0x1]
      %v299 = vlaneseq
      %v300 = vshrl.u32 %v299, 7
      %v301 = vsub.s32 0, %v300
      %v302 = vrot.slane %v297, %v301
      %v304 = vadd.f32 %v265, %v302
      %v305 = vadd.f32 %v266, %v302
      %v306 = vadd.f32 %v267, %v302
      %v307 = vadd.f32 %v268, %v302
      %v308 = vadd.f32 %v269, %v302
      %v309 = vadd.f32 %v270, %v302
      %v310 = vadd.f32 %v271, %v302
      %v311 = vadd.f32 %v272, %v302
      %v312 = vadd.f32 %v273, %v302
      %v313 = vadd.f32 %v274, %v302
      %v314 = vadd.f32 %v275, %v302
      %v315 = vadd.f32 %v276, %v302
      %v316 = vadd.f32 %v277, %v302
      %v317 = vadd.f32 %v278, %v302
      %v318 = vadd.f32 %v279, %v302
      %v319 = vadd.f32 %v280, %v302
      %v320 = vadd.f32 %v281, %v302
      %v321 = vadd.f32 %v282, %v302
      %v322 = vadd.f32 %v283, %v302
      %v323 = vadd.f32 %v284, %v302
      %v324 = vadd.f32 %v285, %v302
      %v325 = vadd.f32 %v286, %v302
      %v326 = vadd.f32 %v287, %v302
      %v327 = vadd.f32 %v288, %v302
      %v328 = vadd.f32 %v289, %v302
      %v329 = vadd.f32 %v290, %v302
      %v330 = vadd.f32 %v291, %v302
      %v331 = vadd.f32 %v292, %v302
      %v332 = vadd.f32 %v293, %v302
      %v333 = vadd.f32 %v294, %v302
      %v334 = vadd.f32 %v295, %v302
      %v335 = vadd.f32 %v296, %v302
      %v336 = vmax.f32 %v304, 0.0
      %v337 = vmax.f32 %v305, 0.0
      %v338 = vmax.f32 %v306, 0.0
      %v339 = vmax.f32 %v307, 0.0
      %v340 = vmax.f32 %v308, 0.0
      %v341 = vmax.f32 %v309, 0.0
      %v342 = vmax.f32 %v310, 0.0
      %v343 = vmax.f32 %v311, 0.0
      %v344 = vmax.f32 %v312, 0.0
      %v345 = vmax.f32 %v313, 0.0
      %v346 = vmax.f32 %v314, 0.0
      %v347 = vmax.f32 %v315, 0.0
      %v348 = vmax.f32 %v316, 0.0
      %v349 = vmax.f32 %v317, 0.0
      %v350 = vmax.f32 %v318, 0.0
      %v351 = vmax.f32 %v319, 0.0
      %v352 = vmax.f32 %v320, 0.0
      %v353 = vmax.f32 %v321, 0.0
      %v354 = vmax.f32 %v322, 0.0
      %v355 = vmax.f32 %v323, 0.0
      %v356 = vmax.f32 %v324, 0.0
      %v357 = vmax.f32 %v325, 0.0
      %v358 = vmax.f32 %v326, 0.0
      %v359 = vmax.f32 %v327, 0.0
      %v360 = vmax.f32 %v328, 0.0
      %v361 = vmax.f32 %v329, 0.0
      %v362 = vmax.f32 %v330, 0.0
      %v363 = vmax.f32 %v331, 0.0
      %v364 = vmax.f32 %v332, 0.0
      %v365 = vmax.f32 %v333, 0.0
      %v366 = vmax.f32 %v334, 0.0
      %v367 = vmax.f32 %v335, 0.0
      %368 = vst [vmem:[#allocation2] sm:$0xff] 0.0
      %369 = vst [vmem:[#allocation2 + $0x8] sm:$0xff] 0.0
      %370 = vst [vmem:[#allocation2 + $0x10] sm:$0x3] 0.0
      %371 = vst [vmem:[#allocation2 + $0x18] sm:$0xff] 0.0
      %372 = vst [vmem:[#allocation2 + $0x20] sm:$0xff] 0.0
      %373 = vst [vmem:[#allocation2 + $0x28] sm:$0x3] 0.0
      %374 = vst [vmem:[#allocation2 + $0x30] sm:$0xff] 0.0
      %375 = vst [vmem:[#allocation2 + $0x38] sm:$0xff] 0.0
      %376 = vst [vmem:[#allocation2 + $0x40] sm:$0x3] 0.0
      %377 = vst [vmem:[#allocation2 + $0x48] sm:$0xff] 0.0
      %378 = vst [vmem:[#allocation2 + $0x50] sm:$0xff] 0.0
      %379 = vst [vmem:[#allocation2 + $0x58] sm:$0x3] 0.0
      %380 = vst [vmem:[#allocation2 + $0x60] sm:$0xff] 0.0
      %381 = vst [vmem:[#allocation2 + $0x68] sm:$0xff] 0.0
      %382 = vst [vmem:[#allocation2 + $0x70] sm:$0x3] 0.0
      %383 = vst [vmem:[#allocation2 + $0x78] sm:$0xff] 0.0
      %384 = vst [vmem:[#allocation2 + $0x80] sm:$0xff] 0.0
      %385 = vst [vmem:[#allocation2 + $0x88] sm:$0x3] 0.0
      %386 = vst [vmem:[#allocation2 + $0x90] sm:$0xff] 0.0
      %387 = vst [vmem:[#allocation2 + $0x98] sm:$0xff] 0.0
      %388 = vst [vmem:[#allocation2 + $0xa0] sm:$0x3] 0.0
      %389 = vst [vmem:[#allocation2 + $0xa8] sm:$0xff] 0.0
      %390 = vst [vmem:[#allocation2 + $0xb0] sm:$0xff] 0.0
      %391 = vst [vmem:[#allocation2 + $0xb8] sm:$0x3] 0.0
      %392 = vst [vmem:[#allocation2 + $0xc0] sm:$0xff] 0.0
      %393 = vst [vmem:[#allocation2 + $0xc8] sm:$0xff] 0.0
      %394 = vst [vmem:[#allocation2 + $0xd0] sm:$0x3] 0.0
      %395 = vst [vmem:[#allocation2 + $0xd8] sm:$0xff] 0.0
      %396 = vst [vmem:[#allocation2 + $0xe0] sm:$0xff] 0.0
      %397 = vst [vmem:[#allocation2 + $0xe8] sm:$0x3] 0.0
      %398 = vst [vmem:[#allocation2 + $0xf0] sm:$0xff] 0.0
      %399 = vst [vmem:[#allocation2 + $0xf8] sm:$0xff] 0.0
      %400 = vst [vmem:[#allocation2 + $0x100] sm:$0x3] 0.0
      %401 = vst [vmem:[#allocation2 + $0x108] sm:$0xff] 0.0
      %402 = vst [vmem:[#allocation2 + $0x110] sm:$0xff] 0.0
      %403 = vst [vmem:[#allocation2 + $0x118] sm:$0x3] 0.0
      %404 = vst [vmem:[#allocation2 + $0x120] sm:$0xff] 0.0
      %405 = vst [vmem:[#allocation2 + $0x128] sm:$0xff] 0.0
      %406 = vst [vmem:[#allocation2 + $0x130] sm:$0x3] 0.0
      %407 = vst [vmem:[#allocation2 + $0x138] sm:$0xff] 0.0
      %408 = vst [vmem:[#allocation2 + $0x140] sm:$0xff] 0.0
      %409 = vst [vmem:[#allocation2 + $0x148] sm:$0x3] 0.0
      %410 = vst [vmem:[#allocation2 + $0x150] sm:$0xff] 0.0
      %411 = vst [vmem:[#allocation2 + $0x158] sm:$0xff] 0.0
      %412 = vst [vmem:[#allocation2 + $0x160] sm:$0x3] 0.0
      %413 = vst [vmem:[#allocation2 + $0x168] sm:$0xff] 0.0
      %414 = vst [vmem:[#allocation2 + $0x170] sm:$0xff] 0.0
      %415 = vst [vmem:[#allocation2 + $0x178] sm:$0x3] 0.0
      %416 = vst [vmem:[#allocation2 + $0x180] sm:$0xff] 0.0
      %417 = vst [vmem:[#allocation2 + $0x188] sm:$0xff] 0.0
      %418 = vst [vmem:[#allocation2 + $0x190] sm:$0x3] 0.0
      %419 = vst [vmem:[#allocation2 + $0x198] sm:$0xff] 0.0
      %420 = vst [vmem:[#allocation2 + $0x1a0] sm:$0xff] 0.0
      %421 = vst [vmem:[#allocation2 + $0x1a8] sm:$0x3] 0.0
      %s422 = scalar_lea.vmem [#allocation2], 24
      %423 = vst [vmem:[%s422 + $0x1] sm:$0xff] %v336
      %424 = vst [vmem:[%s422 + $0x9] sm:$0xff] %v337
      %425 = vst [vmem:[%s422 + $0x19] sm:$0xff] %v338
      %426 = vst [vmem:[%s422 + $0x21] sm:$0xff] %v339
      %427 = vst [vmem:[%s422 + $0x31] sm:$0xff] %v340
      %428 = vst [vmem:[%s422 + $0x39] sm:$0xff] %v341
      %429 = vst [vmem:[%s422 + $0x49] sm:$0xff] %v342
      %430 = vst [vmem:[%s422 + $0x51] sm:$0xff] %v343
      %431 = vst [vmem:[%s422 + $0x61] sm:$0xff] %v344
      %432 = vst [vmem:[%s422 + $0x69] sm:$0xff] %v345
      %433 = vst [vmem:[%s422 + $0x79] sm:$0xff] %v346
      %434 = vst [vmem:[%s422 + $0x81] sm:$0xff] %v347
      %435 = vst [vmem:[%s422 + $0x91] sm:$0xff] %v348
      %436 = vst [vmem:[%s422 + $0x99] sm:$0xff] %v349
      %437 = vst [vmem:[%s422 + $0xa9] sm:$0xff] %v350
      %438 = vst [vmem:[%s422 + $0xb1] sm:$0xff] %v351
      %439 = vst [vmem:[%s422 + $0xc1] sm:$0xff] %v352
      %440 = vst [vmem:[%s422 + $0xc9] sm:$0xff] %v353
      %441 = vst [vmem:[%s422 + $0xd9] sm:$0xff] %v354
      %442 = vst [vmem:[%s422 + $0xe1] sm:$0xff] %v355
      %443 = vst [vmem:[%s422 + $0xf1] sm:$0xff] %v356
      %444 = vst [vmem:[%s422 + $0xf9] sm:$0xff] %v357
      %445 = vst [vmem:[%s422 + $0x109] sm:$0xff] %v358
      %446 = vst [vmem:[%s422 + $0x111] sm:$0xff] %v359
      %447 = vst [vmem:[%s422 + $0x121] sm:$0xff] %v360
      %448 = vst [vmem:[%s422 + $0x129] sm:$0xff] %v361
      %449 = vst [vmem:[%s422 + $0x139] sm:$0xff] %v362
      %450 = vst [vmem:[%s422 + $0x141] sm:$0xff] %v363
      %451 = vst [vmem:[%s422 + $0x151] sm:$0xff] %v364
      %452 = vst [vmem:[%s422 + $0x159] sm:$0xff] %v365
      %453 = vst [vmem:[%s422 + $0x169] sm:$0xff] %v366
      %454 = vst [vmem:[%s422 + $0x171] sm:$0xff] %v367
      %v455 = vld [vmem:[#allocation2] sm:$0xff]
      %v456 = vld [vmem:[#allocation2 + $0x8] sm:$0xff]
      %v457 = vld [vmem:[#allocation2 + $0x18] sm:$0xff]
      %v458 = vld [vmem:[#allocation2 + $0x20] sm:$0xff]
      %v459 = vld [vmem:[#allocation2 + $0x30] sm:$0xff]
      %v460 = vld [vmem:[#allocation2 + $0x38] sm:$0xff]
      %v461 = vld [vmem:[#allocation2 + $0x48] sm:$0xff]
      %v462 = vld [vmem:[#allocation2 + $0x50] sm:$0xff]
      %v463 = vld [vmem:[#allocation2 + $0x60] sm:$0xff]
      %v464 = vld [vmem:[#allocation2 + $0x68] sm:$0xff]
      %v465 = vld [vmem:[#allocation2 + $0x78] sm:$0xff]
      %v466 = vld [vmem:[#allocation2 + $0x80] sm:$0xff]
      %v467 = vld [vmem:[#allocation2 + $0x90] sm:$0xff]
      %v468 = vld [vmem:[#allocation2 + $0x98] sm:$0xff]
      %v469 = vld [vmem:[#allocation2 + $0xa8] sm:$0xff]
      %v470 = vld [vmem:[#allocation2 + $0xb0] sm:$0xff]
      %v471 = vld [vmem:[#allocation2 + $0xc0] sm:$0xff]
      %v472 = vld [vmem:[#allocation2 + $0xc8] sm:$0xff]
      %v473 = vld [vmem:[#allocation2 + $0xd8] sm:$0xff]
      %v474 = vld [vmem:[#allocation2 + $0xe0] sm:$0xff]
      %v475 = vld [vmem:[#allocation2 + $0xf0] sm:$0xff]
      %v476 = vld [vmem:[#allocation2 + $0xf8] sm:$0xff]
      %v477 = vld [vmem:[#allocation2 + $0x108] sm:$0xff]
      %v478 = vld [vmem:[#allocation2 + $0x110] sm:$0xff]
      %v479 = vld [vmem:[#allocation2 + $0x120] sm:$0xff]
      %v480 = vld [vmem:[#allocation2 + $0x128] sm:$0xff]
      %v481 = vld [vmem:[#allocation2 + $0x138] sm:$0xff]
      %v482 = vld [vmem:[#allocation2 + $0x140] sm:$0xff]
      %v483 = vld [vmem:[#allocation2 + $0x150] sm:$0xff]
      %v484 = vld [vmem:[#allocation2 + $0x158] sm:$0xff]
      %v485 = vld [vmem:[#allocation2 + $0x168] sm:$0xff]
      %v486 = vld [vmem:[#allocation2 + $0x170] sm:$0xff]
      %v487 = vpack.c.bf16 %v456, %v455
      %v488 = vpack.c.bf16 %v458, %v457
      %v489 = vpack.c.bf16 %v460, %v459
      %v490 = vpack.c.bf16 %v462, %v461
      %v491 = vpack.c.bf16 %v464, %v463
      %v492 = vpack.c.bf16 %v466, %v465
      %v493 = vpack.c.bf16 %v468, %v467
      %v494 = vpack.c.bf16 %v470, %v469
      %v495 = vpack.c.bf16 %v472, %v471
      %v496 = vpack.c.bf16 %v474, %v473
      %v497 = vpack.c.bf16 %v476, %v475
      %v498 = vpack.c.bf16 %v478, %v477
      %v499 = vpack.c.bf16 %v480, %v479
      %v500 = vpack.c.bf16 %v482, %v481
      %v501 = vpack.c.bf16 %v484, %v483
      %v502 = vpack.c.bf16 %v486, %v485
      %v503 = vld [vmem:[%s3] sm:$0xf]
      %v504 = vld [vmem:[%s3 + $0x4] sm:$0xf]
      %v505 = vld [vmem:[%s3 + $0x8] sm:$0xf]
      %v506 = vld [vmem:[%s3 + $0xc] sm:$0xf]
      %v507 = vld [vmem:[%s3 + $0x10] sm:$0xf]
      %v508 = vld [vmem:[%s3 + $0x14] sm:$0xf]
      %v509 = vld [vmem:[%s3 + $0x18] sm:$0xf]
      %v510 = vld [vmem:[%s3 + $0x1c] sm:$0xf]
      %v511 = vld [vmem:[%s3 + $0x20] sm:$0xf]
      %v512 = vld [vmem:[%s3 + $0x24] sm:$0xf]
      %v513 = vld [vmem:[%s3 + $0x28] sm:$0xf]
      %v514 = vld [vmem:[%s3 + $0x2c] sm:$0xf]
      %v515 = vld [vmem:[%s3 + $0x30] sm:$0xf]
      %v516 = vld [vmem:[%s3 + $0x34] sm:$0xf]
      %v517 = vld [vmem:[%s3 + $0x38] sm:$0xf]
      %v518 = vld [vmem:[%s3 + $0x3c] sm:$0xf]
      %v519 = vld [vmem:[#allocation2 + $0x1] sm:$0xff]
      %v520 = vld [vmem:[#allocation2 + $0x9] sm:$0xff]
      %v521 = vld [vmem:[#allocation2 + $0x19] sm:$0xff]
      %v522 = vld [vmem:[#allocation2 + $0x21] sm:$0xff]
      %v523 = vld [vmem:[#allocation2 + $0x31] sm:$0xff]
      %v524 = vld [vmem:[#allocation2 + $0x39] sm:$0xff]
      %v525 = vld [vmem:[#allocation2 + $0x49] sm:$0xff]
      %v526 = vld [vmem:[#allocation2 + $0x51] sm:$0xff]
      %v527 = vld [vmem:[#allocation2 + $0x61] sm:$0xff]
      %v528 = vld [vmem:[#allocation2 + $0x69] sm:$0xff]
      %v529 = vld [vmem:[#allocation2 + $0x79] sm:$0xff]
      %v530 = vld [vmem:[#allocation2 + $0x81] sm:$0xff]
      %v531 = vld [vmem:[#allocation2 + $0x91] sm:$0xff]
      %v532 = vld [vmem:[#allocation2 + $0x99] sm:$0xff]
      %v533 = vld [vmem:[#allocation2 + $0xa9] sm:$0xff]
      %v534 = vld [vmem:[#allocation2 + $0xb1] sm:$0xff]
      %v535 = vld [vmem:[#allocation2 + $0xc1] sm:$0xff]
      %v536 = vld [vmem:[#allocation2 + $0xc9] sm:$0xff]
      %v537 = vld [vmem:[#allocation2 + $0xd9] sm:$0xff]
      %v538 = vld [vmem:[#allocation2 + $0xe1] sm:$0xff]
      %v539 = vld [vmem:[#allocation2 + $0xf1] sm:$0xff]
      %v540 = vld [vmem:[#allocation2 + $0xf9] sm:$0xff]
      %v541 = vld [vmem:[#allocation2 + $0x109] sm:$0xff]
      %v542 = vld [vmem:[#allocation2 + $0x111] sm:$0xff]
      %v543 = vld [vmem:[#allocation2 + $0x121] sm:$0xff]
      %v544 = vld [vmem:[#allocation2 + $0x129] sm:$0xff]
      %v545 = vld [vmem:[#allocation2 + $0x139] sm:$0xff]
      %v546 = vld [vmem:[#allocation2 + $0x141] sm:$0xff]
      %v547 = vld [vmem:[#allocation2 + $0x151] sm:$0xff]
      %v548 = vld [vmem:[#allocation2 + $0x159] sm:$0xff]
      %v549 = vld [vmem:[#allocation2 + $0x169] sm:$0xff]
      %v550 = vld [vmem:[#allocation2 + $0x171] sm:$0xff]
      %v551 = vpack.c.bf16 %v520, %v519
      %v552 = vpack.c.bf16 %v522, %v521
      %v553 = vpack.c.bf16 %v524, %v523
      %v554 = vpack.c.bf16 %v526, %v525
      %v555 = vpack.c.bf16 %v528, %v527
      %v556 = vpack.c.bf16 %v530, %v529
      %v557 = vpack.c.bf16 %v532, %v531
      %v558 = vpack.c.bf16 %v534, %v533
      %v559 = vpack.c.bf16 %v536, %v535
      %v560 = vpack.c.bf16 %v538, %v537
      %v561 = vpack.c.bf16 %v540, %v539
      %v562 = vpack.c.bf16 %v542, %v541
      %v563 = vpack.c.bf16 %v544, %v543
      %v564 = vpack.c.bf16 %v546, %v545
      %v565 = vpack.c.bf16 %v548, %v547
      %v566 = vpack.c.bf16 %v550, %v549
      %s567 = scalar_lea.vmem %s3, 64
      %v568 = vld [vmem:[%s567] sm:$0xf]
      %v569 = vld [vmem:[%s567 + $0x4] sm:$0xf]
      %v570 = vld [vmem:[%s567 + $0x8] sm:$0xf]
      %v571 = vld [vmem:[%s567 + $0xc] sm:$0xf]
      %v572 = vld [vmem:[%s567 + $0x10] sm:$0xf]
      %v573 = vld [vmem:[%s567 + $0x14] sm:$0xf]
      %v574 = vld [vmem:[%s567 + $0x18] sm:$0xf]
      %v575 = vld [vmem:[%s567 + $0x1c] sm:$0xf]
      %v576 = vld [vmem:[%s567 + $0x20] sm:$0xf]
      %v577 = vld [vmem:[%s567 + $0x24] sm:$0xf]
      %v578 = vld [vmem:[%s567 + $0x28] sm:$0xf]
      %v579 = vld [vmem:[%s567 + $0x2c] sm:$0xf]
      %v580 = vld [vmem:[%s567 + $0x30] sm:$0xf]
      %v581 = vld [vmem:[%s567 + $0x34] sm:$0xf]
      %v582 = vld [vmem:[%s567 + $0x38] sm:$0xf]
      %v583 = vld [vmem:[%s567 + $0x3c] sm:$0xf]
      %v600 = vunpack.c.l.b16 %v568
      %v601 = vunpack.c.l.b16 %v569
      %v602 = vunpack.c.l.b16 %v570
      %v603 = vunpack.c.l.b16 %v571
      %v604 = vunpack.c.l.b16 %v572
      %v605 = vunpack.c.l.b16 %v573
      %v606 = vunpack.c.l.b16 %v574
      %v607 = vunpack.c.l.b16 %v575
      %v608 = vunpack.c.l.b16 %v576
      %v609 = vunpack.c.l.b16 %v577
      %v610 = vunpack.c.l.b16 %v578
      %v611 = vunpack.c.l.b16 %v579
      %v612 = vunpack.c.l.b16 %v580
      %v613 = vunpack.c.l.b16 %v581
      %v614 = vunpack.c.l.b16 %v582
      %v615 = vunpack.c.l.b16 %v583
      %v616 = vpack.c.b16 %v601, %v600
      %v617 = vpack.c.b16 %v603, %v602
      %v618 = vpack.c.b16 %v605, %v604
      %v619 = vpack.c.b16 %v607, %v606
      %v620 = vpack.c.b16 %v609, %v608
      %v621 = vpack.c.b16 %v611, %v610
      %v622 = vpack.c.b16 %v613, %v612
      %v623 = vpack.c.b16 %v615, %v614
      %632 = vmatprep.subr.bf16.mxu0 0
      %633 = vmatpush1.bf16.msra.mxu0 %v616
      %634 = vmatprep.subr.bf16.mxu0 0
      %635 = vmatpush1.bf16.msra.mxu0 %v617
      %636 = vmatprep.subr.bf16.mxu0 0
      %637 = vmatpush1.bf16.msra.mxu0 %v618
      %638 = vmatprep.subr.bf16.mxu0 0
      %639 = vmatpush1.bf16.msra.mxu0 %v619
      %640 = vmatprep.subr.bf16.mxu0 0
      %641 = vmatpush1.bf16.msra.mxu0 %v620
      %642 = vmatprep.subr.bf16.mxu0 0
      %643 = vmatpush1.bf16.msra.mxu0 %v621
      %644 = vmatprep.subr.bf16.mxu0 0
      %645 = vmatpush1.bf16.msra.mxu0 %v622
      %646 = vmatprep.subr.bf16.mxu0 0
      %647 = vmatpush1.bf16.msra.mxu0 %v623
      %648 = vmatprep.subr.bf16.mxu0 0
      %649 = vmatpush1.bf16.msra.mxu0 0
      %650 = vmatprep.subr.bf16.mxu0 0
      %651 = vmatpush1.bf16.msra.mxu0 0
      %652 = vmatprep.subr.bf16.mxu0 0
      %653 = vmatpush1.bf16.msra.mxu0 0
      %654 = vmatprep.subr.bf16.mxu0 0
      %655 = vmatpush1.bf16.msra.mxu0 0
      %656 = vmatprep.subr.bf16.mxu0 0
      %657 = vmatpush1.bf16.msra.mxu0 0
      %658 = vmatprep.subr.bf16.mxu0 0
      %659 = vmatpush1.bf16.msra.mxu0 0
      %660 = vmatprep.subr.bf16.mxu0 0
      %661 = vmatpush1.bf16.msra.mxu0 0
      %662 = vmatprep.subr.bf16.mxu0 0
      %663 = vmatpush1.bf16.msra.mxu0 0
      %664 = vmatprep.mubr.bf16.mxu0 0
      %665 = vmatmul.mubr.bf16.gmra.mrb[0].mxu0 %v551
      %v666 = vpop.f32.mrb[0].mxu0
      %v667 = vadd.f32 0.0, %v666
      %v668 = vpop.f32.mrb[0].mxu0
      %v669 = vpop.f32.mrb[0].mxu0
      %v670 = vadd.f32 0.0, %v669
      %v671 = vpop.f32.mrb[0].mxu0
      %672 = vmatprep.mubr.bf16.mxu0 0
      %673 = vmatmul.mubr.bf16.gmra.mrb[0].mxu0 %v552
      %v674 = vpop.f32.mrb[0].mxu0
      %v675 = vadd.f32 0.0, %v674
      %v676 = vpop.f32.mrb[0].mxu0
      %v677 = vpop.f32.mrb[0].mxu0
      %v678 = vadd.f32 0.0, %v677
      %v679 = vpop.f32.mrb[0].mxu0
      %680 = vmatprep.mubr.bf16.mxu0 0
      %681 = vmatmul.mubr.bf16.gmra.mrb[0].mxu0 %v553
      %v682 = vpop.f32.mrb[0].mxu0
      %v683 = vadd.f32 0.0, %v682
      %v684 = vpop.f32.mrb[0].mxu0
      %v685 = vpop.f32.mrb[0].mxu0
      %v686 = vadd.f32 0.0, %v685
      %v687 = vpop.f32.mrb[0].mxu0
      %688 = vmatprep.mubr.bf16.mxu0 0
      %689 = vmatmul.mubr.bf16.gmra.mrb[0].mxu0 %v554
      %v690 = vpop.f32.mrb[0].mxu0
      %v691 = vadd.f32 0.0, %v690
      %v692 = vpop.f32.mrb[0].mxu0
      %v693 = vpop.f32.mrb[0].mxu0
      %v694 = vadd.f32 0.0, %v693
      %v695 = vpop.f32.mrb[0].mxu0
      %696 = vmatprep.mubr.bf16.mxu0 0
      %697 = vmatmul.mubr.bf16.gmra.mrb[0].mxu0 %v555
      %v698 = vpop.f32.mrb[0].mxu0
      %v699 = vadd.f32 0.0, %v698
      %v700 = vpop.f32.mrb[0].mxu0
      %v701 = vpop.f32.mrb[0].mxu0
      %v702 = vadd.f32 0.0, %v701
      %v703 = vpop.f32.mrb[0].mxu0
      %704 = vmatprep.mubr.bf16.mxu0 0
      %705 = vmatmul.mubr.bf16.gmra.mrb[0].mxu0 %v556
      %v706 = vpop.f32.mrb[0].mxu0
      %v707 = vadd.f32 0.0, %v706
      %v708 = vpop.f32.mrb[0].mxu0
      %v709 = vpop.f32.mrb[0].mxu0
      %v710 = vadd.f32 0.0, %v709
      %v711 = vpop.f32.mrb[0].mxu0
      %712 = vmatprep.mubr.bf16.mxu0 0
      %713 = vmatmul.mubr.bf16.gmra.mrb[0].mxu0 %v557
      %v714 = vpop.f32.mrb[0].mxu0
      %v715 = vadd.f32 0.0, %v714
      %v716 = vpop.f32.mrb[0].mxu0
      %v717 = vpop.f32.mrb[0].mxu0
      %v718 = vadd.f32 0.0, %v717
      %v719 = vpop.f32.mrb[0].mxu0
      %720 = vmatprep.mubr.bf16.mxu0 0
      %721 = vmatmul.mubr.bf16.gmra.mrb[0].mxu0 %v558
      %v722 = vpop.f32.mrb[0].mxu0
      %v723 = vadd.f32 0.0, %v722
      %v724 = vpop.f32.mrb[0].mxu0
      %v725 = vpop.f32.mrb[0].mxu0
      %v726 = vadd.f32 0.0, %v725
      %v727 = vpop.f32.mrb[0].mxu0
      %728 = vmatprep.mubr.bf16.mxu0 0
      %729 = vmatmul.mubr.bf16.gmra.mrb[0].mxu0 %v559
      %v730 = vpop.f32.mrb[0].mxu0
      %v731 = vadd.f32 0.0, %v730
      %v732 = vpop.f32.mrb[0].mxu0
      %v733 = vpop.f32.mrb[0].mxu0
      %v734 = vadd.f32 0.0, %v733
      %v735 = vpop.f32.mrb[0].mxu0
      %736 = vmatprep.mubr.bf16.mxu0 0
      %737 = vmatmul.mubr.bf16.gmra.mrb[0].mxu0 %v560
      %v738 = vpop.f32.mrb[0].mxu0
      %v739 = vadd.f32 0.0, %v738
      %v740 = vpop.f32.mrb[0].mxu0
      %v741 = vpop.f32.mrb[0].mxu0
      %v742 = vadd.f32 0.0, %v741
      %v743 = vpop.f32.mrb[0].mxu0
      %744 = vmatprep.mubr.bf16.mxu0 0
      %745 = vmatmul.mubr.bf16.gmra.mrb[0].mxu0 %v561
      %v746 = vpop.f32.mrb[0].mxu0
      %v747 = vadd.f32 0.0, %v746
      %v748 = vpop.f32.mrb[0].mxu0
      %v749 = vpop.f32.mrb[0].mxu0
      %v750 = vadd.f32 0.0, %v749
      %v751 = vpop.f32.mrb[0].mxu0
      %752 = vmatprep.mubr.bf16.mxu0 0
      %753 = vmatmul.mubr.bf16.gmra.mrb[0].mxu0 %v562
      %v754 = vpop.f32.mrb[0].mxu0
      %v755 = vadd.f32 0.0, %v754
      %v756 = vpop.f32.mrb[0].mxu0
      %v757 = vpop.f32.mrb[0].mxu0
      %v758 = vadd.f32 0.0, %v757
      %v759 = vpop.f32.mrb[0].mxu0
      %760 = vmatprep.mubr.bf16.mxu0 0
      %761 = vmatmul.mubr.bf16.gmra.mrb[0].mxu0 %v563
      %v762 = vpop.f32.mrb[0].mxu0
      %v763 = vadd.f32 0.0, %v762
      %v764 = vpop.f32.mrb[0].mxu0
      %v765 = vpop.f32.mrb[0].mxu0
      %v766 = vadd.f32 0.0, %v765
      %v767 = vpop.f32.mrb[0].mxu0
      %768 = vmatprep.mubr.bf16.mxu0 0
      %769 = vmatmul.mubr.bf16.gmra.mrb[0].mxu0 %v564
      %v770 = vpop.f32.mrb[0].mxu0
      %v771 = vadd.f32 0.0, %v770
      %v772 = vpop.f32.mrb[0].mxu0
      %v773 = vpop.f32.mrb[0].mxu0
      %v774 = vadd.f32 0.0, %v773
      %v775 = vpop.f32.mrb[0].mxu0
      %776 = vmatprep.mubr.bf16.mxu0 0
      %777 = vmatmul.mubr.bf16.gmra.mrb[0].mxu0 %v565
      %v778 = vpop.f32.mrb[0].mxu0
      %v779 = vadd.f32 0.0, %v778
      %v780 = vpop.f32.mrb[0].mxu0
      %v781 = vpop.f32.mrb[0].mxu0
      %v782 = vadd.f32 0.0, %v781
      %v783 = vpop.f32.mrb[0].mxu0
      %784 = vmatprep.mubr.bf16.mxu0 0
      %785 = vmatmul.mubr.bf16.gmra.mrb[0].mxu0 %v566
      %v786 = vpop.f32.mrb[0].mxu0
      %v787 = vadd.f32 0.0, %v786
      %v788 = vpop.f32.mrb[0].mxu0
      %v789 = vpop.f32.mrb[0].mxu0
      %v790 = vadd.f32 0.0, %v789
      %v791 = vpop.f32.mrb[0].mxu0
      %792 = vdwg.mxu0
      %v809 = vunpack.c.l.b16 %v503
      %v810 = vunpack.c.l.b16 %v504
      %v811 = vunpack.c.l.b16 %v505
      %v812 = vunpack.c.l.b16 %v506
      %v813 = vunpack.c.l.b16 %v507
      %v814 = vunpack.c.l.b16 %v508
      %v815 = vunpack.c.l.b16 %v509
      %v816 = vunpack.c.l.b16 %v510
      %v817 = vunpack.c.l.b16 %v511
      %v818 = vunpack.c.l.b16 %v512
      %v819 = vunpack.c.l.b16 %v513
      %v820 = vunpack.c.l.b16 %v514
      %v821 = vunpack.c.l.b16 %v515
      %v822 = vunpack.c.l.b16 %v516
      %v823 = vunpack.c.l.b16 %v517
      %v824 = vunpack.c.l.b16 %v518
      %v825 = vpack.c.b16 %v810, %v809
      %v826 = vpack.c.b16 %v812, %v811
      %v827 = vpack.c.b16 %v814, %v813
      %v828 = vpack.c.b16 %v816, %v815
      %v829 = vpack.c.b16 %v818, %v817
      %v830 = vpack.c.b16 %v820, %v819
      %v831 = vpack.c.b16 %v822, %v821
      %v832 = vpack.c.b16 %v824, %v823
      %841 = vmatprep.subr.bf16.mxu0 0
      %842 = vmatpush1.bf16.msra.mxu0 %v825
      %843 = vmatprep.subr.bf16.mxu0 0
      %844 = vmatpush1.bf16.msra.mxu0 %v826
      %845 = vmatprep.subr.bf16.mxu0 0
      %846 = vmatpush1.bf16.msra.mxu0 %v827
      %847 = vmatprep.subr.bf16.mxu0 0
      %848 = vmatpush1.bf16.msra.mxu0 %v828
      %849 = vmatprep.subr.bf16.mxu0 0
      %850 = vmatpush1.bf16.msra.mxu0 %v829
      %851 = vmatprep.subr.bf16.mxu0 0
      %852 = vmatpush1.bf16.msra.mxu0 %v830
      %853 = vmatprep.subr.bf16.mxu0 0
      %854 = vmatpush1.bf16.msra.mxu0 %v831
      %855 = vmatprep.subr.bf16.mxu0 0
      %856 = vmatpush1.bf16.msra.mxu0 %v832
      %857 = vmatprep.subr.bf16.mxu0 0
      %858 = vmatpush1.bf16.msra.mxu0 0
      %859 = vmatprep.subr.bf16.mxu0 0
      %860 = vmatpush1.bf16.msra.mxu0 0
      %861 = vmatprep.subr.bf16.mxu0 0
      %862 = vmatpush1.bf16.msra.mxu0 0
      %863 = vmatprep.subr.bf16.mxu0 0
      %864 = vmatpush1.bf16.msra.mxu0 0
      %865 = vmatprep.subr.bf16.mxu0 0
      %866 = vmatpush1.bf16.msra.mxu0 0
      %867 = vmatprep.subr.bf16.mxu0 0
      %868 = vmatpush1.bf16.msra.mxu0 0
      %869 = vmatprep.subr.bf16.mxu0 0
      %870 = vmatpush1.bf16.msra.mxu0 0
      %871 = vmatprep.subr.bf16.mxu0 0
      %872 = vmatpush1.bf16.msra.mxu0 0
      %873 = vmatprep.mubr.bf16.mxu0 0
      %874 = vmatmul.mubr.bf16.gmra.mrb[0].mxu0 %v487
      %v875 = vpop.f32.mrb[0].mxu0
      %v876 = vadd.f32 %v667, %v875
      %v877 = vpop.f32.mrb[0].mxu0
      %v878 = vpop.f32.mrb[0].mxu0
      %v879 = vadd.f32 %v670, %v878
      %v880 = vpop.f32.mrb[0].mxu0
      %881 = vmatprep.mubr.bf16.mxu0 0
      %882 = vmatmul.mubr.bf16.gmra.mrb[0].mxu0 %v488
      %v883 = vpop.f32.mrb[0].mxu0
      %v884 = vadd.f32 %v675, %v883
      %v885 = vpop.f32.mrb[0].mxu0
      %v886 = vpop.f32.mrb[0].mxu0
      %v887 = vadd.f32 %v678, %v886
      %v888 = vpop.f32.mrb[0].mxu0
      %889 = vmatprep.mubr.bf16.mxu0 0
      %890 = vmatmul.mubr.bf16.gmra.mrb[0].mxu0 %v489
      %v891 = vpop.f32.mrb[0].mxu0
      %v892 = vadd.f32 %v683, %v891
      %v893 = vpop.f32.mrb[0].mxu0
      %v894 = vpop.f32.mrb[0].mxu0
      %v895 = vadd.f32 %v686, %v894
      %v896 = vpop.f32.mrb[0].mxu0
      %897 = vmatprep.mubr.bf16.mxu0 0
      %898 = vmatmul.mubr.bf16.gmra.mrb[0].mxu0 %v490
      %v899 = vpop.f32.mrb[0].mxu0
      %v900 = vadd.f32 %v691, %v899
      %v901 = vpop.f32.mrb[0].mxu0
      %v902 = vpop.f32.mrb[0].mxu0
      %v903 = vadd.f32 %v694, %v902
      %v904 = vpop.f32.mrb[0].mxu0
      %905 = vmatprep.mubr.bf16.mxu0 0
      %906 = vmatmul.mubr.bf16.gmra.mrb[0].mxu0 %v491
      %v907 = vpop.f32.mrb[0].mxu0
      %v908 = vadd.f32 %v699, %v907
      %v909 = vpop.f32.mrb[0].mxu0
      %v910 = vpop.f32.mrb[0].mxu0
      %v911 = vadd.f32 %v702, %v910
      %v912 = vpop.f32.mrb[0].mxu0
      %913 = vmatprep.mubr.bf16.mxu0 0
      %914 = vmatmul.mubr.bf16.gmra.mrb[0].mxu0 %v492
      %v915 = vpop.f32.mrb[0].mxu0
      %v916 = vadd.f32 %v707, %v915
      %v917 = vpop.f32.mrb[0].mxu0
      %v918 = vpop.f32.mrb[0].mxu0
      %v919 = vadd.f32 %v710, %v918
      %v920 = vpop.f32.mrb[0].mxu0
      %921 = vmatprep.mubr.bf16.mxu0 0
      %922 = vmatmul.mubr.bf16.gmra.mrb[0].mxu0 %v493
      %v923 = vpop.f32.mrb[0].mxu0
      %v924 = vadd.f32 %v715, %v923
      %v925 = vpop.f32.mrb[0].mxu0
      %v926 = vpop.f32.mrb[0].mxu0
      %v927 = vadd.f32 %v718, %v926
      %v928 = vpop.f32.mrb[0].mxu0
      %929 = vmatprep.mubr.bf16.mxu0 0
      %930 = vmatmul.mubr.bf16.gmra.mrb[0].mxu0 %v494
      %v931 = vpop.f32.mrb[0].mxu0
      %v932 = vadd.f32 %v723, %v931
      %v933 = vpop.f32.mrb[0].mxu0
      %v934 = vpop.f32.mrb[0].mxu0
      %v935 = vadd.f32 %v726, %v934
      %v936 = vpop.f32.mrb[0].mxu0
      %937 = vmatprep.mubr.bf16.mxu0 0
      %938 = vmatmul.mubr.bf16.gmra.mrb[0].mxu0 %v495
      %v939 = vpop.f32.mrb[0].mxu0
      %v940 = vadd.f32 %v731, %v939
      %v941 = vpop.f32.mrb[0].mxu0
      %v942 = vpop.f32.mrb[0].mxu0
      %v943 = vadd.f32 %v734, %v942
      %v944 = vpop.f32.mrb[0].mxu0
      %945 = vmatprep.mubr.bf16.mxu0 0
      %946 = vmatmul.mubr.bf16.gmra.mrb[0].mxu0 %v496
      %v947 = vpop.f32.mrb[0].mxu0
      %v948 = vadd.f32 %v739, %v947
      %v949 = vpop.f32.mrb[0].mxu0
      %v950 = vpop.f32.mrb[0].mxu0
      %v951 = vadd.f32 %v742, %v950
      %v952 = vpop.f32.mrb[0].mxu0
      %953 = vmatprep.mubr.bf16.mxu0 0
      %954 = vmatmul.mubr.bf16.gmra.mrb[0].mxu0 %v497
      %v955 = vpop.f32.mrb[0].mxu0
      %v956 = vadd.f32 %v747, %v955
      %v957 = vpop.f32.mrb[0].mxu0
      %v958 = vpop.f32.mrb[0].mxu0
      %v959 = vadd.f32 %v750, %v958
      %v960 = vpop.f32.mrb[0].mxu0
      %961 = vmatprep.mubr.bf16.mxu0 0
      %962 = vmatmul.mubr.bf16.gmra.mrb[0].mxu0 %v498
      %v963 = vpop.f32.mrb[0].mxu0
      %v964 = vadd.f32 %v755, %v963
      %v965 = vpop.f32.mrb[0].mxu0
      %v966 = vpop.f32.mrb[0].mxu0
      %v967 = vadd.f32 %v758, %v966
      %v968 = vpop.f32.mrb[0].mxu0
      %969 = vmatprep.mubr.bf16.mxu0 0
      %970 = vmatmul.mubr.bf16.gmra.mrb[0].mxu0 %v499
      %v971 = vpop.f32.mrb[0].mxu0
      %v972 = vadd.f32 %v763, %v971
      %v973 = vpop.f32.mrb[0].mxu0
      %v974 = vpop.f32.mrb[0].mxu0
      %v975 = vadd.f32 %v766, %v974
      %v976 = vpop.f32.mrb[0].mxu0
      %977 = vmatprep.mubr.bf16.mxu0 0
      %978 = vmatmul.mubr.bf16.gmra.mrb[0].mxu0 %v500
      %v979 = vpop.f32.mrb[0].mxu0
      %v980 = vadd.f32 %v771, %v979
      %v981 = vpop.f32.mrb[0].mxu0
      %v982 = vpop.f32.mrb[0].mxu0
      %v983 = vadd.f32 %v774, %v982
      %v984 = vpop.f32.mrb[0].mxu0
      %985 = vmatprep.mubr.bf16.mxu0 0
      %986 = vmatmul.mubr.bf16.gmra.mrb[0].mxu0 %v501
      %v987 = vpop.f32.mrb[0].mxu0
      %v988 = vadd.f32 %v779, %v987
      %v989 = vpop.f32.mrb[0].mxu0
      %v990 = vpop.f32.mrb[0].mxu0
      %v991 = vadd.f32 %v782, %v990
      %v992 = vpop.f32.mrb[0].mxu0
      %993 = vmatprep.mubr.bf16.mxu0 0
      %994 = vmatmul.mubr.bf16.gmra.mrb[0].mxu0 %v502
      %v995 = vpop.f32.mrb[0].mxu0
      %v996 = vadd.f32 %v787, %v995
      %v997 = vpop.f32.mrb[0].mxu0
      %v998 = vpop.f32.mrb[0].mxu0
      %v999 = vadd.f32 %v790, %v998
      %v1000 = vpop.f32.mrb[0].mxu0
      %1001 = vdwg.mxu0
      %v1002 = vld [vmem:[#allocation2 + $0x2] sm:$0xff]
      %v1003 = vld [vmem:[#allocation2 + $0xa] sm:$0xff]
      %v1004 = vld [vmem:[#allocation2 + $0x1a] sm:$0xff]
      %v1005 = vld [vmem:[#allocation2 + $0x22] sm:$0xff]
      %v1006 = vld [vmem:[#allocation2 + $0x32] sm:$0xff]
      %v1007 = vld [vmem:[#allocation2 + $0x3a] sm:$0xff]
      %v1008 = vld [vmem:[#allocation2 + $0x4a] sm:$0xff]
      %v1009 = vld [vmem:[#allocation2 + $0x52] sm:$0xff]
      %v1010 = vld [vmem:[#allocation2 + $0x62] sm:$0xff]
      %v1011 = vld [vmem:[#allocation2 + $0x6a] sm:$0xff]
      %v1012 = vld [vmem:[#allocation2 + $0x7a] sm:$0xff]
      %v1013 = vld [vmem:[#allocation2 + $0x82] sm:$0xff]
      %v1014 = vld [vmem:[#allocation2 + $0x92] sm:$0xff]
      %v1015 = vld [vmem:[#allocation2 + $0x9a] sm:$0xff]
      %v1016 = vld [vmem:[#allocation2 + $0xaa] sm:$0xff]
      %v1017 = vld [vmem:[#allocation2 + $0xb2] sm:$0xff]
      %v1018 = vld [vmem:[#allocation2 + $0xc2] sm:$0xff]
      %v1019 = vld [vmem:[#allocation2 + $0xca] sm:$0xff]
      %v1020 = vld [vmem:[#allocation2 + $0xda] sm:$0xff]
      %v1021 = vld [vmem:[#allocation2 + $0xe2] sm:$0xff]
      %v1022 = vld [vmem:[#allocation2 + $0xf2] sm:$0xff]
      %v1023 = vld [vmem:[#allocation2 + $0xfa] sm:$0xff]
      %v1024 = vld [vmem:[#allocation2 + $0x10a] sm:$0xff]
      %v1025 = vld [vmem:[#allocation2 + $0x112] sm:$0xff]
      %v1026 = vld [vmem:[#allocation2 + $0x122] sm:$0xff]
      %v1027 = vld [vmem:[#allocation2 + $0x12a] sm:$0xff]
      %v1028 = vld [vmem:[#allocation2 + $0x13a] sm:$0xff]
      %v1029 = vld [vmem:[#allocation2 + $0x142] sm:$0xff]
      %v1030 = vld [vmem:[#allocation2 + $0x152] sm:$0xff]
      %v1031 = vld [vmem:[#allocation2 + $0x15a] sm:$0xff]
      %v1032 = vld [vmem:[#allocation2 + $0x16a] sm:$0xff]
      %v1033 = vld [vmem:[#allocation2 + $0x172] sm:$0xff]
      %v1034 = vpack.c.bf16 %v1003, %v1002
      %v1035 = vpack.c.bf16 %v1005, %v1004
      %v1036 = vpack.c.bf16 %v1007, %v1006
      %v1037 = vpack.c.bf16 %v1009, %v1008
      %v1038 = vpack.c.bf16 %v1011, %v1010
      %v1039 = vpack.c.bf16 %v1013, %v1012
      %v1040 = vpack.c.bf16 %v1015, %v1014
      %v1041 = vpack.c.bf16 %v1017, %v1016
      %v1042 = vpack.c.bf16 %v1019, %v1018
      %v1043 = vpack.c.bf16 %v1021, %v1020
      %v1044 = vpack.c.bf16 %v1023, %v1022
      %v1045 = vpack.c.bf16 %v1025, %v1024
      %v1046 = vpack.c.bf16 %v1027, %v1026
      %v1047 = vpack.c.bf16 %v1029, %v1028
      %v1048 = vpack.c.bf16 %v1031, %v1030
      %v1049 = vpack.c.bf16 %v1033, %v1032
      %s1050 = scalar_lea.vmem %s3, 128
      %v1051 = vld [vmem:[%s1050] sm:$0xf]
      %v1052 = vld [vmem:[%s1050 + $0x4] sm:$0xf]
      %v1053 = vld [vmem:[%s1050 + $0x8] sm:$0xf]
      %v1054 = vld [vmem:[%s1050 + $0xc] sm:$0xf]
      %v1055 = vld [vmem:[%s1050 + $0x10] sm:$0xf]
      %v1056 = vld [vmem:[%s1050 + $0x14] sm:$0xf]
      %v1057 = vld [vmem:[%s1050 + $0x18] sm:$0xf]
      %v1058 = vld [vmem:[%s1050 + $0x1c] sm:$0xf]
      %v1059 = vld [vmem:[%s1050 + $0x20] sm:$0xf]
      %v1060 = vld [vmem:[%s1050 + $0x24] sm:$0xf]
      %v1061 = vld [vmem:[%s1050 + $0x28] sm:$0xf]
      %v1062 = vld [vmem:[%s1050 + $0x2c] sm:$0xf]
      %v1063 = vld [vmem:[%s1050 + $0x30] sm:$0xf]
      %v1064 = vld [vmem:[%s1050 + $0x34] sm:$0xf]
      %v1065 = vld [vmem:[%s1050 + $0x38] sm:$0xf]
      %v1066 = vld [vmem:[%s1050 + $0x3c] sm:$0xf]
      %v1083 = vunpack.c.l.b16 %v1051
      %v1084 = vunpack.c.l.b16 %v1052
      %v1085 = vunpack.c.l.b16 %v1053
      %v1086 = vunpack.c.l.b16 %v1054
      %v1087 = vunpack.c.l.b16 %v1055
      %v1088 = vunpack.c.l.b16 %v1056
      %v1089 = vunpack.c.l.b16 %v1057
      %v1090 = vunpack.c.l.b16 %v1058
      %v1091 = vunpack.c.l.b16 %v1059
      %v1092 = vunpack.c.l.b16 %v1060
      %v1093 = vunpack.c.l.b16 %v1061
      %v1094 = vunpack.c.l.b16 %v1062
      %v1095 = vunpack.c.l.b16 %v1063
      %v1096 = vunpack.c.l.b16 %v1064
      %v1097 = vunpack.c.l.b16 %v1065
      %v1098 = vunpack.c.l.b16 %v1066
      %v1099 = vpack.c.b16 %v1084, %v1083
      %v1100 = vpack.c.b16 %v1086, %v1085
      %v1101 = vpack.c.b16 %v1088, %v1087
      %v1102 = vpack.c.b16 %v1090, %v1089
      %v1103 = vpack.c.b16 %v1092, %v1091
      %v1104 = vpack.c.b16 %v1094, %v1093
      %v1105 = vpack.c.b16 %v1096, %v1095
      %v1106 = vpack.c.b16 %v1098, %v1097
      %1115 = vmatprep.subr.bf16.mxu0 0
      %1116 = vmatpush1.bf16.msra.mxu0 %v1099
      %1117 = vmatprep.subr.bf16.mxu0 0
      %1118 = vmatpush1.bf16.msra.mxu0 %v1100
      %1119 = vmatprep.subr.bf16.mxu0 0
      %1120 = vmatpush1.bf16.msra.mxu0 %v1101
      %1121 = vmatprep.subr.bf16.mxu0 0
      %1122 = vmatpush1.bf16.msra.mxu0 %v1102
      %1123 = vmatprep.subr.bf16.mxu0 0
      %1124 = vmatpush1.bf16.msra.mxu0 %v1103
      %1125 = vmatprep.subr.bf16.mxu0 0
      %1126 = vmatpush1.bf16.msra.mxu0 %v1104
      %1127 = vmatprep.subr.bf16.mxu0 0
      %1128 = vmatpush1.bf16.msra.mxu0 %v1105
      %1129 = vmatprep.subr.bf16.mxu0 0
      %1130 = vmatpush1.bf16.msra.mxu0 %v1106
      %1131 = vmatprep.subr.bf16.mxu0 0
      %1132 = vmatpush1.bf16.msra.mxu0 0
      %1133 = vmatprep.subr.bf16.mxu0 0
      %1134 = vmatpush1.bf16.msra.mxu0 0
      %1135 = vmatprep.subr.bf16.mxu0 0
      %1136 = vmatpush1.bf16.msra.mxu0 0
      %1137 = vmatprep.subr.bf16.mxu0 0
      %1138 = vmatpush1.bf16.msra.mxu0 0
      %1139 = vmatprep.subr.bf16.mxu0 0
      %1140 = vmatpush1.bf16.msra.mxu0 0
      %1141 = vmatprep.subr.bf16.mxu0 0
      %1142 = vmatpush1.bf16.msra.mxu0 0
      %1143 = vmatprep.subr.bf16.mxu0 0
      %1144 = vmatpush1.bf16.msra.mxu0 0
      %1145 = vmatprep.subr.bf16.mxu0 0
      %1146 = vmatpush1.bf16.msra.mxu0 0
      %1147 = vmatprep.mubr.bf16.mxu0 0
      %1148 = vmatmul.mubr.bf16.gmra.mrb[0].mxu0 %v1034
      %v1149 = vpop.f32.mrb[0].mxu0
      %v1150 = vadd.f32 0.0, %v1149
      %v1151 = vpop.f32.mrb[0].mxu0
      %v1152 = vpop.f32.mrb[0].mxu0
      %v1153 = vadd.f32 0.0, %v1152
      %v1154 = vpop.f32.mrb[0].mxu0
      %1155 = vmatprep.mubr.bf16.mxu0 0
      %1156 = vmatmul.mubr.bf16.gmra.mrb[0].mxu0 %v1035
      %v1157 = vpop.f32.mrb[0].mxu0
      %v1158 = vadd.f32 0.0, %v1157
      %v1159 = vpop.f32.mrb[0].mxu0
      %v1160 = vpop.f32.mrb[0].mxu0
      %v1161 = vadd.f32 0.0, %v1160
      %v1162 = vpop.f32.mrb[0].mxu0
      %1163 = vmatprep.mubr.bf16.mxu0 0
      %1164 = vmatmul.mubr.bf16.gmra.mrb[0].mxu0 %v1036
      %v1165 = vpop.f32.mrb[0].mxu0
      %v1166 = vadd.f32 0.0, %v1165
      %v1167 = vpop.f32.mrb[0].mxu0
      %v1168 = vpop.f32.mrb[0].mxu0
      %v1169 = vadd.f32 0.0, %v1168
      %v1170 = vpop.f32.mrb[0].mxu0
      %1171 = vmatprep.mubr.bf16.mxu0 0
      %1172 = vmatmul.mubr.bf16.gmra.mrb[0].mxu0 %v1037
      %v1173 = vpop.f32.mrb[0].mxu0
      %v1174 = vadd.f32 0.0, %v1173
      %v1175 = vpop.f32.mrb[0].mxu0
      %v1176 = vpop.f32.mrb[0].mxu0
      %v1177 = vadd.f32 0.0, %v1176
      %v1178 = vpop.f32.mrb[0].mxu0
      %1179 = vmatprep.mubr.bf16.mxu0 0
      %1180 = vmatmul.mubr.bf16.gmra.mrb[0].mxu0 %v1038
      %v1181 = vpop.f32.mrb[0].mxu0
      %v1182 = vadd.f32 0.0, %v1181
      %v1183 = vpop.f32.mrb[0].mxu0
      %v1184 = vpop.f32.mrb[0].mxu0
      %v1185 = vadd.f32 0.0, %v1184
      %v1186 = vpop.f32.mrb[0].mxu0
      %1187 = vmatprep.mubr.bf16.mxu0 0
      %1188 = vmatmul.mubr.bf16.gmra.mrb[0].mxu0 %v1039
      %v1189 = vpop.f32.mrb[0].mxu0
      %v1190 = vadd.f32 0.0, %v1189
      %v1191 = vpop.f32.mrb[0].mxu0
      %v1192 = vpop.f32.mrb[0].mxu0
      %v1193 = vadd.f32 0.0, %v1192
      %v1194 = vpop.f32.mrb[0].mxu0
      %1195 = vmatprep.mubr.bf16.mxu0 0
      %1196 = vmatmul.mubr.bf16.gmra.mrb[0].mxu0 %v1040
      %v1197 = vpop.f32.mrb[0].mxu0
      %v1198 = vadd.f32 0.0, %v1197
      %v1199 = vpop.f32.mrb[0].mxu0
      %v1200 = vpop.f32.mrb[0].mxu0
      %v1201 = vadd.f32 0.0, %v1200
      %v1202 = vpop.f32.mrb[0].mxu0
      %1203 = vmatprep.mubr.bf16.mxu0 0
      %1204 = vmatmul.mubr.bf16.gmra.mrb[0].mxu0 %v1041
      %v1205 = vpop.f32.mrb[0].mxu0
      %v1206 = vadd.f32 0.0, %v1205
      %v1207 = vpop.f32.mrb[0].mxu0
      %v1208 = vpop.f32.mrb[0].mxu0
      %v1209 = vadd.f32 0.0, %v1208
      %v1210 = vpop.f32.mrb[0].mxu0
      %1211 = vmatprep.mubr.bf16.mxu0 0
      %1212 = vmatmul.mubr.bf16.gmra.mrb[0].mxu0 %v1042
      %v1213 = vpop.f32.mrb[0].mxu0
      %v1214 = vadd.f32 0.0, %v1213
      %v1215 = vpop.f32.mrb[0].mxu0
      %v1216 = vpop.f32.mrb[0].mxu0
      %v1217 = vadd.f32 0.0, %v1216
      %v1218 = vpop.f32.mrb[0].mxu0
      %1219 = vmatprep.mubr.bf16.mxu0 0
      %1220 = vmatmul.mubr.bf16.gmra.mrb[0].mxu0 %v1043
      %v1221 = vpop.f32.mrb[0].mxu0
      %v1222 = vadd.f32 0.0, %v1221
      %v1223 = vpop.f32.mrb[0].mxu0
      %v1224 = vpop.f32.mrb[0].mxu0
      %v1225 = vadd.f32 0.0, %v1224
      %v1226 = vpop.f32.mrb[0].mxu0
      %1227 = vmatprep.mubr.bf16.mxu0 0
      %1228 = vmatmul.mubr.bf16.gmra.mrb[0].mxu0 %v1044
      %v1229 = vpop.f32.mrb[0].mxu0
      %v1230 = vadd.f32 0.0, %v1229
      %v1231 = vpop.f32.mrb[0].mxu0
      %v1232 = vpop.f32.mrb[0].mxu0
      %v1233 = vadd.f32 0.0, %v1232
      %v1234 = vpop.f32.mrb[0].mxu0
      %1235 = vmatprep.mubr.bf16.mxu0 0
      %1236 = vmatmul.mubr.bf16.gmra.mrb[0].mxu0 %v1045
      %v1237 = vpop.f32.mrb[0].mxu0
      %v1238 = vadd.f32 0.0, %v1237
      %v1239 = vpop.f32.mrb[0].mxu0
      %v1240 = vpop.f32.mrb[0].mxu0
      %v1241 = vadd.f32 0.0, %v1240
      %v1242 = vpop.f32.mrb[0].mxu0
      %1243 = vmatprep.mubr.bf16.mxu0 0
      %1244 = vmatmul.mubr.bf16.gmra.mrb[0].mxu0 %v1046
      %v1245 = vpop.f32.mrb[0].mxu0
      %v1246 = vadd.f32 0.0, %v1245
      %v1247 = vpop.f32.mrb[0].mxu0
      %v1248 = vpop.f32.mrb[0].mxu0
      %v1249 = vadd.f32 0.0, %v1248
      %v1250 = vpop.f32.mrb[0].mxu0
      %1251 = vmatprep.mubr.bf16.mxu0 0
      %1252 = vmatmul.mubr.bf16.gmra.mrb[0].mxu0 %v1047
      %v1253 = vpop.f32.mrb[0].mxu0
      %v1254 = vadd.f32 0.0, %v1253
      %v1255 = vpop.f32.mrb[0].mxu0
      %v1256 = vpop.f32.mrb[0].mxu0
      %v1257 = vadd.f32 0.0, %v1256
      %v1258 = vpop.f32.mrb[0].mxu0
      %1259 = vmatprep.mubr.bf16.mxu0 0
      %1260 = vmatmul.mubr.bf16.gmra.mrb[0].mxu0 %v1048
      %v1261 = vpop.f32.mrb[0].mxu0
      %v1262 = vadd.f32 0.0, %v1261
      %v1263 = vpop.f32.mrb[0].mxu0
      %v1264 = vpop.f32.mrb[0].mxu0
      %v1265 = vadd.f32 0.0, %v1264
      %v1266 = vpop.f32.mrb[0].mxu0
      %1267 = vmatprep.mubr.bf16.mxu0 0
      %1268 = vmatmul.mubr.bf16.gmra.mrb[0].mxu0 %v1049
      %v1269 = vpop.f32.mrb[0].mxu0
      %v1270 = vadd.f32 0.0, %v1269
      %v1271 = vpop.f32.mrb[0].mxu0
      %v1272 = vpop.f32.mrb[0].mxu0
      %v1273 = vadd.f32 0.0, %v1272
      %v1274 = vpop.f32.mrb[0].mxu0
      %1275 = vdwg.mxu0
      %v1276 = vadd.f32 %v876, %v1150
      %v1277 = vadd.f32 %v879, %v1153
      %v1278 = vadd.f32 %v884, %v1158
      %v1279 = vadd.f32 %v887, %v1161
      %v1280 = vadd.f32 %v892, %v1166
      %v1281 = vadd.f32 %v895, %v1169
      %v1282 = vadd.f32 %v900, %v1174
      %v1283 = vadd.f32 %v903, %v1177
      %v1284 = vadd.f32 %v908, %v1182
      %v1285 = vadd.f32 %v911, %v1185
      %v1286 = vadd.f32 %v916, %v1190
      %v1287 = vadd.f32 %v919, %v1193
      %v1288 = vadd.f32 %v924, %v1198
      %v1289 = vadd.f32 %v927, %v1201
      %v1290 = vadd.f32 %v932, %v1206
      %v1291 = vadd.f32 %v935, %v1209
      %v1292 = vadd.f32 %v940, %v1214
      %v1293 = vadd.f32 %v943, %v1217
      %v1294 = vadd.f32 %v948, %v1222
      %v1295 = vadd.f32 %v951, %v1225
      %v1296 = vadd.f32 %v956, %v1230
      %v1297 = vadd.f32 %v959, %v1233
      %v1298 = vadd.f32 %v964, %v1238
      %v1299 = vadd.f32 %v967, %v1241
      %v1300 = vadd.f32 %v972, %v1246
      %v1301 = vadd.f32 %v975, %v1249
      %v1302 = vadd.f32 %v980, %v1254
      %v1303 = vadd.f32 %v983, %v1257
      %v1304 = vadd.f32 %v988, %v1262
      %v1305 = vadd.f32 %v991, %v1265
      %v1306 = vadd.f32 %v996, %v1270
      %v1307 = vadd.f32 %v999, %v1273
      %v1308 = vld [vmem:[%s422] sm:$0xff]
      %v1309 = vld [vmem:[%s422 + $0x8] sm:$0xff]
      %v1310 = vld [vmem:[%s422 + $0x18] sm:$0xff]
      %v1311 = vld [vmem:[%s422 + $0x20] sm:$0xff]
      %v1312 = vld [vmem:[%s422 + $0x30] sm:$0xff]
      %v1313 = vld [vmem:[%s422 + $0x38] sm:$0xff]
      %v1314 = vld [vmem:[%s422 + $0x48] sm:$0xff]
      %v1315 = vld [vmem:[%s422 + $0x50] sm:$0xff]
      %v1316 = vld [vmem:[%s422 + $0x60] sm:$0xff]
      %v1317 = vld [vmem:[%s422 + $0x68] sm:$0xff]
      %v1318 = vld [vmem:[%s422 + $0x78] sm:$0xff]
      %v1319 = vld [vmem:[%s422 + $0x80] sm:$0xff]
      %v1320 = vld [vmem:[%s422 + $0x90] sm:$0xff]
      %v1321 = vld [vmem:[%s422 + $0x98] sm:$0xff]
      %v1322 = vld [vmem:[%s422 + $0xa8] sm:$0xff]
      %v1323 = vld [vmem:[%s422 + $0xb0] sm:$0xff]
      %v1324 = vld [vmem:[%s422 + $0xc0] sm:$0xff]
      %v1325 = vld [vmem:[%s422 + $0xc8] sm:$0xff]
      %v1326 = vld [vmem:[%s422 + $0xd8] sm:$0xff]
      %v1327 = vld [vmem:[%s422 + $0xe0] sm:$0xff]
      %v1328 = vld [vmem:[%s422 + $0xf0] sm:$0xff]
      %v1329 = vld [vmem:[%s422 + $0xf8] sm:$0xff]
      %v1330 = vld [vmem:[%s422 + $0x108] sm:$0xff]
      %v1331 = vld [vmem:[%s422 + $0x110] sm:$0xff]
      %v1332 = vld [vmem:[%s422 + $0x120] sm:$0xff]
      %v1333 = vld [vmem:[%s422 + $0x128] sm:$0xff]
      %v1334 = vld [vmem:[%s422 + $0x138] sm:$0xff]
      %v1335 = vld [vmem:[%s422 + $0x140] sm:$0xff]
      %v1336 = vld [vmem:[%s422 + $0x150] sm:$0xff]
      %v1337 = vld [vmem:[%s422 + $0x158] sm:$0xff]
      %v1338 = vld [vmem:[%s422 + $0x168] sm:$0xff]
      %v1339 = vld [vmem:[%s422 + $0x170] sm:$0xff]
      %v1340 = vpack.c.bf16 %v1309, %v1308
      %v1341 = vpack.c.bf16 %v1311, %v1310
      %v1342 = vpack.c.bf16 %v1313, %v1312
      %v1343 = vpack.c.bf16 %v1315, %v1314
      %v1344 = vpack.c.bf16 %v1317, %v1316
      %v1345 = vpack.c.bf16 %v1319, %v1318
      %v1346 = vpack.c.bf16 %v1321, %v1320
      %v1347 = vpack.c.bf16 %v1323, %v1322
      %v1348 = vpack.c.bf16 %v1325, %v1324
      %v1349 = vpack.c.bf16 %v1327, %v1326
      %v1350 = vpack.c.bf16 %v1329, %v1328
      %v1351 = vpack.c.bf16 %v1331, %v1330
      %v1352 = vpack.c.bf16 %v1333, %v1332
      %v1353 = vpack.c.bf16 %v1335, %v1334
      %v1354 = vpack.c.bf16 %v1337, %v1336
      %v1355 = vpack.c.bf16 %v1339, %v1338
      %s1356 = scalar_lea.vmem %s3, 192
      %v1357 = vld [vmem:[%s1356] sm:$0xf]
      %v1358 = vld [vmem:[%s1356 + $0x4] sm:$0xf]
      %v1359 = vld [vmem:[%s1356 + $0x8] sm:$0xf]
      %v1360 = vld [vmem:[%s1356 + $0xc] sm:$0xf]
      %v1361 = vld [vmem:[%s1356 + $0x10] sm:$0xf]
      %v1362 = vld [vmem:[%s1356 + $0x14] sm:$0xf]
      %v1363 = vld [vmem:[%s1356 + $0x18] sm:$0xf]
      %v1364 = vld [vmem:[%s1356 + $0x1c] sm:$0xf]
      %v1365 = vld [vmem:[%s1356 + $0x20] sm:$0xf]
      %v1366 = vld [vmem:[%s1356 + $0x24] sm:$0xf]
      %v1367 = vld [vmem:[%s1356 + $0x28] sm:$0xf]
      %v1368 = vld [vmem:[%s1356 + $0x2c] sm:$0xf]
      %v1369 = vld [vmem:[%s1356 + $0x30] sm:$0xf]
      %v1370 = vld [vmem:[%s1356 + $0x34] sm:$0xf]
      %v1371 = vld [vmem:[%s1356 + $0x38] sm:$0xf]
      %v1372 = vld [vmem:[%s1356 + $0x3c] sm:$0xf]
      %v1389 = vunpack.c.l.b16 %v1357
      %v1390 = vunpack.c.l.b16 %v1358
      %v1391 = vunpack.c.l.b16 %v1359
      %v1392 = vunpack.c.l.b16 %v1360
      %v1393 = vunpack.c.l.b16 %v1361
      %v1394 = vunpack.c.l.b16 %v1362
      %v1395 = vunpack.c.l.b16 %v1363
      %v1396 = vunpack.c.l.b16 %v1364
      %v1397 = vunpack.c.l.b16 %v1365
      %v1398 = vunpack.c.l.b16 %v1366
      %v1399 = vunpack.c.l.b16 %v1367
      %v1400 = vunpack.c.l.b16 %v1368
      %v1401 = vunpack.c.l.b16 %v1369
      %v1402 = vunpack.c.l.b16 %v1370
      %v1403 = vunpack.c.l.b16 %v1371
      %v1404 = vunpack.c.l.b16 %v1372
      %v1405 = vpack.c.b16 %v1390, %v1389
      %v1406 = vpack.c.b16 %v1392, %v1391
      %v1407 = vpack.c.b16 %v1394, %v1393
      %v1408 = vpack.c.b16 %v1396, %v1395
      %v1409 = vpack.c.b16 %v1398, %v1397
      %v1410 = vpack.c.b16 %v1400, %v1399
      %v1411 = vpack.c.b16 %v1402, %v1401
      %v1412 = vpack.c.b16 %v1404, %v1403
      %1421 = vmatprep.subr.bf16.mxu0 0
      %1422 = vmatpush1.bf16.msra.mxu0 %v1405
      %1423 = vmatprep.subr.bf16.mxu0 0
      %1424 = vmatpush1.bf16.msra.mxu0 %v1406
      %1425 = vmatprep.subr.bf16.mxu0 0
      %1426 = vmatpush1.bf16.msra.mxu0 %v1407
      %1427 = vmatprep.subr.bf16.mxu0 0
      %1428 = vmatpush1.bf16.msra.mxu0 %v1408
      %1429 = vmatprep.subr.bf16.mxu0 0
      %1430 = vmatpush1.bf16.msra.mxu0 %v1409
      %1431 = vmatprep.subr.bf16.mxu0 0
      %1432 = vmatpush1.bf16.msra.mxu0 %v1410
      %1433 = vmatprep.subr.bf16.mxu0 0
      %1434 = vmatpush1.bf16.msra.mxu0 %v1411
      %1435 = vmatprep.subr.bf16.mxu0 0
      %1436 = vmatpush1.bf16.msra.mxu0 %v1412
      %1437 = vmatprep.subr.bf16.mxu0 0
      %1438 = vmatpush1.bf16.msra.mxu0 0
      %1439 = vmatprep.subr.bf16.mxu0 0
      %1440 = vmatpush1.bf16.msra.mxu0 0
      %1441 = vmatprep.subr.bf16.mxu0 0
      %1442 = vmatpush1.bf16.msra.mxu0 0
      %1443 = vmatprep.subr.bf16.mxu0 0
      %1444 = vmatpush1.bf16.msra.mxu0 0
      %1445 = vmatprep.subr.bf16.mxu0 0
      %1446 = vmatpush1.bf16.msra.mxu0 0
      %1447 = vmatprep.subr.bf16.mxu0 0
      %1448 = vmatpush1.bf16.msra.mxu0 0
      %1449 = vmatprep.subr.bf16.mxu0 0
      %1450 = vmatpush1.bf16.msra.mxu0 0
      %1451 = vmatprep.subr.bf16.mxu0 0
      %1452 = vmatpush1.bf16.msra.mxu0 0
      %1453 = vmatprep.mubr.bf16.mxu0 0
      %1454 = vmatmul.mubr.bf16.gmra.mrb[0].mxu0 %v1340
      %v1455 = vpop.f32.mrb[0].mxu0
      %v1456 = vadd.f32 0.0, %v1455
      %v1457 = vpop.f32.mrb[0].mxu0
      %v1458 = vpop.f32.mrb[0].mxu0
      %v1459 = vadd.f32 0.0, %v1458
      %v1460 = vpop.f32.mrb[0].mxu0
      %1461 = vmatprep.mubr.bf16.mxu0 0
      %1462 = vmatmul.mubr.bf16.gmra.mrb[0].mxu0 %v1341
      %v1463 = vpop.f32.mrb[0].mxu0
      %v1464 = vadd.f32 0.0, %v1463
      %v1465 = vpop.f32.mrb[0].mxu0
      %v1466 = vpop.f32.mrb[0].mxu0
      %v1467 = vadd.f32 0.0, %v1466
      %v1468 = vpop.f32.mrb[0].mxu0
      %1469 = vmatprep.mubr.bf16.mxu0 0
      %1470 = vmatmul.mubr.bf16.gmra.mrb[0].mxu0 %v1342
      %v1471 = vpop.f32.mrb[0].mxu0
      %v1472 = vadd.f32 0.0, %v1471
      %v1473 = vpop.f32.mrb[0].mxu0
      %v1474 = vpop.f32.mrb[0].mxu0
      %v1475 = vadd.f32 0.0, %v1474
      %v1476 = vpop.f32.mrb[0].mxu0
      %1477 = vmatprep.mubr.bf16.mxu0 0
      %1478 = vmatmul.mubr.bf16.gmra.mrb[0].mxu0 %v1343
      %v1479 = vpop.f32.mrb[0].mxu0
      %v1480 = vadd.f32 0.0, %v1479
      %v1481 = vpop.f32.mrb[0].mxu0
      %v1482 = vpop.f32.mrb[0].mxu0
      %v1483 = vadd.f32 0.0, %v1482
      %v1484 = vpop.f32.mrb[0].mxu0
      %1485 = vmatprep.mubr.bf16.mxu0 0
      %1486 = vmatmul.mubr.bf16.gmra.mrb[0].mxu0 %v1344
      %v1487 = vpop.f32.mrb[0].mxu0
      %v1488 = vadd.f32 0.0, %v1487
      %v1489 = vpop.f32.mrb[0].mxu0
      %v1490 = vpop.f32.mrb[0].mxu0
      %v1491 = vadd.f32 0.0, %v1490
      %v1492 = vpop.f32.mrb[0].mxu0
      %1493 = vmatprep.mubr.bf16.mxu0 0
      %1494 = vmatmul.mubr.bf16.gmra.mrb[0].mxu0 %v1345
      %v1495 = vpop.f32.mrb[0].mxu0
      %v1496 = vadd.f32 0.0, %v1495
      %v1497 = vpop.f32.mrb[0].mxu0
      %v1498 = vpop.f32.mrb[0].mxu0
      %v1499 = vadd.f32 0.0, %v1498
      %v1500 = vpop.f32.mrb[0].mxu0
      %1501 = vmatprep.mubr.bf16.mxu0 0
      %1502 = vmatmul.mubr.bf16.gmra.mrb[0].mxu0 %v1346
      %v1503 = vpop.f32.mrb[0].mxu0
      %v1504 = vadd.f32 0.0, %v1503
      %v1505 = vpop.f32.mrb[0].mxu0
      %v1506 = vpop.f32.mrb[0].mxu0
      %v1507 = vadd.f32 0.0, %v1506
      %v1508 = vpop.f32.mrb[0].mxu0
      %1509 = vmatprep.mubr.bf16.mxu0 0
      %1510 = vmatmul.mubr.bf16.gmra.mrb[0].mxu0 %v1347
      %v1511 = vpop.f32.mrb[0].mxu0
      %v1512 = vadd.f32 0.0, %v1511
      %v1513 = vpop.f32.mrb[0].mxu0
      %v1514 = vpop.f32.mrb[0].mxu0
      %v1515 = vadd.f32 0.0, %v1514
      %v1516 = vpop.f32.mrb[0].mxu0
      %1517 = vmatprep.mubr.bf16.mxu0 0
      %1518 = vmatmul.mubr.bf16.gmra.mrb[0].mxu0 %v1348
      %v1519 = vpop.f32.mrb[0].mxu0
      %v1520 = vadd.f32 0.0, %v1519
      %v1521 = vpop.f32.mrb[0].mxu0
      %v1522 = vpop.f32.mrb[0].mxu0
      %v1523 = vadd.f32 0.0, %v1522
      %v1524 = vpop.f32.mrb[0].mxu0
      %1525 = vmatprep.mubr.bf16.mxu0 0
      %1526 = vmatmul.mubr.bf16.gmra.mrb[0].mxu0 %v1349
      %v1527 = vpop.f32.mrb[0].mxu0
      %v1528 = vadd.f32 0.0, %v1527
      %v1529 = vpop.f32.mrb[0].mxu0
      %v1530 = vpop.f32.mrb[0].mxu0
      %v1531 = vadd.f32 0.0, %v1530
      %v1532 = vpop.f32.mrb[0].mxu0
      %1533 = vmatprep.mubr.bf16.mxu0 0
      %1534 = vmatmul.mubr.bf16.gmra.mrb[0].mxu0 %v1350
      %v1535 = vpop.f32.mrb[0].mxu0
      %v1536 = vadd.f32 0.0, %v1535
      %v1537 = vpop.f32.mrb[0].mxu0
      %v1538 = vpop.f32.mrb[0].mxu0
      %v1539 = vadd.f32 0.0, %v1538
      %v1540 = vpop.f32.mrb[0].mxu0
      %1541 = vmatprep.mubr.bf16.mxu0 0
      %1542 = vmatmul.mubr.bf16.gmra.mrb[0].mxu0 %v1351
      %v1543 = vpop.f32.mrb[0].mxu0
      %v1544 = vadd.f32 0.0, %v1543
      %v1545 = vpop.f32.mrb[0].mxu0
      %v1546 = vpop.f32.mrb[0].mxu0
      %v1547 = vadd.f32 0.0, %v1546
      %v1548 = vpop.f32.mrb[0].mxu0
      %1549 = vmatprep.mubr.bf16.mxu0 0
      %1550 = vmatmul.mubr.bf16.gmra.mrb[0].mxu0 %v1352
      %v1551 = vpop.f32.mrb[0].mxu0
      %v1552 = vadd.f32 0.0, %v1551
      %v1553 = vpop.f32.mrb[0].mxu0
      %v1554 = vpop.f32.mrb[0].mxu0
      %v1555 = vadd.f32 0.0, %v1554
      %v1556 = vpop.f32.mrb[0].mxu0
      %1557 = vmatprep.mubr.bf16.mxu0 0
      %1558 = vmatmul.mubr.bf16.gmra.mrb[0].mxu0 %v1353
      %v1559 = vpop.f32.mrb[0].mxu0
      %v1560 = vadd.f32 0.0, %v1559
      %v1561 = vpop.f32.mrb[0].mxu0
      %v1562 = vpop.f32.mrb[0].mxu0
      %v1563 = vadd.f32 0.0, %v1562
      %v1564 = vpop.f32.mrb[0].mxu0
      %1565 = vmatprep.mubr.bf16.mxu0 0
      %1566 = vmatmul.mubr.bf16.gmra.mrb[0].mxu0 %v1354
      %v1567 = vpop.f32.mrb[0].mxu0
      %v1568 = vadd.f32 0.0, %v1567
      %v1569 = vpop.f32.mrb[0].mxu0
      %v1570 = vpop.f32.mrb[0].mxu0
      %v1571 = vadd.f32 0.0, %v1570
      %v1572 = vpop.f32.mrb[0].mxu0
      %1573 = vmatprep.mubr.bf16.mxu0 0
      %1574 = vmatmul.mubr.bf16.gmra.mrb[0].mxu0 %v1355
      %v1575 = vpop.f32.mrb[0].mxu0
      %v1576 = vadd.f32 0.0, %v1575
      %v1577 = vpop.f32.mrb[0].mxu0
      %v1578 = vpop.f32.mrb[0].mxu0
      %v1579 = vadd.f32 0.0, %v1578
      %v1580 = vpop.f32.mrb[0].mxu0
      %1581 = vdwg.mxu0
      %v1582 = vadd.f32 %v1276, %v1456
      %v1583 = vadd.f32 %v1277, %v1459
      %v1584 = vadd.f32 %v1278, %v1464
      %v1585 = vadd.f32 %v1279, %v1467
      %v1586 = vadd.f32 %v1280, %v1472
      %v1587 = vadd.f32 %v1281, %v1475
      %v1588 = vadd.f32 %v1282, %v1480
      %v1589 = vadd.f32 %v1283, %v1483
      %v1590 = vadd.f32 %v1284, %v1488
      %v1591 = vadd.f32 %v1285, %v1491
      %v1592 = vadd.f32 %v1286, %v1496
      %v1593 = vadd.f32 %v1287, %v1499
      %v1594 = vadd.f32 %v1288, %v1504
      %v1595 = vadd.f32 %v1289, %v1507
      %v1596 = vadd.f32 %v1290, %v1512
      %v1597 = vadd.f32 %v1291, %v1515
      %v1598 = vadd.f32 %v1292, %v1520
      %v1599 = vadd.f32 %v1293, %v1523
      %v1600 = vadd.f32 %v1294, %v1528
      %v1601 = vadd.f32 %v1295, %v1531
      %v1602 = vadd.f32 %v1296, %v1536
      %v1603 = vadd.f32 %v1297, %v1539
      %v1604 = vadd.f32 %v1298, %v1544
      %v1605 = vadd.f32 %v1299, %v1547
      %v1606 = vadd.f32 %v1300, %v1552
      %v1607 = vadd.f32 %v1301, %v1555
      %v1608 = vadd.f32 %v1302, %v1560
      %v1609 = vadd.f32 %v1303, %v1563
      %v1610 = vadd.f32 %v1304, %v1568
      %v1611 = vadd.f32 %v1305, %v1571
      %v1612 = vadd.f32 %v1306, %v1576
      %v1613 = vadd.f32 %v1307, %v1579
      %v1614 = vld [vmem:[%s422 + $0x1] sm:$0xff]
      %v1615 = vld [vmem:[%s422 + $0x9] sm:$0xff]
      %v1616 = vld [vmem:[%s422 + $0x19] sm:$0xff]
      %v1617 = vld [vmem:[%s422 + $0x21] sm:$0xff]
      %v1618 = vld [vmem:[%s422 + $0x31] sm:$0xff]
      %v1619 = vld [vmem:[%s422 + $0x39] sm:$0xff]
      %v1620 = vld [vmem:[%s422 + $0x49] sm:$0xff]
      %v1621 = vld [vmem:[%s422 + $0x51] sm:$0xff]
      %v1622 = vld [vmem:[%s422 + $0x61] sm:$0xff]
      %v1623 = vld [vmem:[%s422 + $0x69] sm:$0xff]
      %v1624 = vld [vmem:[%s422 + $0x79] sm:$0xff]
      %v1625 = vld [vmem:[%s422 + $0x81] sm:$0xff]
      %v1626 = vld [vmem:[%s422 + $0x91] sm:$0xff]
      %v1627 = vld [vmem:[%s422 + $0x99] sm:$0xff]
      %v1628 = vld [vmem:[%s422 + $0xa9] sm:$0xff]
      %v1629 = vld [vmem:[%s422 + $0xb1] sm:$0xff]
      %v1630 = vld [vmem:[%s422 + $0xc1] sm:$0xff]
      %v1631 = vld [vmem:[%s422 + $0xc9] sm:$0xff]
      %v1632 = vld [vmem:[%s422 + $0xd9] sm:$0xff]
      %v1633 = vld [vmem:[%s422 + $0xe1] sm:$0xff]
      %v1634 = vld [vmem:[%s422 + $0xf1] sm:$0xff]
      %v1635 = vld [vmem:[%s422 + $0xf9] sm:$0xff]
      %v1636 = vld [vmem:[%s422 + $0x109] sm:$0xff]
      %v1637 = vld [vmem:[%s422 + $0x111] sm:$0xff]
      %v1638 = vld [vmem:[%s422 + $0x121] sm:$0xff]
      %v1639 = vld [vmem:[%s422 + $0x129] sm:$0xff]
      %v1640 = vld [vmem:[%s422 + $0x139] sm:$0xff]
      %v1641 = vld [vmem:[%s422 + $0x141] sm:$0xff]
      %v1642 = vld [vmem:[%s422 + $0x151] sm:$0xff]
      %v1643 = vld [vmem:[%s422 + $0x159] sm:$0xff]
      %v1644 = vld [vmem:[%s422 + $0x169] sm:$0xff]
      %v1645 = vld [vmem:[%s422 + $0x171] sm:$0xff]
      %v1646 = vpack.c.bf16 %v1615, %v1614
      %v1647 = vpack.c.bf16 %v1617, %v1616
      %v1648 = vpack.c.bf16 %v1619, %v1618
      %v1649 = vpack.c.bf16 %v1621, %v1620
      %v1650 = vpack.c.bf16 %v1623, %v1622
      %v1651 = vpack.c.bf16 %v1625, %v1624
      %v1652 = vpack.c.bf16 %v1627, %v1626
      %v1653 = vpack.c.bf16 %v1629, %v1628
      %v1654 = vpack.c.bf16 %v1631, %v1630
      %v1655 = vpack.c.bf16 %v1633, %v1632
      %v1656 = vpack.c.bf16 %v1635, %v1634
      %v1657 = vpack.c.bf16 %v1637, %v1636
      %v1658 = vpack.c.bf16 %v1639, %v1638
      %v1659 = vpack.c.bf16 %v1641, %v1640
      %v1660 = vpack.c.bf16 %v1643, %v1642
      %v1661 = vpack.c.bf16 %v1645, %v1644
      %s1662 = scalar_lea.vmem %s3, 256
      %v1663 = vld [vmem:[%s1662] sm:$0xf]
      %v1664 = vld [vmem:[%s1662 + $0x4] sm:$0xf]
      %v1665 = vld [vmem:[%s1662 + $0x8] sm:$0xf]
      %v1666 = vld [vmem:[%s1662 + $0xc] sm:$0xf]
      %v1667 = vld [vmem:[%s1662 + $0x10] sm:$0xf]
      %v1668 = vld [vmem:[%s1662 + $0x14] sm:$0xf]
      %v1669 = vld [vmem:[%s1662 + $0x18] sm:$0xf]
      %v1670 = vld [vmem:[%s1662 + $0x1c] sm:$0xf]
      %v1671 = vld [vmem:[%s1662 + $0x20] sm:$0xf]
      %v1672 = vld [vmem:[%s1662 + $0x24] sm:$0xf]
      %v1673 = vld [vmem:[%s1662 + $0x28] sm:$0xf]
      %v1674 = vld [vmem:[%s1662 + $0x2c] sm:$0xf]
      %v1675 = vld [vmem:[%s1662 + $0x30] sm:$0xf]
      %v1676 = vld [vmem:[%s1662 + $0x34] sm:$0xf]
      %v1677 = vld [vmem:[%s1662 + $0x38] sm:$0xf]
      %v1678 = vld [vmem:[%s1662 + $0x3c] sm:$0xf]
      %v1695 = vunpack.c.l.b16 %v1663
      %v1696 = vunpack.c.l.b16 %v1664
      %v1697 = vunpack.c.l.b16 %v1665
      %v1698 = vunpack.c.l.b16 %v1666
      %v1699 = vunpack.c.l.b16 %v1667
      %v1700 = vunpack.c.l.b16 %v1668
      %v1701 = vunpack.c.l.b16 %v1669
      %v1702 = vunpack.c.l.b16 %v1670
      %v1703 = vunpack.c.l.b16 %v1671
      %v1704 = vunpack.c.l.b16 %v1672
      %v1705 = vunpack.c.l.b16 %v1673
      %v1706 = vunpack.c.l.b16 %v1674
      %v1707 = vunpack.c.l.b16 %v1675
      %v1708 = vunpack.c.l.b16 %v1676
      %v1709 = vunpack.c.l.b16 %v1677
      %v1710 = vunpack.c.l.b16 %v1678
      %v1711 = vpack.c.b16 %v1696, %v1695
      %v1712 = vpack.c.b16 %v1698, %v1697
      %v1713 = vpack.c.b16 %v1700, %v1699
      %v1714 = vpack.c.b16 %v1702, %v1701
      %v1715 = vpack.c.b16 %v1704, %v1703
      %v1716 = vpack.c.b16 %v1706, %v1705
      %v1717 = vpack.c.b16 %v1708, %v1707
      %v1718 = vpack.c.b16 %v1710, %v1709
      %1727 = vmatprep.subr.bf16.mxu0 0
      %1728 = vmatpush1.bf16.msra.mxu0 %v1711
      %1729 = vmatprep.subr.bf16.mxu0 0
      %1730 = vmatpush1.bf16.msra.mxu0 %v1712
      %1731 = vmatprep.subr.bf16.mxu0 0
      %1732 = vmatpush1.bf16.msra.mxu0 %v1713
      %1733 = vmatprep.subr.bf16.mxu0 0
      %1734 = vmatpush1.bf16.msra.mxu0 %v1714
      %1735 = vmatprep.subr.bf16.mxu0 0
      %1736 = vmatpush1.bf16.msra.mxu0 %v1715
      %1737 = vmatprep.subr.bf16.mxu0 0
      %1738 = vmatpush1.bf16.msra.mxu0 %v1716
      %1739 = vmatprep.subr.bf16.mxu0 0
      %1740 = vmatpush1.bf16.msra.mxu0 %v1717
      %1741 = vmatprep.subr.bf16.mxu0 0
      %1742 = vmatpush1.bf16.msra.mxu0 %v1718
      %1743 = vmatprep.subr.bf16.mxu0 0
      %1744 = vmatpush1.bf16.msra.mxu0 0
      %1745 = vmatprep.subr.bf16.mxu0 0
      %1746 = vmatpush1.bf16.msra.mxu0 0
      %1747 = vmatprep.subr.bf16.mxu0 0
      %1748 = vmatpush1.bf16.msra.mxu0 0
      %1749 = vmatprep.subr.bf16.mxu0 0
      %1750 = vmatpush1.bf16.msra.mxu0 0
      %1751 = vmatprep.subr.bf16.mxu0 0
      %1752 = vmatpush1.bf16.msra.mxu0 0
      %1753 = vmatprep.subr.bf16.mxu0 0
      %1754 = vmatpush1.bf16.msra.mxu0 0
      %1755 = vmatprep.subr.bf16.mxu0 0
      %1756 = vmatpush1.bf16.msra.mxu0 0
      %1757 = vmatprep.subr.bf16.mxu0 0
      %1758 = vmatpush1.bf16.msra.mxu0 0
      %1759 = vmatprep.mubr.bf16.mxu0 0
      %1760 = vmatmul.mubr.bf16.gmra.mrb[0].mxu0 %v1646
      %v1761 = vpop.f32.mrb[0].mxu0
      %v1762 = vadd.f32 0.0, %v1761
      %v1763 = vpop.f32.mrb[0].mxu0
      %v1764 = vpop.f32.mrb[0].mxu0
      %v1765 = vadd.f32 0.0, %v1764
      %v1766 = vpop.f32.mrb[0].mxu0
      %1767 = vmatprep.mubr.bf16.mxu0 0
      %1768 = vmatmul.mubr.bf16.gmra.mrb[0].mxu0 %v1647
      %v1769 = vpop.f32.mrb[0].mxu0
      %v1770 = vadd.f32 0.0, %v1769
      %v1771 = vpop.f32.mrb[0].mxu0
      %v1772 = vpop.f32.mrb[0].mxu0
      %v1773 = vadd.f32 0.0, %v1772
      %v1774 = vpop.f32.mrb[0].mxu0
      %1775 = vmatprep.mubr.bf16.mxu0 0
      %1776 = vmatmul.mubr.bf16.gmra.mrb[0].mxu0 %v1648
      %v1777 = vpop.f32.mrb[0].mxu0
      %v1778 = vadd.f32 0.0, %v1777
      %v1779 = vpop.f32.mrb[0].mxu0
      %v1780 = vpop.f32.mrb[0].mxu0
      %v1781 = vadd.f32 0.0, %v1780
      %v1782 = vpop.f32.mrb[0].mxu0
      %1783 = vmatprep.mubr.bf16.mxu0 0
      %1784 = vmatmul.mubr.bf16.gmra.mrb[0].mxu0 %v1649
      %v1785 = vpop.f32.mrb[0].mxu0
      %v1786 = vadd.f32 0.0, %v1785
      %v1787 = vpop.f32.mrb[0].mxu0
      %v1788 = vpop.f32.mrb[0].mxu0
      %v1789 = vadd.f32 0.0, %v1788
      %v1790 = vpop.f32.mrb[0].mxu0
      %1791 = vmatprep.mubr.bf16.mxu0 0
      %1792 = vmatmul.mubr.bf16.gmra.mrb[0].mxu0 %v1650
      %v1793 = vpop.f32.mrb[0].mxu0
      %v1794 = vadd.f32 0.0, %v1793
      %v1795 = vpop.f32.mrb[0].mxu0
      %v1796 = vpop.f32.mrb[0].mxu0
      %v1797 = vadd.f32 0.0, %v1796
      %v1798 = vpop.f32.mrb[0].mxu0
      %1799 = vmatprep.mubr.bf16.mxu0 0
      %1800 = vmatmul.mubr.bf16.gmra.mrb[0].mxu0 %v1651
      %v1801 = vpop.f32.mrb[0].mxu0
      %v1802 = vadd.f32 0.0, %v1801
      %v1803 = vpop.f32.mrb[0].mxu0
      %v1804 = vpop.f32.mrb[0].mxu0
      %v1805 = vadd.f32 0.0, %v1804
      %v1806 = vpop.f32.mrb[0].mxu0
      %1807 = vmatprep.mubr.bf16.mxu0 0
      %1808 = vmatmul.mubr.bf16.gmra.mrb[0].mxu0 %v1652
      %v1809 = vpop.f32.mrb[0].mxu0
      %v1810 = vadd.f32 0.0, %v1809
      %v1811 = vpop.f32.mrb[0].mxu0
      %v1812 = vpop.f32.mrb[0].mxu0
      %v1813 = vadd.f32 0.0, %v1812
      %v1814 = vpop.f32.mrb[0].mxu0
      %1815 = vmatprep.mubr.bf16.mxu0 0
      %1816 = vmatmul.mubr.bf16.gmra.mrb[0].mxu0 %v1653
      %v1817 = vpop.f32.mrb[0].mxu0
      %v1818 = vadd.f32 0.0, %v1817
      %v1819 = vpop.f32.mrb[0].mxu0
      %v1820 = vpop.f32.mrb[0].mxu0
      %v1821 = vadd.f32 0.0, %v1820
      %v1822 = vpop.f32.mrb[0].mxu0
      %1823 = vmatprep.mubr.bf16.mxu0 0
      %1824 = vmatmul.mubr.bf16.gmra.mrb[0].mxu0 %v1654
      %v1825 = vpop.f32.mrb[0].mxu0
      %v1826 = vadd.f32 0.0, %v1825
      %v1827 = vpop.f32.mrb[0].mxu0
      %v1828 = vpop.f32.mrb[0].mxu0
      %v1829 = vadd.f32 0.0, %v1828
      %v1830 = vpop.f32.mrb[0].mxu0
      %1831 = vmatprep.mubr.bf16.mxu0 0
      %1832 = vmatmul.mubr.bf16.gmra.mrb[0].mxu0 %v1655
      %v1833 = vpop.f32.mrb[0].mxu0
      %v1834 = vadd.f32 0.0, %v1833
      %v1835 = vpop.f32.mrb[0].mxu0
      %v1836 = vpop.f32.mrb[0].mxu0
      %v1837 = vadd.f32 0.0, %v1836
      %v1838 = vpop.f32.mrb[0].mxu0
      %1839 = vmatprep.mubr.bf16.mxu0 0
      %1840 = vmatmul.mubr.bf16.gmra.mrb[0].mxu0 %v1656
      %v1841 = vpop.f32.mrb[0].mxu0
      %v1842 = vadd.f32 0.0, %v1841
      %v1843 = vpop.f32.mrb[0].mxu0
      %v1844 = vpop.f32.mrb[0].mxu0
      %v1845 = vadd.f32 0.0, %v1844
      %v1846 = vpop.f32.mrb[0].mxu0
      %1847 = vmatprep.mubr.bf16.mxu0 0
      %1848 = vmatmul.mubr.bf16.gmra.mrb[0].mxu0 %v1657
      %v1849 = vpop.f32.mrb[0].mxu0
      %v1850 = vadd.f32 0.0, %v1849
      %v1851 = vpop.f32.mrb[0].mxu0
      %v1852 = vpop.f32.mrb[0].mxu0
      %v1853 = vadd.f32 0.0, %v1852
      %v1854 = vpop.f32.mrb[0].mxu0
      %1855 = vmatprep.mubr.bf16.mxu0 0
      %1856 = vmatmul.mubr.bf16.gmra.mrb[0].mxu0 %v1658
      %v1857 = vpop.f32.mrb[0].mxu0
      %v1858 = vadd.f32 0.0, %v1857
      %v1859 = vpop.f32.mrb[0].mxu0
      %v1860 = vpop.f32.mrb[0].mxu0
      %v1861 = vadd.f32 0.0, %v1860
      %v1862 = vpop.f32.mrb[0].mxu0
      %1863 = vmatprep.mubr.bf16.mxu0 0
      %1864 = vmatmul.mubr.bf16.gmra.mrb[0].mxu0 %v1659
      %v1865 = vpop.f32.mrb[0].mxu0
      %v1866 = vadd.f32 0.0, %v1865
      %v1867 = vpop.f32.mrb[0].mxu0
      %v1868 = vpop.f32.mrb[0].mxu0
      %v1869 = vadd.f32 0.0, %v1868
      %v1870 = vpop.f32.mrb[0].mxu0
      %1871 = vmatprep.mubr.bf16.mxu0 0
      %1872 = vmatmul.mubr.bf16.gmra.mrb[0].mxu0 %v1660
      %v1873 = vpop.f32.mrb[0].mxu0
      %v1874 = vadd.f32 0.0, %v1873
      %v1875 = vpop.f32.mrb[0].mxu0
      %v1876 = vpop.f32.mrb[0].mxu0
      %v1877 = vadd.f32 0.0, %v1876
      %v1878 = vpop.f32.mrb[0].mxu0
      %1879 = vmatprep.mubr.bf16.mxu0 0
      %1880 = vmatmul.mubr.bf16.gmra.mrb[0].mxu0 %v1661
      %v1881 = vpop.f32.mrb[0].mxu0
      %v1882 = vadd.f32 0.0, %v1881
      %v1883 = vpop.f32.mrb[0].mxu0
      %v1884 = vpop.f32.mrb[0].mxu0
      %v1885 = vadd.f32 0.0, %v1884
      %v1886 = vpop.f32.mrb[0].mxu0
      %1887 = vdwg.mxu0
      %v1888 = vadd.f32 %v1582, %v1762
      %v1889 = vadd.f32 %v1583, %v1765
      %v1890 = vadd.f32 %v1584, %v1770
      %v1891 = vadd.f32 %v1585, %v1773
      %v1892 = vadd.f32 %v1586, %v1778
      %v1893 = vadd.f32 %v1587, %v1781
      %v1894 = vadd.f32 %v1588, %v1786
      %v1895 = vadd.f32 %v1589, %v1789
      %v1896 = vadd.f32 %v1590, %v1794
      %v1897 = vadd.f32 %v1591, %v1797
      %v1898 = vadd.f32 %v1592, %v1802
      %v1899 = vadd.f32 %v1593, %v1805
      %v1900 = vadd.f32 %v1594, %v1810
      %v1901 = vadd.f32 %v1595, %v1813
      %v1902 = vadd.f32 %v1596, %v1818
      %v1903 = vadd.f32 %v1597, %v1821
      %v1904 = vadd.f32 %v1598, %v1826
      %v1905 = vadd.f32 %v1599, %v1829
      %v1906 = vadd.f32 %v1600, %v1834
      %v1907 = vadd.f32 %v1601, %v1837
      %v1908 = vadd.f32 %v1602, %v1842
      %v1909 = vadd.f32 %v1603, %v1845
      %v1910 = vadd.f32 %v1604, %v1850
      %v1911 = vadd.f32 %v1605, %v1853
      %v1912 = vadd.f32 %v1606, %v1858
      %v1913 = vadd.f32 %v1607, %v1861
      %v1914 = vadd.f32 %v1608, %v1866
      %v1915 = vadd.f32 %v1609, %v1869
      %v1916 = vadd.f32 %v1610, %v1874
      %v1917 = vadd.f32 %v1611, %v1877
      %v1918 = vadd.f32 %v1612, %v1882
      %v1919 = vadd.f32 %v1613, %v1885
      %v1920 = vld [vmem:[%s422 + $0x2] sm:$0xff]
      %v1921 = vld [vmem:[%s422 + $0xa] sm:$0xff]
      %v1922 = vld [vmem:[%s422 + $0x1a] sm:$0xff]
      %v1923 = vld [vmem:[%s422 + $0x22] sm:$0xff]
      %v1924 = vld [vmem:[%s422 + $0x32] sm:$0xff]
      %v1925 = vld [vmem:[%s422 + $0x3a] sm:$0xff]
      %v1926 = vld [vmem:[%s422 + $0x4a] sm:$0xff]
      %v1927 = vld [vmem:[%s422 + $0x52] sm:$0xff]
      %v1928 = vld [vmem:[%s422 + $0x62] sm:$0xff]
      %v1929 = vld [vmem:[%s422 + $0x6a] sm:$0xff]
      %v1930 = vld [vmem:[%s422 + $0x7a] sm:$0xff]
      %v1931 = vld [vmem:[%s422 + $0x82] sm:$0xff]
      %v1932 = vld [vmem:[%s422 + $0x92] sm:$0xff]
      %v1933 = vld [vmem:[%s422 + $0x9a] sm:$0xff]
      %v1934 = vld [vmem:[%s422 + $0xaa] sm:$0xff]
      %v1935 = vld [vmem:[%s422 + $0xb2] sm:$0xff]
      %v1936 = vld [vmem:[%s422 + $0xc2] sm:$0xff]
      %v1937 = vld [vmem:[%s422 + $0xca] sm:$0xff]
      %v1938 = vld [vmem:[%s422 + $0xda] sm:$0xff]
      %v1939 = vld [vmem:[%s422 + $0xe2] sm:$0xff]
      %v1940 = vld [vmem:[%s422 + $0xf2] sm:$0xff]
      %v1941 = vld [vmem:[%s422 + $0xfa] sm:$0xff]
      %v1942 = vld [vmem:[%s422 + $0x10a] sm:$0xff]
      %v1943 = vld [vmem:[%s422 + $0x112] sm:$0xff]
      %v1944 = vld [vmem:[%s422 + $0x122] sm:$0xff]
      %v1945 = vld [vmem:[%s422 + $0x12a] sm:$0xff]
      %v1946 = vld [vmem:[%s422 + $0x13a] sm:$0xff]
      %v1947 = vld [vmem:[%s422 + $0x142] sm:$0xff]
      %v1948 = vld [vmem:[%s422 + $0x152] sm:$0xff]
      %v1949 = vld [vmem:[%s422 + $0x15a] sm:$0xff]
      %v1950 = vld [vmem:[%s422 + $0x16a] sm:$0xff]
      %v1951 = vld [vmem:[%s422 + $0x172] sm:$0xff]
      %v1952 = vpack.c.bf16 %v1921, %v1920
      %v1953 = vpack.c.bf16 %v1923, %v1922
      %v1954 = vpack.c.bf16 %v1925, %v1924
      %v1955 = vpack.c.bf16 %v1927, %v1926
      %v1956 = vpack.c.bf16 %v1929, %v1928
      %v1957 = vpack.c.bf16 %v1931, %v1930
      %v1958 = vpack.c.bf16 %v1933, %v1932
      %v1959 = vpack.c.bf16 %v1935, %v1934
      %v1960 = vpack.c.bf16 %v1937, %v1936
      %v1961 = vpack.c.bf16 %v1939, %v1938
      %v1962 = vpack.c.bf16 %v1941, %v1940
      %v1963 = vpack.c.bf16 %v1943, %v1942
      %v1964 = vpack.c.bf16 %v1945, %v1944
      %v1965 = vpack.c.bf16 %v1947, %v1946
      %v1966 = vpack.c.bf16 %v1949, %v1948
      %v1967 = vpack.c.bf16 %v1951, %v1950
      %s1968 = scalar_lea.vmem %s3, 320
      %v1969 = vld [vmem:[%s1968] sm:$0xf]
      %v1970 = vld [vmem:[%s1968 + $0x4] sm:$0xf]
      %v1971 = vld [vmem:[%s1968 + $0x8] sm:$0xf]
      %v1972 = vld [vmem:[%s1968 + $0xc] sm:$0xf]
      %v1973 = vld [vmem:[%s1968 + $0x10] sm:$0xf]
      %v1974 = vld [vmem:[%s1968 + $0x14] sm:$0xf]
      %v1975 = vld [vmem:[%s1968 + $0x18] sm:$0xf]
      %v1976 = vld [vmem:[%s1968 + $0x1c] sm:$0xf]
      %v1977 = vld [vmem:[%s1968 + $0x20] sm:$0xf]
      %v1978 = vld [vmem:[%s1968 + $0x24] sm:$0xf]
      %v1979 = vld [vmem:[%s1968 + $0x28] sm:$0xf]
      %v1980 = vld [vmem:[%s1968 + $0x2c] sm:$0xf]
      %v1981 = vld [vmem:[%s1968 + $0x30] sm:$0xf]
      %v1982 = vld [vmem:[%s1968 + $0x34] sm:$0xf]
      %v1983 = vld [vmem:[%s1968 + $0x38] sm:$0xf]
      %v1984 = vld [vmem:[%s1968 + $0x3c] sm:$0xf]
      %v2001 = vunpack.c.l.b16 %v1969
      %v2002 = vunpack.c.l.b16 %v1970
      %v2003 = vunpack.c.l.b16 %v1971
      %v2004 = vunpack.c.l.b16 %v1972
      %v2005 = vunpack.c.l.b16 %v1973
      %v2006 = vunpack.c.l.b16 %v1974
      %v2007 = vunpack.c.l.b16 %v1975
      %v2008 = vunpack.c.l.b16 %v1976
      %v2009 = vunpack.c.l.b16 %v1977
      %v2010 = vunpack.c.l.b16 %v1978
      %v2011 = vunpack.c.l.b16 %v1979
      %v2012 = vunpack.c.l.b16 %v1980
      %v2013 = vunpack.c.l.b16 %v1981
      %v2014 = vunpack.c.l.b16 %v1982
      %v2015 = vunpack.c.l.b16 %v1983
      %v2016 = vunpack.c.l.b16 %v1984
      %v2017 = vpack.c.b16 %v2002, %v2001
      %v2018 = vpack.c.b16 %v2004, %v2003
      %v2019 = vpack.c.b16 %v2006, %v2005
      %v2020 = vpack.c.b16 %v2008, %v2007
      %v2021 = vpack.c.b16 %v2010, %v2009
      %v2022 = vpack.c.b16 %v2012, %v2011
      %v2023 = vpack.c.b16 %v2014, %v2013
      %v2024 = vpack.c.b16 %v2016, %v2015
      %2033 = vmatprep.subr.bf16.mxu0 0
      %2034 = vmatpush1.bf16.msra.mxu0 %v2017
      %2035 = vmatprep.subr.bf16.mxu0 0
      %2036 = vmatpush1.bf16.msra.mxu0 %v2018
      %2037 = vmatprep.subr.bf16.mxu0 0
      %2038 = vmatpush1.bf16.msra.mxu0 %v2019
      %2039 = vmatprep.subr.bf16.mxu0 0
      %2040 = vmatpush1.bf16.msra.mxu0 %v2020
      %2041 = vmatprep.subr.bf16.mxu0 0
      %2042 = vmatpush1.bf16.msra.mxu0 %v2021
      %2043 = vmatprep.subr.bf16.mxu0 0
      %2044 = vmatpush1.bf16.msra.mxu0 %v2022
      %2045 = vmatprep.subr.bf16.mxu0 0
      %2046 = vmatpush1.bf16.msra.mxu0 %v2023
      %2047 = vmatprep.subr.bf16.mxu0 0
      %2048 = vmatpush1.bf16.msra.mxu0 %v2024
      %2049 = vmatprep.subr.bf16.mxu0 0
      %2050 = vmatpush1.bf16.msra.mxu0 0
      %2051 = vmatprep.subr.bf16.mxu0 0
      %2052 = vmatpush1.bf16.msra.mxu0 0
      %2053 = vmatprep.subr.bf16.mxu0 0
      %2054 = vmatpush1.bf16.msra.mxu0 0
      %2055 = vmatprep.subr.bf16.mxu0 0
      %2056 = vmatpush1.bf16.msra.mxu0 0
      %2057 = vmatprep.subr.bf16.mxu0 0
      %2058 = vmatpush1.bf16.msra.mxu0 0
      %2059 = vmatprep.subr.bf16.mxu0 0
      %2060 = vmatpush1.bf16.msra.mxu0 0
      %2061 = vmatprep.subr.bf16.mxu0 0
      %2062 = vmatpush1.bf16.msra.mxu0 0
      %2063 = vmatprep.subr.bf16.mxu0 0
      %2064 = vmatpush1.bf16.msra.mxu0 0
      %2065 = vmatprep.mubr.bf16.mxu0 0
      %2066 = vmatmul.mubr.bf16.gmra.mrb[0].mxu0 %v1952
      %v2067 = vpop.f32.mrb[0].mxu0
      %v2068 = vadd.f32 0.0, %v2067
      %v2069 = vpop.f32.mrb[0].mxu0
      %v2070 = vpop.f32.mrb[0].mxu0
      %v2071 = vadd.f32 0.0, %v2070
      %v2072 = vpop.f32.mrb[0].mxu0
      %2073 = vmatprep.mubr.bf16.mxu0 0
      %2074 = vmatmul.mubr.bf16.gmra.mrb[0].mxu0 %v1953
      %v2075 = vpop.f32.mrb[0].mxu0
      %v2076 = vadd.f32 0.0, %v2075
      %v2077 = vpop.f32.mrb[0].mxu0
      %v2078 = vpop.f32.mrb[0].mxu0
      %v2079 = vadd.f32 0.0, %v2078
      %v2080 = vpop.f32.mrb[0].mxu0
      %2081 = vmatprep.mubr.bf16.mxu0 0
      %2082 = vmatmul.mubr.bf16.gmra.mrb[0].mxu0 %v1954
      %v2083 = vpop.f32.mrb[0].mxu0
      %v2084 = vadd.f32 0.0, %v2083
      %v2085 = vpop.f32.mrb[0].mxu0
      %v2086 = vpop.f32.mrb[0].mxu0
      %v2087 = vadd.f32 0.0, %v2086
      %v2088 = vpop.f32.mrb[0].mxu0
      %2089 = vmatprep.mubr.bf16.mxu0 0
      %2090 = vmatmul.mubr.bf16.gmra.mrb[0].mxu0 %v1955
      %v2091 = vpop.f32.mrb[0].mxu0
      %v2092 = vadd.f32 0.0, %v2091
      %v2093 = vpop.f32.mrb[0].mxu0
      %v2094 = vpop.f32.mrb[0].mxu0
      %v2095 = vadd.f32 0.0, %v2094
      %v2096 = vpop.f32.mrb[0].mxu0
      %2097 = vmatprep.mubr.bf16.mxu0 0
      %2098 = vmatmul.mubr.bf16.gmra.mrb[0].mxu0 %v1956
      %v2099 = vpop.f32.mrb[0].mxu0
      %v2100 = vadd.f32 0.0, %v2099
      %v2101 = vpop.f32.mrb[0].mxu0
      %v2102 = vpop.f32.mrb[0].mxu0
      %v2103 = vadd.f32 0.0, %v2102
      %v2104 = vpop.f32.mrb[0].mxu0
      %2105 = vmatprep.mubr.bf16.mxu0 0
      %2106 = vmatmul.mubr.bf16.gmra.mrb[0].mxu0 %v1957
      %v2107 = vpop.f32.mrb[0].mxu0
      %v2108 = vadd.f32 0.0, %v2107
      %v2109 = vpop.f32.mrb[0].mxu0
      %v2110 = vpop.f32.mrb[0].mxu0
      %v2111 = vadd.f32 0.0, %v2110
      %v2112 = vpop.f32.mrb[0].mxu0
      %2113 = vmatprep.mubr.bf16.mxu0 0
      %2114 = vmatmul.mubr.bf16.gmra.mrb[0].mxu0 %v1958
      %v2115 = vpop.f32.mrb[0].mxu0
      %v2116 = vadd.f32 0.0, %v2115
      %v2117 = vpop.f32.mrb[0].mxu0
      %v2118 = vpop.f32.mrb[0].mxu0
      %v2119 = vadd.f32 0.0, %v2118
      %v2120 = vpop.f32.mrb[0].mxu0
      %2121 = vmatprep.mubr.bf16.mxu0 0
      %2122 = vmatmul.mubr.bf16.gmra.mrb[0].mxu0 %v1959
      %v2123 = vpop.f32.mrb[0].mxu0
      %v2124 = vadd.f32 0.0, %v2123
      %v2125 = vpop.f32.mrb[0].mxu0
      %v2126 = vpop.f32.mrb[0].mxu0
      %v2127 = vadd.f32 0.0, %v2126
      %v2128 = vpop.f32.mrb[0].mxu0
      %2129 = vmatprep.mubr.bf16.mxu0 0
      %2130 = vmatmul.mubr.bf16.gmra.mrb[0].mxu0 %v1960
      %v2131 = vpop.f32.mrb[0].mxu0
      %v2132 = vadd.f32 0.0, %v2131
      %v2133 = vpop.f32.mrb[0].mxu0
      %v2134 = vpop.f32.mrb[0].mxu0
      %v2135 = vadd.f32 0.0, %v2134
      %v2136 = vpop.f32.mrb[0].mxu0
      %2137 = vmatprep.mubr.bf16.mxu0 0
      %2138 = vmatmul.mubr.bf16.gmra.mrb[0].mxu0 %v1961
      %v2139 = vpop.f32.mrb[0].mxu0
      %v2140 = vadd.f32 0.0, %v2139
      %v2141 = vpop.f32.mrb[0].mxu0
      %v2142 = vpop.f32.mrb[0].mxu0
      %v2143 = vadd.f32 0.0, %v2142
      %v2144 = vpop.f32.mrb[0].mxu0
      %2145 = vmatprep.mubr.bf16.mxu0 0
      %2146 = vmatmul.mubr.bf16.gmra.mrb[0].mxu0 %v1962
      %v2147 = vpop.f32.mrb[0].mxu0
      %v2148 = vadd.f32 0.0, %v2147
      %v2149 = vpop.f32.mrb[0].mxu0
      %v2150 = vpop.f32.mrb[0].mxu0
      %v2151 = vadd.f32 0.0, %v2150
      %v2152 = vpop.f32.mrb[0].mxu0
      %2153 = vmatprep.mubr.bf16.mxu0 0
      %2154 = vmatmul.mubr.bf16.gmra.mrb[0].mxu0 %v1963
      %v2155 = vpop.f32.mrb[0].mxu0
      %v2156 = vadd.f32 0.0, %v2155
      %v2157 = vpop.f32.mrb[0].mxu0
      %v2158 = vpop.f32.mrb[0].mxu0
      %v2159 = vadd.f32 0.0, %v2158
      %v2160 = vpop.f32.mrb[0].mxu0
      %2161 = vmatprep.mubr.bf16.mxu0 0
      %2162 = vmatmul.mubr.bf16.gmra.mrb[0].mxu0 %v1964
      %v2163 = vpop.f32.mrb[0].mxu0
      %v2164 = vadd.f32 0.0, %v2163
      %v2165 = vpop.f32.mrb[0].mxu0
      %v2166 = vpop.f32.mrb[0].mxu0
      %v2167 = vadd.f32 0.0, %v2166
      %v2168 = vpop.f32.mrb[0].mxu0
      %2169 = vmatprep.mubr.bf16.mxu0 0
      %2170 = vmatmul.mubr.bf16.gmra.mrb[0].mxu0 %v1965
      %v2171 = vpop.f32.mrb[0].mxu0
      %v2172 = vadd.f32 0.0, %v2171
      %v2173 = vpop.f32.mrb[0].mxu0
      %v2174 = vpop.f32.mrb[0].mxu0
      %v2175 = vadd.f32 0.0, %v2174
      %v2176 = vpop.f32.mrb[0].mxu0
      %2177 = vmatprep.mubr.bf16.mxu0 0
      %2178 = vmatmul.mubr.bf16.gmra.mrb[0].mxu0 %v1966
      %v2179 = vpop.f32.mrb[0].mxu0
      %v2180 = vadd.f32 0.0, %v2179
      %v2181 = vpop.f32.mrb[0].mxu0
      %v2182 = vpop.f32.mrb[0].mxu0
      %v2183 = vadd.f32 0.0, %v2182
      %v2184 = vpop.f32.mrb[0].mxu0
      %2185 = vmatprep.mubr.bf16.mxu0 0
      %2186 = vmatmul.mubr.bf16.gmra.mrb[0].mxu0 %v1967
      %v2187 = vpop.f32.mrb[0].mxu0
      %v2188 = vadd.f32 0.0, %v2187
      %v2189 = vpop.f32.mrb[0].mxu0
      %v2190 = vpop.f32.mrb[0].mxu0
      %v2191 = vadd.f32 0.0, %v2190
      %v2192 = vpop.f32.mrb[0].mxu0
      %2193 = vdwg.mxu0
      %v2194 = vadd.f32 %v1888, %v2068
      %v2195 = vadd.f32 %v1889, %v2071
      %v2196 = vadd.f32 %v1890, %v2076
      %v2197 = vadd.f32 %v1891, %v2079
      %v2198 = vadd.f32 %v1892, %v2084
      %v2199 = vadd.f32 %v1893, %v2087
      %v2200 = vadd.f32 %v1894, %v2092
      %v2201 = vadd.f32 %v1895, %v2095
      %v2202 = vadd.f32 %v1896, %v2100
      %v2203 = vadd.f32 %v1897, %v2103
      %v2204 = vadd.f32 %v1898, %v2108
      %v2205 = vadd.f32 %v1899, %v2111
      %v2206 = vadd.f32 %v1900, %v2116
      %v2207 = vadd.f32 %v1901, %v2119
      %v2208 = vadd.f32 %v1902, %v2124
      %v2209 = vadd.f32 %v1903, %v2127
      %v2210 = vadd.f32 %v1904, %v2132
      %v2211 = vadd.f32 %v1905, %v2135
      %v2212 = vadd.f32 %v1906, %v2140
      %v2213 = vadd.f32 %v1907, %v2143
      %v2214 = vadd.f32 %v1908, %v2148
      %v2215 = vadd.f32 %v1909, %v2151
      %v2216 = vadd.f32 %v1910, %v2156
      %v2217 = vadd.f32 %v1911, %v2159
      %v2218 = vadd.f32 %v1912, %v2164
      %v2219 = vadd.f32 %v1913, %v2167
      %v2220 = vadd.f32 %v1914, %v2172
      %v2221 = vadd.f32 %v1915, %v2175
      %v2222 = vadd.f32 %v1916, %v2180
      %v2223 = vadd.f32 %v1917, %v2183
      %v2224 = vadd.f32 %v1918, %v2188
      %v2225 = vadd.f32 %v1919, %v2191
      %s2226 = scalar_lea.vmem [#allocation2], 48
      %v2227 = vld [vmem:[%s2226] sm:$0xff]
      %v2228 = vld [vmem:[%s2226 + $0x8] sm:$0xff]
      %v2229 = vld [vmem:[%s2226 + $0x18] sm:$0xff]
      %v2230 = vld [vmem:[%s2226 + $0x20] sm:$0xff]
      %v2231 = vld [vmem:[%s2226 + $0x30] sm:$0xff]
      %v2232 = vld [vmem:[%s2226 + $0x38] sm:$0xff]
      %v2233 = vld [vmem:[%s2226 + $0x48] sm:$0xff]
      %v2234 = vld [vmem:[%s2226 + $0x50] sm:$0xff]
      %v2235 = vld [vmem:[%s2226 + $0x60] sm:$0xff]
      %v2236 = vld [vmem:[%s2226 + $0x68] sm:$0xff]
      %v2237 = vld [vmem:[%s2226 + $0x78] sm:$0xff]
      %v2238 = vld [vmem:[%s2226 + $0x80] sm:$0xff]
      %v2239 = vld [vmem:[%s2226 + $0x90] sm:$0xff]
      %v2240 = vld [vmem:[%s2226 + $0x98] sm:$0xff]
      %v2241 = vld [vmem:[%s2226 + $0xa8] sm:$0xff]
      %v2242 = vld [vmem:[%s2226 + $0xb0] sm:$0xff]
      %v2243 = vld [vmem:[%s2226 + $0xc0] sm:$0xff]
      %v2244 = vld [vmem:[%s2226 + $0xc8] sm:$0xff]
      %v2245 = vld [vmem:[%s2226 + $0xd8] sm:$0xff]
      %v2246 = vld [vmem:[%s2226 + $0xe0] sm:$0xff]
      %v2247 = vld [vmem:[%s2226 + $0xf0] sm:$0xff]
      %v2248 = vld [vmem:[%s2226 + $0xf8] sm:$0xff]
      %v2249 = vld [vmem:[%s2226 + $0x108] sm:$0xff]
      %v2250 = vld [vmem:[%s2226 + $0x110] sm:$0xff]
      %v2251 = vld [vmem:[%s2226 + $0x120] sm:$0xff]
      %v2252 = vld [vmem:[%s2226 + $0x128] sm:$0xff]
      %v2253 = vld [vmem:[%s2226 + $0x138] sm:$0xff]
      %v2254 = vld [vmem:[%s2226 + $0x140] sm:$0xff]
      %v2255 = vld [vmem:[%s2226 + $0x150] sm:$0xff]
      %v2256 = vld [vmem:[%s2226 + $0x158] sm:$0xff]
      %v2257 = vld [vmem:[%s2226 + $0x168] sm:$0xff]
      %v2258 = vld [vmem:[%s2226 + $0x170] sm:$0xff]
      %v2259 = vpack.c.bf16 %v2228, %v2227
      %v2260 = vpack.c.bf16 %v2230, %v2229
      %v2261 = vpack.c.bf16 %v2232, %v2231
      %v2262 = vpack.c.bf16 %v2234, %v2233
      %v2263 = vpack.c.bf16 %v2236, %v2235
      %v2264 = vpack.c.bf16 %v2238, %v2237
      %v2265 = vpack.c.bf16 %v2240, %v2239
      %v2266 = vpack.c.bf16 %v2242, %v2241
      %v2267 = vpack.c.bf16 %v2244, %v2243
      %v2268 = vpack.c.bf16 %v2246, %v2245
      %v2269 = vpack.c.bf16 %v2248, %v2247
      %v2270 = vpack.c.bf16 %v2250, %v2249
      %v2271 = vpack.c.bf16 %v2252, %v2251
      %v2272 = vpack.c.bf16 %v2254, %v2253
      %v2273 = vpack.c.bf16 %v2256, %v2255
      %v2274 = vpack.c.bf16 %v2258, %v2257
      %s2275 = scalar_lea.vmem %s3, 384
      %v2276 = vld [vmem:[%s2275] sm:$0xf]
      %v2277 = vld [vmem:[%s2275 + $0x4] sm:$0xf]
      %v2278 = vld [vmem:[%s2275 + $0x8] sm:$0xf]
      %v2279 = vld [vmem:[%s2275 + $0xc] sm:$0xf]
      %v2280 = vld [vmem:[%s2275 + $0x10] sm:$0xf]
      %v2281 = vld [vmem:[%s2275 + $0x14] sm:$0xf]
      %v2282 = vld [vmem:[%s2275 + $0x18] sm:$0xf]
      %v2283 = vld [vmem:[%s2275 + $0x1c] sm:$0xf]
      %v2284 = vld [vmem:[%s2275 + $0x20] sm:$0xf]
      %v2285 = vld [vmem:[%s2275 + $0x24] sm:$0xf]
      %v2286 = vld [vmem:[%s2275 + $0x28] sm:$0xf]
      %v2287 = vld [vmem:[%s2275 + $0x2c] sm:$0xf]
      %v2288 = vld [vmem:[%s2275 + $0x30] sm:$0xf]
      %v2289 = vld [vmem:[%s2275 + $0x34] sm:$0xf]
      %v2290 = vld [vmem:[%s2275 + $0x38] sm:$0xf]
      %v2291 = vld [vmem:[%s2275 + $0x3c] sm:$0xf]
      %v2308 = vunpack.c.l.b16 %v2276
      %v2309 = vunpack.c.l.b16 %v2277
      %v2310 = vunpack.c.l.b16 %v2278
      %v2311 = vunpack.c.l.b16 %v2279
      %v2312 = vunpack.c.l.b16 %v2280
      %v2313 = vunpack.c.l.b16 %v2281
      %v2314 = vunpack.c.l.b16 %v2282
      %v2315 = vunpack.c.l.b16 %v2283
      %v2316 = vunpack.c.l.b16 %v2284
      %v2317 = vunpack.c.l.b16 %v2285
      %v2318 = vunpack.c.l.b16 %v2286
      %v2319 = vunpack.c.l.b16 %v2287
      %v2320 = vunpack.c.l.b16 %v2288
      %v2321 = vunpack.c.l.b16 %v2289
      %v2322 = vunpack.c.l.b16 %v2290
      %v2323 = vunpack.c.l.b16 %v2291
      %v2324 = vpack.c.b16 %v2309, %v2308
      %v2325 = vpack.c.b16 %v2311, %v2310
      %v2326 = vpack.c.b16 %v2313, %v2312
      %v2327 = vpack.c.b16 %v2315, %v2314
      %v2328 = vpack.c.b16 %v2317, %v2316
      %v2329 = vpack.c.b16 %v2319, %v2318
      %v2330 = vpack.c.b16 %v2321, %v2320
      %v2331 = vpack.c.b16 %v2323, %v2322
      %2340 = vmatprep.subr.bf16.mxu0 0
      %2341 = vmatpush1.bf16.msra.mxu0 %v2324
      %2342 = vmatprep.subr.bf16.mxu0 0
      %2343 = vmatpush1.bf16.msra.mxu0 %v2325
      %2344 = vmatprep.subr.bf16.mxu0 0
      %2345 = vmatpush1.bf16.msra.mxu0 %v2326
      %2346 = vmatprep.subr.bf16.mxu0 0
      %2347 = vmatpush1.bf16.msra.mxu0 %v2327
      %2348 = vmatprep.subr.bf16.mxu0 0
      %2349 = vmatpush1.bf16.msra.mxu0 %v2328
      %2350 = vmatprep.subr.bf16.mxu0 0
      %2351 = vmatpush1.bf16.msra.mxu0 %v2329
      %2352 = vmatprep.subr.bf16.mxu0 0
      %2353 = vmatpush1.bf16.msra.mxu0 %v2330
      %2354 = vmatprep.subr.bf16.mxu0 0
      %2355 = vmatpush1.bf16.msra.mxu0 %v2331
      %2356 = vmatprep.subr.bf16.mxu0 0
      %2357 = vmatpush1.bf16.msra.mxu0 0
      %2358 = vmatprep.subr.bf16.mxu0 0
      %2359 = vmatpush1.bf16.msra.mxu0 0
      %2360 = vmatprep.subr.bf16.mxu0 0
      %2361 = vmatpush1.bf16.msra.mxu0 0
      %2362 = vmatprep.subr.bf16.mxu0 0
      %2363 = vmatpush1.bf16.msra.mxu0 0
      %2364 = vmatprep.subr.bf16.mxu0 0
      %2365 = vmatpush1.bf16.msra.mxu0 0
      %2366 = vmatprep.subr.bf16.mxu0 0
      %2367 = vmatpush1.bf16.msra.mxu0 0
      %2368 = vmatprep.subr.bf16.mxu0 0
      %2369 = vmatpush1.bf16.msra.mxu0 0
      %2370 = vmatprep.subr.bf16.mxu0 0
      %2371 = vmatpush1.bf16.msra.mxu0 0
      %2372 = vmatprep.mubr.bf16.mxu0 0
      %2373 = vmatmul.mubr.bf16.gmra.mrb[0].mxu0 %v2259
      %v2374 = vpop.f32.mrb[0].mxu0
      %v2375 = vadd.f32 0.0, %v2374
      %v2376 = vpop.f32.mrb[0].mxu0
      %v2377 = vpop.f32.mrb[0].mxu0
      %v2378 = vadd.f32 0.0, %v2377
      %v2379 = vpop.f32.mrb[0].mxu0
      %2380 = vmatprep.mubr.bf16.mxu0 0
      %2381 = vmatmul.mubr.bf16.gmra.mrb[0].mxu0 %v2260
      %v2382 = vpop.f32.mrb[0].mxu0
      %v2383 = vadd.f32 0.0, %v2382
      %v2384 = vpop.f32.mrb[0].mxu0
      %v2385 = vpop.f32.mrb[0].mxu0
      %v2386 = vadd.f32 0.0, %v2385
      %v2387 = vpop.f32.mrb[0].mxu0
      %2388 = vmatprep.mubr.bf16.mxu0 0
      %2389 = vmatmul.mubr.bf16.gmra.mrb[0].mxu0 %v2261
      %v2390 = vpop.f32.mrb[0].mxu0
      %v2391 = vadd.f32 0.0, %v2390
      %v2392 = vpop.f32.mrb[0].mxu0
      %v2393 = vpop.f32.mrb[0].mxu0
      %v2394 = vadd.f32 0.0, %v2393
      %v2395 = vpop.f32.mrb[0].mxu0
      %2396 = vmatprep.mubr.bf16.mxu0 0
      %2397 = vmatmul.mubr.bf16.gmra.mrb[0].mxu0 %v2262
      %v2398 = vpop.f32.mrb[0].mxu0
      %v2399 = vadd.f32 0.0, %v2398
      %v2400 = vpop.f32.mrb[0].mxu0
      %v2401 = vpop.f32.mrb[0].mxu0
      %v2402 = vadd.f32 0.0, %v2401
      %v2403 = vpop.f32.mrb[0].mxu0
      %2404 = vmatprep.mubr.bf16.mxu0 0
      %2405 = vmatmul.mubr.bf16.gmra.mrb[0].mxu0 %v2263
      %v2406 = vpop.f32.mrb[0].mxu0
      %v2407 = vadd.f32 0.0, %v2406
      %v2408 = vpop.f32.mrb[0].mxu0
      %v2409 = vpop.f32.mrb[0].mxu0
      %v2410 = vadd.f32 0.0, %v2409
      %v2411 = vpop.f32.mrb[0].mxu0
      %2412 = vmatprep.mubr.bf16.mxu0 0
      %2413 = vmatmul.mubr.bf16.gmra.mrb[0].mxu0 %v2264
      %v2414 = vpop.f32.mrb[0].mxu0
      %v2415 = vadd.f32 0.0, %v2414
      %v2416 = vpop.f32.mrb[0].mxu0
      %v2417 = vpop.f32.mrb[0].mxu0
      %v2418 = vadd.f32 0.0, %v2417
      %v2419 = vpop.f32.mrb[0].mxu0
      %2420 = vmatprep.mubr.bf16.mxu0 0
      %2421 = vmatmul.mubr.bf16.gmra.mrb[0].mxu0 %v2265
      %v2422 = vpop.f32.mrb[0].mxu0
      %v2423 = vadd.f32 0.0, %v2422
      %v2424 = vpop.f32.mrb[0].mxu0
      %v2425 = vpop.f32.mrb[0].mxu0
      %v2426 = vadd.f32 0.0, %v2425
      %v2427 = vpop.f32.mrb[0].mxu0
      %2428 = vmatprep.mubr.bf16.mxu0 0
      %2429 = vmatmul.mubr.bf16.gmra.mrb[0].mxu0 %v2266
      %v2430 = vpop.f32.mrb[0].mxu0
      %v2431 = vadd.f32 0.0, %v2430
      %v2432 = vpop.f32.mrb[0].mxu0
      %v2433 = vpop.f32.mrb[0].mxu0
      %v2434 = vadd.f32 0.0, %v2433
      %v2435 = vpop.f32.mrb[0].mxu0
      %2436 = vmatprep.mubr.bf16.mxu0 0
      %2437 = vmatmul.mubr.bf16.gmra.mrb[0].mxu0 %v2267
      %v2438 = vpop.f32.mrb[0].mxu0
      %v2439 = vadd.f32 0.0, %v2438
      %v2440 = vpop.f32.mrb[0].mxu0
      %v2441 = vpop.f32.mrb[0].mxu0
      %v2442 = vadd.f32 0.0, %v2441
      %v2443 = vpop.f32.mrb[0].mxu0
      %2444 = vmatprep.mubr.bf16.mxu0 0
      %2445 = vmatmul.mubr.bf16.gmra.mrb[0].mxu0 %v2268
      %v2446 = vpop.f32.mrb[0].mxu0
      %v2447 = vadd.f32 0.0, %v2446
      %v2448 = vpop.f32.mrb[0].mxu0
      %v2449 = vpop.f32.mrb[0].mxu0
      %v2450 = vadd.f32 0.0, %v2449
      %v2451 = vpop.f32.mrb[0].mxu0
      %2452 = vmatprep.mubr.bf16.mxu0 0
      %2453 = vmatmul.mubr.bf16.gmra.mrb[0].mxu0 %v2269
      %v2454 = vpop.f32.mrb[0].mxu0
      %v2455 = vadd.f32 0.0, %v2454
      %v2456 = vpop.f32.mrb[0].mxu0
      %v2457 = vpop.f32.mrb[0].mxu0
      %v2458 = vadd.f32 0.0, %v2457
      %v2459 = vpop.f32.mrb[0].mxu0
      %2460 = vmatprep.mubr.bf16.mxu0 0
      %2461 = vmatmul.mubr.bf16.gmra.mrb[0].mxu0 %v2270
      %v2462 = vpop.f32.mrb[0].mxu0
      %v2463 = vadd.f32 0.0, %v2462
      %v2464 = vpop.f32.mrb[0].mxu0
      %v2465 = vpop.f32.mrb[0].mxu0
      %v2466 = vadd.f32 0.0, %v2465
      %v2467 = vpop.f32.mrb[0].mxu0
      %2468 = vmatprep.mubr.bf16.mxu0 0
      %2469 = vmatmul.mubr.bf16.gmra.mrb[0].mxu0 %v2271
      %v2470 = vpop.f32.mrb[0].mxu0
      %v2471 = vadd.f32 0.0, %v2470
      %v2472 = vpop.f32.mrb[0].mxu0
      %v2473 = vpop.f32.mrb[0].mxu0
      %v2474 = vadd.f32 0.0, %v2473
      %v2475 = vpop.f32.mrb[0].mxu0
      %2476 = vmatprep.mubr.bf16.mxu0 0
      %2477 = vmatmul.mubr.bf16.gmra.mrb[0].mxu0 %v2272
      %v2478 = vpop.f32.mrb[0].mxu0
      %v2479 = vadd.f32 0.0, %v2478
      %v2480 = vpop.f32.mrb[0].mxu0
      %v2481 = vpop.f32.mrb[0].mxu0
      %v2482 = vadd.f32 0.0, %v2481
      %v2483 = vpop.f32.mrb[0].mxu0
      %2484 = vmatprep.mubr.bf16.mxu0 0
      %2485 = vmatmul.mubr.bf16.gmra.mrb[0].mxu0 %v2273
      %v2486 = vpop.f32.mrb[0].mxu0
      %v2487 = vadd.f32 0.0, %v2486
      %v2488 = vpop.f32.mrb[0].mxu0
      %v2489 = vpop.f32.mrb[0].mxu0
      %v2490 = vadd.f32 0.0, %v2489
      %v2491 = vpop.f32.mrb[0].mxu0
      %2492 = vmatprep.mubr.bf16.mxu0 0
      %2493 = vmatmul.mubr.bf16.gmra.mrb[0].mxu0 %v2274
      %v2494 = vpop.f32.mrb[0].mxu0
      %v2495 = vadd.f32 0.0, %v2494
      %v2496 = vpop.f32.mrb[0].mxu0
      %v2497 = vpop.f32.mrb[0].mxu0
      %v2498 = vadd.f32 0.0, %v2497
      %v2499 = vpop.f32.mrb[0].mxu0
      %2500 = vdwg.mxu0
      %v2501 = vadd.f32 %v2194, %v2375
      %v2502 = vadd.f32 %v2195, %v2378
      %v2503 = vadd.f32 %v2196, %v2383
      %v2504 = vadd.f32 %v2197, %v2386
      %v2505 = vadd.f32 %v2198, %v2391
      %v2506 = vadd.f32 %v2199, %v2394
      %v2507 = vadd.f32 %v2200, %v2399
      %v2508 = vadd.f32 %v2201, %v2402
      %v2509 = vadd.f32 %v2202, %v2407
      %v2510 = vadd.f32 %v2203, %v2410
      %v2511 = vadd.f32 %v2204, %v2415
      %v2512 = vadd.f32 %v2205, %v2418
      %v2513 = vadd.f32 %v2206, %v2423
      %v2514 = vadd.f32 %v2207, %v2426
      %v2515 = vadd.f32 %v2208, %v2431
      %v2516 = vadd.f32 %v2209, %v2434
      %v2517 = vadd.f32 %v2210, %v2439
      %v2518 = vadd.f32 %v2211, %v2442
      %v2519 = vadd.f32 %v2212, %v2447
      %v2520 = vadd.f32 %v2213, %v2450
      %v2521 = vadd.f32 %v2214, %v2455
      %v2522 = vadd.f32 %v2215, %v2458
      %v2523 = vadd.f32 %v2216, %v2463
      %v2524 = vadd.f32 %v2217, %v2466
      %v2525 = vadd.f32 %v2218, %v2471
      %v2526 = vadd.f32 %v2219, %v2474
      %v2527 = vadd.f32 %v2220, %v2479
      %v2528 = vadd.f32 %v2221, %v2482
      %v2529 = vadd.f32 %v2222, %v2487
      %v2530 = vadd.f32 %v2223, %v2490
      %v2531 = vadd.f32 %v2224, %v2495
      %v2532 = vadd.f32 %v2225, %v2498
      %v2533 = vld [vmem:[%s2226 + $0x1] sm:$0xff]
      %v2534 = vld [vmem:[%s2226 + $0x9] sm:$0xff]
      %v2535 = vld [vmem:[%s2226 + $0x19] sm:$0xff]
      %v2536 = vld [vmem:[%s2226 + $0x21] sm:$0xff]
      %v2537 = vld [vmem:[%s2226 + $0x31] sm:$0xff]
      %v2538 = vld [vmem:[%s2226 + $0x39] sm:$0xff]
      %v2539 = vld [vmem:[%s2226 + $0x49] sm:$0xff]
      %v2540 = vld [vmem:[%s2226 + $0x51] sm:$0xff]
      %v2541 = vld [vmem:[%s2226 + $0x61] sm:$0xff]
      %v2542 = vld [vmem:[%s2226 + $0x69] sm:$0xff]
      %v2543 = vld [vmem:[%s2226 + $0x79] sm:$0xff]
      %v2544 = vld [vmem:[%s2226 + $0x81] sm:$0xff]
      %v2545 = vld [vmem:[%s2226 + $0x91] sm:$0xff]
      %v2546 = vld [vmem:[%s2226 + $0x99] sm:$0xff]
      %v2547 = vld [vmem:[%s2226 + $0xa9] sm:$0xff]
      %v2548 = vld [vmem:[%s2226 + $0xb1] sm:$0xff]
      %v2549 = vld [vmem:[%s2226 + $0xc1] sm:$0xff]
      %v2550 = vld [vmem:[%s2226 + $0xc9] sm:$0xff]
      %v2551 = vld [vmem:[%s2226 + $0xd9] sm:$0xff]
      %v2552 = vld [vmem:[%s2226 + $0xe1] sm:$0xff]
      %v2553 = vld [vmem:[%s2226 + $0xf1] sm:$0xff]
      %v2554 = vld [vmem:[%s2226 + $0xf9] sm:$0xff]
      %v2555 = vld [vmem:[%s2226 + $0x109] sm:$0xff]
      %v2556 = vld [vmem:[%s2226 + $0x111] sm:$0xff]
      %v2557 = vld [vmem:[%s2226 + $0x121] sm:$0xff]
      %v2558 = vld [vmem:[%s2226 + $0x129] sm:$0xff]
      %v2559 = vld [vmem:[%s2226 + $0x139] sm:$0xff]
      %v2560 = vld [vmem:[%s2226 + $0x141] sm:$0xff]
      %v2561 = vld [vmem:[%s2226 + $0x151] sm:$0xff]
      %v2562 = vld [vmem:[%s2226 + $0x159] sm:$0xff]
      %v2563 = vld [vmem:[%s2226 + $0x169] sm:$0xff]
      %v2564 = vld [vmem:[%s2226 + $0x171] sm:$0xff]
      %v2565 = vpack.c.bf16 %v2534, %v2533
      %v2566 = vpack.c.bf16 %v2536, %v2535
      %v2567 = vpack.c.bf16 %v2538, %v2537
      %v2568 = vpack.c.bf16 %v2540, %v2539
      %v2569 = vpack.c.bf16 %v2542, %v2541
      %v2570 = vpack.c.bf16 %v2544, %v2543
      %v2571 = vpack.c.bf16 %v2546, %v2545
      %v2572 = vpack.c.bf16 %v2548, %v2547
      %v2573 = vpack.c.bf16 %v2550, %v2549
      %v2574 = vpack.c.bf16 %v2552, %v2551
      %v2575 = vpack.c.bf16 %v2554, %v2553
      %v2576 = vpack.c.bf16 %v2556, %v2555
      %v2577 = vpack.c.bf16 %v2558, %v2557
      %v2578 = vpack.c.bf16 %v2560, %v2559
      %v2579 = vpack.c.bf16 %v2562, %v2561
      %v2580 = vpack.c.bf16 %v2564, %v2563
      %s2581 = scalar_lea.vmem %s3, 448
      %v2582 = vld [vmem:[%s2581] sm:$0xf]
      %v2583 = vld [vmem:[%s2581 + $0x4] sm:$0xf]
      %v2584 = vld [vmem:[%s2581 + $0x8] sm:$0xf]
      %v2585 = vld [vmem:[%s2581 + $0xc] sm:$0xf]
      %v2586 = vld [vmem:[%s2581 + $0x10] sm:$0xf]
      %v2587 = vld [vmem:[%s2581 + $0x14] sm:$0xf]
      %v2588 = vld [vmem:[%s2581 + $0x18] sm:$0xf]
      %v2589 = vld [vmem:[%s2581 + $0x1c] sm:$0xf]
      %v2590 = vld [vmem:[%s2581 + $0x20] sm:$0xf]
      %v2591 = vld [vmem:[%s2581 + $0x24] sm:$0xf]
      %v2592 = vld [vmem:[%s2581 + $0x28] sm:$0xf]
      %v2593 = vld [vmem:[%s2581 + $0x2c] sm:$0xf]
      %v2594 = vld [vmem:[%s2581 + $0x30] sm:$0xf]
      %v2595 = vld [vmem:[%s2581 + $0x34] sm:$0xf]
      %v2596 = vld [vmem:[%s2581 + $0x38] sm:$0xf]
      %v2597 = vld [vmem:[%s2581 + $0x3c] sm:$0xf]
      %v2614 = vunpack.c.l.b16 %v2582
      %v2615 = vunpack.c.l.b16 %v2583
      %v2616 = vunpack.c.l.b16 %v2584
      %v2617 = vunpack.c.l.b16 %v2585
      %v2618 = vunpack.c.l.b16 %v2586
      %v2619 = vunpack.c.l.b16 %v2587
      %v2620 = vunpack.c.l.b16 %v2588
      %v2621 = vunpack.c.l.b16 %v2589
      %v2622 = vunpack.c.l.b16 %v2590
      %v2623 = vunpack.c.l.b16 %v2591
      %v2624 = vunpack.c.l.b16 %v2592
      %v2625 = vunpack.c.l.b16 %v2593
      %v2626 = vunpack.c.l.b16 %v2594
      %v2627 = vunpack.c.l.b16 %v2595
      %v2628 = vunpack.c.l.b16 %v2596
      %v2629 = vunpack.c.l.b16 %v2597
      %v2630 = vpack.c.b16 %v2615, %v2614
      %v2631 = vpack.c.b16 %v2617, %v2616
      %v2632 = vpack.c.b16 %v2619, %v2618
      %v2633 = vpack.c.b16 %v2621, %v2620
      %v2634 = vpack.c.b16 %v2623, %v2622
      %v2635 = vpack.c.b16 %v2625, %v2624
      %v2636 = vpack.c.b16 %v2627, %v2626
      %v2637 = vpack.c.b16 %v2629, %v2628
      %2646 = vmatprep.subr.bf16.mxu0 0
      %2647 = vmatpush1.bf16.msra.mxu0 %v2630
      %2648 = vmatprep.subr.bf16.mxu0 0
      %2649 = vmatpush1.bf16.msra.mxu0 %v2631
      %2650 = vmatprep.subr.bf16.mxu0 0
      %2651 = vmatpush1.bf16.msra.mxu0 %v2632
      %2652 = vmatprep.subr.bf16.mxu0 0
      %2653 = vmatpush1.bf16.msra.mxu0 %v2633
      %2654 = vmatprep.subr.bf16.mxu0 0
      %2655 = vmatpush1.bf16.msra.mxu0 %v2634
      %2656 = vmatprep.subr.bf16.mxu0 0
      %2657 = vmatpush1.bf16.msra.mxu0 %v2635
      %2658 = vmatprep.subr.bf16.mxu0 0
      %2659 = vmatpush1.bf16.msra.mxu0 %v2636
      %2660 = vmatprep.subr.bf16.mxu0 0
      %2661 = vmatpush1.bf16.msra.mxu0 %v2637
      %2662 = vmatprep.subr.bf16.mxu0 0
      %2663 = vmatpush1.bf16.msra.mxu0 0
      %2664 = vmatprep.subr.bf16.mxu0 0
      %2665 = vmatpush1.bf16.msra.mxu0 0
      %2666 = vmatprep.subr.bf16.mxu0 0
      %2667 = vmatpush1.bf16.msra.mxu0 0
      %2668 = vmatprep.subr.bf16.mxu0 0
      %2669 = vmatpush1.bf16.msra.mxu0 0
      %2670 = vmatprep.subr.bf16.mxu0 0
      %2671 = vmatpush1.bf16.msra.mxu0 0
      %2672 = vmatprep.subr.bf16.mxu0 0
      %2673 = vmatpush1.bf16.msra.mxu0 0
      %2674 = vmatprep.subr.bf16.mxu0 0
      %2675 = vmatpush1.bf16.msra.mxu0 0
      %2676 = vmatprep.subr.bf16.mxu0 0
      %2677 = vmatpush1.bf16.msra.mxu0 0
      %2678 = vmatprep.mubr.bf16.mxu0 0
      %2679 = vmatmul.mubr.bf16.gmra.mrb[0].mxu0 %v2565
      %v2680 = vpop.f32.mrb[0].mxu0
      %v2681 = vadd.f32 0.0, %v2680
      %v2682 = vpop.f32.mrb[0].mxu0
      %v2683 = vpop.f32.mrb[0].mxu0
      %v2684 = vadd.f32 0.0, %v2683
      %v2685 = vpop.f32.mrb[0].mxu0
      %2686 = vmatprep.mubr.bf16.mxu0 0
      %2687 = vmatmul.mubr.bf16.gmra.mrb[0].mxu0 %v2566
      %v2688 = vpop.f32.mrb[0].mxu0
      %v2689 = vadd.f32 0.0, %v2688
      %v2690 = vpop.f32.mrb[0].mxu0
      %v2691 = vpop.f32.mrb[0].mxu0
      %v2692 = vadd.f32 0.0, %v2691
      %v2693 = vpop.f32.mrb[0].mxu0
      %2694 = vmatprep.mubr.bf16.mxu0 0
      %2695 = vmatmul.mubr.bf16.gmra.mrb[0].mxu0 %v2567
      %v2696 = vpop.f32.mrb[0].mxu0
      %v2697 = vadd.f32 0.0, %v2696
      %v2698 = vpop.f32.mrb[0].mxu0
      %v2699 = vpop.f32.mrb[0].mxu0
      %v2700 = vadd.f32 0.0, %v2699
      %v2701 = vpop.f32.mrb[0].mxu0
      %2702 = vmatprep.mubr.bf16.mxu0 0
      %2703 = vmatmul.mubr.bf16.gmra.mrb[0].mxu0 %v2568
      %v2704 = vpop.f32.mrb[0].mxu0
      %v2705 = vadd.f32 0.0, %v2704
      %v2706 = vpop.f32.mrb[0].mxu0
      %v2707 = vpop.f32.mrb[0].mxu0
      %v2708 = vadd.f32 0.0, %v2707
      %v2709 = vpop.f32.mrb[0].mxu0
      %2710 = vmatprep.mubr.bf16.mxu0 0
      %2711 = vmatmul.mubr.bf16.gmra.mrb[0].mxu0 %v2569
      %v2712 = vpop.f32.mrb[0].mxu0
      %v2713 = vadd.f32 0.0, %v2712
      %v2714 = vpop.f32.mrb[0].mxu0
      %v2715 = vpop.f32.mrb[0].mxu0
      %v2716 = vadd.f32 0.0, %v2715
      %v2717 = vpop.f32.mrb[0].mxu0
      %2718 = vmatprep.mubr.bf16.mxu0 0
      %2719 = vmatmul.mubr.bf16.gmra.mrb[0].mxu0 %v2570
      %v2720 = vpop.f32.mrb[0].mxu0
      %v2721 = vadd.f32 0.0, %v2720
      %v2722 = vpop.f32.mrb[0].mxu0
      %v2723 = vpop.f32.mrb[0].mxu0
      %v2724 = vadd.f32 0.0, %v2723
      %v2725 = vpop.f32.mrb[0].mxu0
      %2726 = vmatprep.mubr.bf16.mxu0 0
      %2727 = vmatmul.mubr.bf16.gmra.mrb[0].mxu0 %v2571
      %v2728 = vpop.f32.mrb[0].mxu0
      %v2729 = vadd.f32 0.0, %v2728
      %v2730 = vpop.f32.mrb[0].mxu0
      %v2731 = vpop.f32.mrb[0].mxu0
      %v2732 = vadd.f32 0.0, %v2731
      %v2733 = vpop.f32.mrb[0].mxu0
      %2734 = vmatprep.mubr.bf16.mxu0 0
      %2735 = vmatmul.mubr.bf16.gmra.mrb[0].mxu0 %v2572
      %v2736 = vpop.f32.mrb[0].mxu0
      %v2737 = vadd.f32 0.0, %v2736
      %v2738 = vpop.f32.mrb[0].mxu0
      %v2739 = vpop.f32.mrb[0].mxu0
      %v2740 = vadd.f32 0.0, %v2739
      %v2741 = vpop.f32.mrb[0].mxu0
      %2742 = vmatprep.mubr.bf16.mxu0 0
      %2743 = vmatmul.mubr.bf16.gmra.mrb[0].mxu0 %v2573
      %v2744 = vpop.f32.mrb[0].mxu0
      %v2745 = vadd.f32 0.0, %v2744
      %v2746 = vpop.f32.mrb[0].mxu0
      %v2747 = vpop.f32.mrb[0].mxu0
      %v2748 = vadd.f32 0.0, %v2747
      %v2749 = vpop.f32.mrb[0].mxu0
      %2750 = vmatprep.mubr.bf16.mxu0 0
      %2751 = vmatmul.mubr.bf16.gmra.mrb[0].mxu0 %v2574
      %v2752 = vpop.f32.mrb[0].mxu0
      %v2753 = vadd.f32 0.0, %v2752
      %v2754 = vpop.f32.mrb[0].mxu0
      %v2755 = vpop.f32.mrb[0].mxu0
      %v2756 = vadd.f32 0.0, %v2755
      %v2757 = vpop.f32.mrb[0].mxu0
      %2758 = vmatprep.mubr.bf16.mxu0 0
      %2759 = vmatmul.mubr.bf16.gmra.mrb[0].mxu0 %v2575
      %v2760 = vpop.f32.mrb[0].mxu0
      %v2761 = vadd.f32 0.0, %v2760
      %v2762 = vpop.f32.mrb[0].mxu0
      %v2763 = vpop.f32.mrb[0].mxu0
      %v2764 = vadd.f32 0.0, %v2763
      %v2765 = vpop.f32.mrb[0].mxu0
      %2766 = vmatprep.mubr.bf16.mxu0 0
      %2767 = vmatmul.mubr.bf16.gmra.mrb[0].mxu0 %v2576
      %v2768 = vpop.f32.mrb[0].mxu0
      %v2769 = vadd.f32 0.0, %v2768
      %v2770 = vpop.f32.mrb[0].mxu0
      %v2771 = vpop.f32.mrb[0].mxu0
      %v2772 = vadd.f32 0.0, %v2771
      %v2773 = vpop.f32.mrb[0].mxu0
      %2774 = vmatprep.mubr.bf16.mxu0 0
      %2775 = vmatmul.mubr.bf16.gmra.mrb[0].mxu0 %v2577
      %v2776 = vpop.f32.mrb[0].mxu0
      %v2777 = vadd.f32 0.0, %v2776
      %v2778 = vpop.f32.mrb[0].mxu0
      %v2779 = vpop.f32.mrb[0].mxu0
      %v2780 = vadd.f32 0.0, %v2779
      %v2781 = vpop.f32.mrb[0].mxu0
      %2782 = vmatprep.mubr.bf16.mxu0 0
      %2783 = vmatmul.mubr.bf16.gmra.mrb[0].mxu0 %v2578
      %v2784 = vpop.f32.mrb[0].mxu0
      %v2785 = vadd.f32 0.0, %v2784
      %v2786 = vpop.f32.mrb[0].mxu0
      %v2787 = vpop.f32.mrb[0].mxu0
      %v2788 = vadd.f32 0.0, %v2787
      %v2789 = vpop.f32.mrb[0].mxu0
      %2790 = vmatprep.mubr.bf16.mxu0 0
      %2791 = vmatmul.mubr.bf16.gmra.mrb[0].mxu0 %v2579
      %v2792 = vpop.f32.mrb[0].mxu0
      %v2793 = vadd.f32 0.0, %v2792
      %v2794 = vpop.f32.mrb[0].mxu0
      %v2795 = vpop.f32.mrb[0].mxu0
      %v2796 = vadd.f32 0.0, %v2795
      %v2797 = vpop.f32.mrb[0].mxu0
      %2798 = vmatprep.mubr.bf16.mxu0 0
      %2799 = vmatmul.mubr.bf16.gmra.mrb[0].mxu0 %v2580
      %v2800 = vpop.f32.mrb[0].mxu0
      %v2801 = vadd.f32 0.0, %v2800
      %v2802 = vpop.f32.mrb[0].mxu0
      %v2803 = vpop.f32.mrb[0].mxu0
      %v2804 = vadd.f32 0.0, %v2803
      %v2805 = vpop.f32.mrb[0].mxu0
      %2806 = vdwg.mxu0
      %v2807 = vadd.f32 %v2501, %v2681
      %v2808 = vadd.f32 %v2502, %v2684
      %v2809 = vadd.f32 %v2503, %v2689
      %v2810 = vadd.f32 %v2504, %v2692
      %v2811 = vadd.f32 %v2505, %v2697
      %v2812 = vadd.f32 %v2506, %v2700
      %v2813 = vadd.f32 %v2507, %v2705
      %v2814 = vadd.f32 %v2508, %v2708
      %v2815 = vadd.f32 %v2509, %v2713
      %v2816 = vadd.f32 %v2510, %v2716
      %v2817 = vadd.f32 %v2511, %v2721
      %v2818 = vadd.f32 %v2512, %v2724
      %v2819 = vadd.f32 %v2513, %v2729
      %v2820 = vadd.f32 %v2514, %v2732
      %v2821 = vadd.f32 %v2515, %v2737
      %v2822 = vadd.f32 %v2516, %v2740
      %v2823 = vadd.f32 %v2517, %v2745
      %v2824 = vadd.f32 %v2518, %v2748
      %v2825 = vadd.f32 %v2519, %v2753
      %v2826 = vadd.f32 %v2520, %v2756
      %v2827 = vadd.f32 %v2521, %v2761
      %v2828 = vadd.f32 %v2522, %v2764
      %v2829 = vadd.f32 %v2523, %v2769
      %v2830 = vadd.f32 %v2524, %v2772
      %v2831 = vadd.f32 %v2525, %v2777
      %v2832 = vadd.f32 %v2526, %v2780
      %v2833 = vadd.f32 %v2527, %v2785
      %v2834 = vadd.f32 %v2528, %v2788
      %v2835 = vadd.f32 %v2529, %v2793
      %v2836 = vadd.f32 %v2530, %v2796
      %v2837 = vadd.f32 %v2531, %v2801
      %v2838 = vadd.f32 %v2532, %v2804
      %v2839 = vld [vmem:[%s2226 + $0x2] sm:$0xff]
      %v2840 = vld [vmem:[%s2226 + $0xa] sm:$0xff]
      %v2841 = vld [vmem:[%s2226 + $0x1a] sm:$0xff]
      %v2842 = vld [vmem:[%s2226 + $0x22] sm:$0xff]
      %v2843 = vld [vmem:[%s2226 + $0x32] sm:$0xff]
      %v2844 = vld [vmem:[%s2226 + $0x3a] sm:$0xff]
      %v2845 = vld [vmem:[%s2226 + $0x4a] sm:$0xff]
      %v2846 = vld [vmem:[%s2226 + $0x52] sm:$0xff]
      %v2847 = vld [vmem:[%s2226 + $0x62] sm:$0xff]
      %v2848 = vld [vmem:[%s2226 + $0x6a] sm:$0xff]
      %v2849 = vld [vmem:[%s2226 + $0x7a] sm:$0xff]
      %v2850 = vld [vmem:[%s2226 + $0x82] sm:$0xff]
      %v2851 = vld [vmem:[%s2226 + $0x92] sm:$0xff]
      %v2852 = vld [vmem:[%s2226 + $0x9a] sm:$0xff]
      %v2853 = vld [vmem:[%s2226 + $0xaa] sm:$0xff]
      %v2854 = vld [vmem:[%s2226 + $0xb2] sm:$0xff]
      %v2855 = vld [vmem:[%s2226 + $0xc2] sm:$0xff]
      %v2856 = vld [vmem:[%s2226 + $0xca] sm:$0xff]
      %v2857 = vld [vmem:[%s2226 + $0xda] sm:$0xff]
      %v2858 = vld [vmem:[%s2226 + $0xe2] sm:$0xff]
      %v2859 = vld [vmem:[%s2226 + $0xf2] sm:$0xff]
      %v2860 = vld [vmem:[%s2226 + $0xfa] sm:$0xff]
      %v2861 = vld [vmem:[%s2226 + $0x10a] sm:$0xff]
      %v2862 = vld [vmem:[%s2226 + $0x112] sm:$0xff]
      %v2863 = vld [vmem:[%s2226 + $0x122] sm:$0xff]
      %v2864 = vld [vmem:[%s2226 + $0x12a] sm:$0xff]
      %v2865 = vld [vmem:[%s2226 + $0x13a] sm:$0xff]
      %v2866 = vld [vmem:[%s2226 + $0x142] sm:$0xff]
      %v2867 = vld [vmem:[%s2226 + $0x152] sm:$0xff]
      %v2868 = vld [vmem:[%s2226 + $0x15a] sm:$0xff]
      %v2869 = vld [vmem:[%s2226 + $0x16a] sm:$0xff]
      %v2870 = vld [vmem:[%s2226 + $0x172] sm:$0xff]
      %v2871 = vpack.c.bf16 %v2840, %v2839
      %v2872 = vpack.c.bf16 %v2842, %v2841
      %v2873 = vpack.c.bf16 %v2844, %v2843
      %v2874 = vpack.c.bf16 %v2846, %v2845
      %v2875 = vpack.c.bf16 %v2848, %v2847
      %v2876 = vpack.c.bf16 %v2850, %v2849
      %v2877 = vpack.c.bf16 %v2852, %v2851
      %v2878 = vpack.c.bf16 %v2854, %v2853
      %v2879 = vpack.c.bf16 %v2856, %v2855
      %v2880 = vpack.c.bf16 %v2858, %v2857
      %v2881 = vpack.c.bf16 %v2860, %v2859
      %v2882 = vpack.c.bf16 %v2862, %v2861
      %v2883 = vpack.c.bf16 %v2864, %v2863
      %v2884 = vpack.c.bf16 %v2866, %v2865
      %v2885 = vpack.c.bf16 %v2868, %v2867
      %v2886 = vpack.c.bf16 %v2870, %v2869
      %s2887 = scalar_lea.vmem %s3, 512
      %v2888 = vld [vmem:[%s2887] sm:$0xf]
      %v2889 = vld [vmem:[%s2887 + $0x4] sm:$0xf]
      %v2890 = vld [vmem:[%s2887 + $0x8] sm:$0xf]
      %v2891 = vld [vmem:[%s2887 + $0xc] sm:$0xf]
      %v2892 = vld [vmem:[%s2887 + $0x10] sm:$0xf]
      %v2893 = vld [vmem:[%s2887 + $0x14] sm:$0xf]
      %v2894 = vld [vmem:[%s2887 + $0x18] sm:$0xf]
      %v2895 = vld [vmem:[%s2887 + $0x1c] sm:$0xf]
      %v2896 = vld [vmem:[%s2887 + $0x20] sm:$0xf]
      %v2897 = vld [vmem:[%s2887 + $0x24] sm:$0xf]
      %v2898 = vld [vmem:[%s2887 + $0x28] sm:$0xf]
      %v2899 = vld [vmem:[%s2887 + $0x2c] sm:$0xf]
      %v2900 = vld [vmem:[%s2887 + $0x30] sm:$0xf]
      %v2901 = vld [vmem:[%s2887 + $0x34] sm:$0xf]
      %v2902 = vld [vmem:[%s2887 + $0x38] sm:$0xf]
      %v2903 = vld [vmem:[%s2887 + $0x3c] sm:$0xf]
      %v2920 = vunpack.c.l.b16 %v2888
      %v2921 = vunpack.c.l.b16 %v2889
      %v2922 = vunpack.c.l.b16 %v2890
      %v2923 = vunpack.c.l.b16 %v2891
      %v2924 = vunpack.c.l.b16 %v2892
      %v2925 = vunpack.c.l.b16 %v2893
      %v2926 = vunpack.c.l.b16 %v2894
      %v2927 = vunpack.c.l.b16 %v2895
      %v2928 = vunpack.c.l.b16 %v2896
      %v2929 = vunpack.c.l.b16 %v2897
      %v2930 = vunpack.c.l.b16 %v2898
      %v2931 = vunpack.c.l.b16 %v2899
      %v2932 = vunpack.c.l.b16 %v2900
      %v2933 = vunpack.c.l.b16 %v2901
      %v2934 = vunpack.c.l.b16 %v2902
      %v2935 = vunpack.c.l.b16 %v2903
      %v2936 = vpack.c.b16 %v2921, %v2920
      %v2937 = vpack.c.b16 %v2923, %v2922
      %v2938 = vpack.c.b16 %v2925, %v2924
      %v2939 = vpack.c.b16 %v2927, %v2926
      %v2940 = vpack.c.b16 %v2929, %v2928
      %v2941 = vpack.c.b16 %v2931, %v2930
      %v2942 = vpack.c.b16 %v2933, %v2932
      %v2943 = vpack.c.b16 %v2935, %v2934
      %2952 = vmatprep.subr.bf16.mxu0 0
      %2953 = vmatpush1.bf16.msra.mxu0 %v2936
      %2954 = vmatprep.subr.bf16.mxu0 0
      %2955 = vmatpush1.bf16.msra.mxu0 %v2937
      %2956 = vmatprep.subr.bf16.mxu0 0
      %2957 = vmatpush1.bf16.msra.mxu0 %v2938
      %2958 = vmatprep.subr.bf16.mxu0 0
      %2959 = vmatpush1.bf16.msra.mxu0 %v2939
      %2960 = vmatprep.subr.bf16.mxu0 0
      %2961 = vmatpush1.bf16.msra.mxu0 %v2940
      %2962 = vmatprep.subr.bf16.mxu0 0
      %2963 = vmatpush1.bf16.msra.mxu0 %v2941
      %2964 = vmatprep.subr.bf16.mxu0 0
      %2965 = vmatpush1.bf16.msra.mxu0 %v2942
      %2966 = vmatprep.subr.bf16.mxu0 0
      %2967 = vmatpush1.bf16.msra.mxu0 %v2943
      %2968 = vmatprep.subr.bf16.mxu0 0
      %2969 = vmatpush1.bf16.msra.mxu0 0
      %2970 = vmatprep.subr.bf16.mxu0 0
      %2971 = vmatpush1.bf16.msra.mxu0 0
      %2972 = vmatprep.subr.bf16.mxu0 0
      %2973 = vmatpush1.bf16.msra.mxu0 0
      %2974 = vmatprep.subr.bf16.mxu0 0
      %2975 = vmatpush1.bf16.msra.mxu0 0
      %2976 = vmatprep.subr.bf16.mxu0 0
      %2977 = vmatpush1.bf16.msra.mxu0 0
      %2978 = vmatprep.subr.bf16.mxu0 0
      %2979 = vmatpush1.bf16.msra.mxu0 0
      %2980 = vmatprep.subr.bf16.mxu0 0
      %2981 = vmatpush1.bf16.msra.mxu0 0
      %2982 = vmatprep.subr.bf16.mxu0 0
      %2983 = vmatpush1.bf16.msra.mxu0 0
      %2984 = vmatprep.mubr.bf16.mxu0 0
      %2985 = vmatmul.mubr.bf16.gmra.mrb[0].mxu0 %v2871
      %v2986 = vpop.f32.mrb[0].mxu0
      %v2987 = vadd.f32 0.0, %v2986
      %v2988 = vpop.f32.mrb[0].mxu0
      %v2989 = vpop.f32.mrb[0].mxu0
      %v2990 = vadd.f32 0.0, %v2989
      %v2991 = vpop.f32.mrb[0].mxu0
      %2992 = vmatprep.mubr.bf16.mxu0 0
      %2993 = vmatmul.mubr.bf16.gmra.mrb[0].mxu0 %v2872
      %v2994 = vpop.f32.mrb[0].mxu0
      %v2995 = vadd.f32 0.0, %v2994
      %v2996 = vpop.f32.mrb[0].mxu0
      %v2997 = vpop.f32.mrb[0].mxu0
      %v2998 = vadd.f32 0.0, %v2997
      %v2999 = vpop.f32.mrb[0].mxu0
      %3000 = vmatprep.mubr.bf16.mxu0 0
      %3001 = vmatmul.mubr.bf16.gmra.mrb[0].mxu0 %v2873
      %v3002 = vpop.f32.mrb[0].mxu0
      %v3003 = vadd.f32 0.0, %v3002
      %v3004 = vpop.f32.mrb[0].mxu0
      %v3005 = vpop.f32.mrb[0].mxu0
      %v3006 = vadd.f32 0.0, %v3005
      %v3007 = vpop.f32.mrb[0].mxu0
      %3008 = vmatprep.mubr.bf16.mxu0 0
      %3009 = vmatmul.mubr.bf16.gmra.mrb[0].mxu0 %v2874
      %v3010 = vpop.f32.mrb[0].mxu0
      %v3011 = vadd.f32 0.0, %v3010
      %v3012 = vpop.f32.mrb[0].mxu0
      %v3013 = vpop.f32.mrb[0].mxu0
      %v3014 = vadd.f32 0.0, %v3013
      %v3015 = vpop.f32.mrb[0].mxu0
      %3016 = vmatprep.mubr.bf16.mxu0 0
      %3017 = vmatmul.mubr.bf16.gmra.mrb[0].mxu0 %v2875
      %v3018 = vpop.f32.mrb[0].mxu0
      %v3019 = vadd.f32 0.0, %v3018
      %v3020 = vpop.f32.mrb[0].mxu0
      %v3021 = vpop.f32.mrb[0].mxu0
      %v3022 = vadd.f32 0.0, %v3021
      %v3023 = vpop.f32.mrb[0].mxu0
      %3024 = vmatprep.mubr.bf16.mxu0 0
      %3025 = vmatmul.mubr.bf16.gmra.mrb[0].mxu0 %v2876
      %v3026 = vpop.f32.mrb[0].mxu0
      %v3027 = vadd.f32 0.0, %v3026
      %v3028 = vpop.f32.mrb[0].mxu0
      %v3029 = vpop.f32.mrb[0].mxu0
      %v3030 = vadd.f32 0.0, %v3029
      %v3031 = vpop.f32.mrb[0].mxu0
      %3032 = vmatprep.mubr.bf16.mxu0 0
      %3033 = vmatmul.mubr.bf16.gmra.mrb[0].mxu0 %v2877
      %v3034 = vpop.f32.mrb[0].mxu0
      %v3035 = vadd.f32 0.0, %v3034
      %v3036 = vpop.f32.mrb[0].mxu0
      %v3037 = vpop.f32.mrb[0].mxu0
      %v3038 = vadd.f32 0.0, %v3037
      %v3039 = vpop.f32.mrb[0].mxu0
      %3040 = vmatprep.mubr.bf16.mxu0 0
      %3041 = vmatmul.mubr.bf16.gmra.mrb[0].mxu0 %v2878
      %v3042 = vpop.f32.mrb[0].mxu0
      %v3043 = vadd.f32 0.0, %v3042
      %v3044 = vpop.f32.mrb[0].mxu0
      %v3045 = vpop.f32.mrb[0].mxu0
      %v3046 = vadd.f32 0.0, %v3045
      %v3047 = vpop.f32.mrb[0].mxu0
      %3048 = vmatprep.mubr.bf16.mxu0 0
      %3049 = vmatmul.mubr.bf16.gmra.mrb[0].mxu0 %v2879
      %v3050 = vpop.f32.mrb[0].mxu0
      %v3051 = vadd.f32 0.0, %v3050
      %v3052 = vpop.f32.mrb[0].mxu0
      %v3053 = vpop.f32.mrb[0].mxu0
      %v3054 = vadd.f32 0.0, %v3053
      %v3055 = vpop.f32.mrb[0].mxu0
      %3056 = vmatprep.mubr.bf16.mxu0 0
      %3057 = vmatmul.mubr.bf16.gmra.mrb[0].mxu0 %v2880
      %v3058 = vpop.f32.mrb[0].mxu0
      %v3059 = vadd.f32 0.0, %v3058
      %v3060 = vpop.f32.mrb[0].mxu0
      %v3061 = vpop.f32.mrb[0].mxu0
      %v3062 = vadd.f32 0.0, %v3061
      %v3063 = vpop.f32.mrb[0].mxu0
      %3064 = vmatprep.mubr.bf16.mxu0 0
      %3065 = vmatmul.mubr.bf16.gmra.mrb[0].mxu0 %v2881
      %v3066 = vpop.f32.mrb[0].mxu0
      %v3067 = vadd.f32 0.0, %v3066
      %v3068 = vpop.f32.mrb[0].mxu0
      %v3069 = vpop.f32.mrb[0].mxu0
      %v3070 = vadd.f32 0.0, %v3069
      %v3071 = vpop.f32.mrb[0].mxu0
      %3072 = vmatprep.mubr.bf16.mxu0 0
      %3073 = vmatmul.mubr.bf16.gmra.mrb[0].mxu0 %v2882
      %v3074 = vpop.f32.mrb[0].mxu0
      %v3075 = vadd.f32 0.0, %v3074
      %v3076 = vpop.f32.mrb[0].mxu0
      %v3077 = vpop.f32.mrb[0].mxu0
      %v3078 = vadd.f32 0.0, %v3077
      %v3079 = vpop.f32.mrb[0].mxu0
      %3080 = vmatprep.mubr.bf16.mxu0 0
      %3081 = vmatmul.mubr.bf16.gmra.mrb[0].mxu0 %v2883
      %v3082 = vpop.f32.mrb[0].mxu0
      %v3083 = vadd.f32 0.0, %v3082
      %v3084 = vpop.f32.mrb[0].mxu0
      %v3085 = vpop.f32.mrb[0].mxu0
      %v3086 = vadd.f32 0.0, %v3085
      %v3087 = vpop.f32.mrb[0].mxu0
      %3088 = vmatprep.mubr.bf16.mxu0 0
      %3089 = vmatmul.mubr.bf16.gmra.mrb[0].mxu0 %v2884
      %v3090 = vpop.f32.mrb[0].mxu0
      %v3091 = vadd.f32 0.0, %v3090
      %v3092 = vpop.f32.mrb[0].mxu0
      %v3093 = vpop.f32.mrb[0].mxu0
      %v3094 = vadd.f32 0.0, %v3093
      %v3095 = vpop.f32.mrb[0].mxu0
      %3096 = vmatprep.mubr.bf16.mxu0 0
      %3097 = vmatmul.mubr.bf16.gmra.mrb[0].mxu0 %v2885
      %v3098 = vpop.f32.mrb[0].mxu0
      %v3099 = vadd.f32 0.0, %v3098
      %v3100 = vpop.f32.mrb[0].mxu0
      %v3101 = vpop.f32.mrb[0].mxu0
      %v3102 = vadd.f32 0.0, %v3101
      %v3103 = vpop.f32.mrb[0].mxu0
      %3104 = vmatprep.mubr.bf16.mxu0 0
      %3105 = vmatmul.mubr.bf16.gmra.mrb[0].mxu0 %v2886
      %v3106 = vpop.f32.mrb[0].mxu0
      %v3107 = vadd.f32 0.0, %v3106
      %v3108 = vpop.f32.mrb[0].mxu0
      %v3109 = vpop.f32.mrb[0].mxu0
      %v3110 = vadd.f32 0.0, %v3109
      %v3111 = vpop.f32.mrb[0].mxu0
      %3112 = vdwg.mxu0
      %v3113 = vadd.f32 %v2807, %v2987
      %v3114 = vadd.f32 %v2808, %v2990
      %v3115 = vadd.f32 %v2809, %v2995
      %v3116 = vadd.f32 %v2810, %v2998
      %v3117 = vadd.f32 %v2811, %v3003
      %v3118 = vadd.f32 %v2812, %v3006
      %v3119 = vadd.f32 %v2813, %v3011
      %v3120 = vadd.f32 %v2814, %v3014
      %v3121 = vadd.f32 %v2815, %v3019
      %v3122 = vadd.f32 %v2816, %v3022
      %v3123 = vadd.f32 %v2817, %v3027
      %v3124 = vadd.f32 %v2818, %v3030
      %v3125 = vadd.f32 %v2819, %v3035
      %v3126 = vadd.f32 %v2820, %v3038
      %v3127 = vadd.f32 %v2821, %v3043
      %v3128 = vadd.f32 %v2822, %v3046
      %v3129 = vadd.f32 %v2823, %v3051
      %v3130 = vadd.f32 %v2824, %v3054
      %v3131 = vadd.f32 %v2825, %v3059
      %v3132 = vadd.f32 %v2826, %v3062
      %v3133 = vadd.f32 %v2827, %v3067
      %v3134 = vadd.f32 %v2828, %v3070
      %v3135 = vadd.f32 %v2829, %v3075
      %v3136 = vadd.f32 %v2830, %v3078
      %v3137 = vadd.f32 %v2831, %v3083
      %v3138 = vadd.f32 %v2832, %v3086
      %v3139 = vadd.f32 %v2833, %v3091
      %v3140 = vadd.f32 %v2834, %v3094
      %v3141 = vadd.f32 %v2835, %v3099
      %v3142 = vadd.f32 %v2836, %v3102
      %v3143 = vadd.f32 %v2837, %v3107
      %v3144 = vadd.f32 %v2838, %v3110
      %v3145 = vadd.f32 %v226, %v3113
      %v3146 = vadd.f32 %v227, %v3114
      %v3147 = vadd.f32 %v228, %v3115
      %v3148 = vadd.f32 %v229, %v3116
      %v3149 = vadd.f32 %v230, %v3117
      %v3150 = vadd.f32 %v231, %v3118
      %v3151 = vadd.f32 %v232, %v3119
      %v3152 = vadd.f32 %v233, %v3120
      %v3153 = vadd.f32 %v234, %v3121
      %v3154 = vadd.f32 %v235, %v3122
      %v3155 = vadd.f32 %v236, %v3123
      %v3156 = vadd.f32 %v237, %v3124
      %v3157 = vadd.f32 %v238, %v3125
      %v3158 = vadd.f32 %v239, %v3126
      %v3159 = vadd.f32 %v240, %v3127
      %v3160 = vadd.f32 %v241, %v3128
      %v3161 = vadd.f32 %v242, %v3129
      %v3162 = vadd.f32 %v243, %v3130
      %v3163 = vadd.f32 %v244, %v3131
      %v3164 = vadd.f32 %v245, %v3132
      %v3165 = vadd.f32 %v246, %v3133
      %v3166 = vadd.f32 %v247, %v3134
      %v3167 = vadd.f32 %v248, %v3135
      %v3168 = vadd.f32 %v249, %v3136
      %v3169 = vadd.f32 %v250, %v3137
      %v3170 = vadd.f32 %v251, %v3138
      %v3171 = vadd.f32 %v252, %v3139
      %v3172 = vadd.f32 %v253, %v3140
      %v3173 = vadd.f32 %v254, %v3141
      %v3174 = vadd.f32 %v255, %v3142
      %v3175 = vadd.f32 %v256, %v3143
      %v3176 = vadd.f32 %v257, %v3144
      %v3177 = vld [vmem:[%s4] sm:$0x1]
      %v3179 = vlaneseq
      %v3180 = vshrl.u32 %v3179, 7
      %v3181 = vsub.s32 0, %v3180
      %v3182 = vrot.slane %v3177, %v3181
      %v3184 = vadd.f32 %v3145, %v3182
      %v3185 = vadd.f32 %v3146, %v3182
      %v3186 = vadd.f32 %v3147, %v3182
      %v3187 = vadd.f32 %v3148, %v3182
      %v3188 = vadd.f32 %v3149, %v3182
      %v3189 = vadd.f32 %v3150, %v3182
      %v3190 = vadd.f32 %v3151, %v3182
      %v3191 = vadd.f32 %v3152, %v3182
      %v3192 = vadd.f32 %v3153, %v3182
      %v3193 = vadd.f32 %v3154, %v3182
      %v3194 = vadd.f32 %v3155, %v3182
      %v3195 = vadd.f32 %v3156, %v3182
      %v3196 = vadd.f32 %v3157, %v3182
      %v3197 = vadd.f32 %v3158, %v3182
      %v3198 = vadd.f32 %v3159, %v3182
      %v3199 = vadd.f32 %v3160, %v3182
      %v3200 = vadd.f32 %v3161, %v3182
      %v3201 = vadd.f32 %v3162, %v3182
      %v3202 = vadd.f32 %v3163, %v3182
      %v3203 = vadd.f32 %v3164, %v3182
      %v3204 = vadd.f32 %v3165, %v3182
      %v3205 = vadd.f32 %v3166, %v3182
      %v3206 = vadd.f32 %v3167, %v3182
      %v3207 = vadd.f32 %v3168, %v3182
      %v3208 = vadd.f32 %v3169, %v3182
      %v3209 = vadd.f32 %v3170, %v3182
      %v3210 = vadd.f32 %v3171, %v3182
      %v3211 = vadd.f32 %v3172, %v3182
      %v3212 = vadd.f32 %v3173, %v3182
      %v3213 = vadd.f32 %v3174, %v3182
      %v3214 = vadd.f32 %v3175, %v3182
      %v3215 = vadd.f32 %v3176, %v3182
      %3216 = vst [vmem:[%s224] sm:$0xff] %v3184
      %3217 = vst [vmem:[%s224 + $0x8] sm:$0xff] %v3185
      %3218 = vst [vmem:[%s224 + $0x10] sm:$0xff] %v3186
      %3219 = vst [vmem:[%s224 + $0x18] sm:$0xff] %v3187
      %3220 = vst [vmem:[%s224 + $0x20] sm:$0xff] %v3188
      %3221 = vst [vmem:[%s224 + $0x28] sm:$0xff] %v3189
      %3222 = vst [vmem:[%s224 + $0x30] sm:$0xff] %v3190
      %3223 = vst [vmem:[%s224 + $0x38] sm:$0xff] %v3191
      %3224 = vst [vmem:[%s224 + $0x40] sm:$0xff] %v3192
      %3225 = vst [vmem:[%s224 + $0x48] sm:$0xff] %v3193
      %3226 = vst [vmem:[%s224 + $0x50] sm:$0xff] %v3194
      %3227 = vst [vmem:[%s224 + $0x58] sm:$0xff] %v3195
      %3228 = vst [vmem:[%s224 + $0x60] sm:$0xff] %v3196
      %3229 = vst [vmem:[%s224 + $0x68] sm:$0xff] %v3197
      %3230 = vst [vmem:[%s224 + $0x70] sm:$0xff] %v3198
      %3231 = vst [vmem:[%s224 + $0x78] sm:$0xff] %v3199
      %3232 = vst [vmem:[%s224 + $0x80] sm:$0xff] %v3200
      %3233 = vst [vmem:[%s224 + $0x88] sm:$0xff] %v3201
      %3234 = vst [vmem:[%s224 + $0x90] sm:$0xff] %v3202
      %3235 = vst [vmem:[%s224 + $0x98] sm:$0xff] %v3203
      %3236 = vst [vmem:[%s224 + $0xa0] sm:$0xff] %v3204
      %3237 = vst [vmem:[%s224 + $0xa8] sm:$0xff] %v3205
      %3238 = vst [vmem:[%s224 + $0xb0] sm:$0xff] %v3206
      %3239 = vst [vmem:[%s224 + $0xb8] sm:$0xff] %v3207
      %3240 = vst [vmem:[%s224 + $0xc0] sm:$0xff] %v3208
      %3241 = vst [vmem:[%s224 + $0xc8] sm:$0xff] %v3209
      %3242 = vst [vmem:[%s224 + $0xd0] sm:$0xff] %v3210
      %3243 = vst [vmem:[%s224 + $0xd8] sm:$0xff] %v3211
      %3244 = vst [vmem:[%s224 + $0xe0] sm:$0xff] %v3212
      %3245 = vst [vmem:[%s224 + $0xe8] sm:$0xff] %v3213
      %3246 = vst [vmem:[%s224 + $0xf0] sm:$0xff] %v3214
      %3247 = vst [vmem:[%s224 + $0xf8] sm:$0xff] %v3215
      %p3248 = scmp.lt.s32.totalorder %s16, 1
      %s3249 = scalar_select %p3248, %s16, 1
      %s3250 = smul.addr %s3249, 32
      %s3251 = smul.addr %s3250, 8
      %s3252 = scalar_lea.vmem %s5, %s3251
      // Predicated region
      $region41: #{dense_block_forward.2} parent=39 // pred_check
        %p3253 = pneg %p144
      $region42: #{dense_block_forward.2} parent=39 // pred_check_branch
        %3255 = sbr.rel (%p3253) target = $region44
      $region43: #{dense_block_forward.2} parent=39 // pred_region
        _
      $region44: #{dense_block_forward.2} parent=39 // pred_fallthru
        _
    $region40: #{dense_block_forward.2} parent=5 // pred_fallthru
      _
    %p3256 = scmp.le.s32.totalorder 2, %s11
    // Predicated region
    $region45: #{dense_block_forward.2} parent=5 // pred_check
      %p3257 = pneg %p3256
    $region46: #{dense_block_forward.2} parent=5 // pred_check_branch
      %3259 = sbr.rel (%p3257) target = $region48
    $region47: #{dense_block_forward.2} parent=5 // pred_region
      %s3260 = ssub.s32 %s11, 2
      // Predicated region
      $region49: #{dense_block_forward.2} parent=47 // pred_check
        %p3261 = pneg %p150
      $region50: #{dense_block_forward.2} parent=47 // pred_check_branch
        %3263 = sbr.rel (%p3261) target = $region52
      $region51: #{dense_block_forward.2} parent=47 // pred_region
        %p3264 = scmp.lt.s32.totalorder %s17, 1
        %s3265 = scalar_select %p3264, %s17, 1
        %s3266 = smul.addr %s3265, 32
        %s3267 = smul.addr %s3266, 8
        %s3268 = scalar_lea.vmem %s5, %s3267
      $region52: #{dense_block_forward.2} parent=47 // pred_fallthru
        _
    $region48: #{dense_block_forward.2} parent=5 // pred_fallthru
      _
  $region6: #{dense_block_forward.2} parent=0 // loop_footer
    %s15 = sadd.s32 1, %s11
  $region7: #{dense_block_forward.2} parent=0 // loop_footer_branch
    %10 = sbr.rel target = $region3
  $region8: #{dense_block_forward.2} parent=0 // loop_exit
    _

</llo_original>
